<compile_context>
chip_gen: v5e
topology: v5e:2x2
jax: 0.10.0
libtpu: 0.0.40
codegen_flags: <defaults>
</compile_context>

<pallas_src>
import jax
import jax.numpy as jnp
import numpy as np
from jax.experimental import pallas as pl
from jax.experimental.pallas import tpu as pltpu

_LANE = 128


def _round_up(n, m):
    return ((n + m - 1) // m) * m


def _make_gru_kernel(B, T, H, NCP):
    G = 3 * H
    f32 = jnp.float32
    bf16 = jnp.bfloat16

    def kernel(x_ref, wih0_ref, bih0_ref, whh0_ref, bhh0_ref,
               wih1_ref, bih1_ref, whh1_ref, bhh1_ref,
               fcw_ref, fcb_ref, out_ref, gi0_ref):
        # ---- Layer-0 input projection, hoisted out of the recurrence ----
        # One (T*B, I) @ (I, 3H) matmul for all timesteps; bih0 folded in.
        # Stored in VMEM scratch so the per-step access is a cheap slice.
        gi0_ref[...] = (jnp.dot(x_ref[...], wih0_ref[...],
                                preferred_element_type=f32)
                        + bih0_ref[...])

        # Hoist bias broadcasts out of the (unrolled) loop.
        bhh0 = jnp.broadcast_to(bhh0_ref[...], (B, G))
        bih1 = jnp.broadcast_to(bih1_ref[...], (B, G))
        bhh1 = jnp.broadcast_to(bhh1_ref[...], (B, G))

        whh0 = whh0_ref[...]
        wih1 = wih1_ref[...]
        whh1 = whh1_ref[...]

        def gru_gates(gi, gh, h_prev):
            # PyTorch gate order (r, z, n); one sigmoid over the r/z slab.
            rz = jax.nn.sigmoid(gi[:, :2 * H] + gh[:, :2 * H])
            r = rz[:, :H]
            z = rz[:, H:]
            n = jnp.tanh(gi[:, 2 * H:] + r * gh[:, 2 * H:])
            return (1.0 - z) * n + z * h_prev

        def cell0(t, h0):
            gi = gi0_ref[pl.ds(t * B, B), :]            # precomputed gi + bih0
            gh = jnp.dot(h0.astype(bf16), whh0,
                         preferred_element_type=f32) + bhh0
            return gru_gates(gi, gh, h0)

        def cell1(h0, h1):
            gi = jnp.dot(h0.astype(bf16), wih1,
                         preferred_element_type=f32) + bih1
            gh = jnp.dot(h1.astype(bf16), whh1,
                         preferred_element_type=f32) + bhh1
            return gru_gates(gi, gh, h1)

        # ---- Skewed (software-pipelined) recurrence ----
        # Carry (h0 for step t, h1 for step t-1); inside the loop body,
        # layer 1 @ t and layer 0 @ t+1 are independent -> overlap.
        h0 = cell0(0, jnp.zeros((B, H), f32))           # prologue: layer 0, t=0
        h1 = jnp.zeros((B, H), f32)

        def step(t, carry):
            h0_t, h1_t = carry
            h1_new = cell1(h0_t, h1_t)                  # layer 1, time t
            h0_next = cell0(t + 1, h0_t)                # layer 0, time t+1
            return (h0_next, h1_new)

        unroll = True if T <= 16 else 8                 # bounded unroll for big T
        h0, h1 = jax.lax.fori_loop(0, T - 1, step, (h0, h1), unroll=unroll)
        h1 = cell1(h0, h1)                              # epilogue: layer 1, t=T-1

        # ---- fc head: once, lane-dense (128-padded) output store ----
        out_ref[...] = (jnp.dot(h1.astype(bf16), fcw_ref[...],
                                preferred_element_type=f32)
                        + fcb_ref[...])

    return kernel


def gru_model_forward(x, params):
    """x: (B, T, I) float32 (batch_first).  Returns (B, num_classes)."""
    B, T, I = x.shape
    H = params["whh0T"].shape[0]
    G = 3 * H
    NCP = params["fcwT"].shape[1]
    nc = params["num_classes"]
    TB = T * B

    # Time-major flatten: rows [t*B, (t+1)*B) hold all batches at time t.
    # Cast to bf16 once here (matmul LHS dtype).
    x_tb = jnp.transpose(x, (1, 0, 2)).reshape(TB, I).astype(jnp.bfloat16)

    kernel = _make_gru_kernel(B, T, H, NCP)

    grid_spec = pltpu.PrefetchScalarGridSpec(
        num_scalar_prefetch=0,
        grid=(1,),
        in_specs=[
            pl.BlockSpec((TB, I), lambda i: (0, 0)),   # x (time-major, bf16)
            pl.BlockSpec((I, G), lambda i: (0, 0)),    # Wih0^T   bf16
            pl.BlockSpec((1, G), lambda i: (0, 0)),    # bih0     f32
            pl.BlockSpec((H, G), lambda i: (0, 0)),    # Whh0^T   bf16
            pl.BlockSpec((1, G), lambda i: (0, 0)),    # bhh0     f32
            pl.BlockSpec((H, G), lambda i: (0, 0)),    # Wih1^T   bf16
            pl.BlockSpec((1, G), lambda i: (0, 0)),    # bih1     f32
            pl.BlockSpec((H, G), lambda i: (0, 0)),    # Whh1^T   bf16
            pl.BlockSpec((1, G), lambda i: (0, 0)),    # bhh1     f32
            pl.BlockSpec((H, NCP), lambda i: (0, 0)),  # fc W^T   bf16 (padded)
            pl.BlockSpec((1, NCP), lambda i: (0, 0)),  # fc b     f32  (padded)
        ],
        out_specs=pl.BlockSpec((B, NCP), lambda i: (0, 0)),
        scratch_shapes=[pltpu.VMEM((TB, G), jnp.float32)],   # gi0_all
    )

    out_padded = pl.pallas_call(
        kernel,
        out_shape=jax.ShapeDtypeStruct((B, NCP), jnp.float32),
        grid_spec=grid_spec,
        compiler_params=pltpu.CompilerParams(
            dimension_semantics=("arbitrary",)),
    )(x_tb,
      params["wih0T"], params["bih0"], params["whh0T"], params["bhh0"],
      params["wih1T"], params["bih1"], params["whh1T"], params["bhh1"],
      params["fcwT"], params["fcb"])

    return out_padded[:, :nc]


def init_params(key, input_size, hidden_size, num_classes):
    """nn.GRU / nn.Linear style init; returns kernel params + raw weights."""
    H, I = hidden_size, input_size
    ks = jax.random.split(key, 10)
    s = 1.0 / np.sqrt(H)

    def u(k, shape):
        return jax.random.uniform(k, shape, jnp.float32, -s, s)

    # PyTorch nn.GRU parameters, gate order (r, z, n).
    wih0 = u(ks[0], (3 * H, I))
    whh0 = u(ks[1], (3 * H, H))
    bih0 = u(ks[2], (3 * H,))
    bhh0 = u(ks[3], (3 * H,))
    wih1 = u(ks[4], (3 * H, H))
    whh1 = u(ks[5], (3 * H, H))
    bih1 = u(ks[6], (3 * H,))
    bhh1 = u(ks[7], (3 * H,))
    fcw = u(ks[8], (num_classes, H))
    fcb = u(ks[9], (num_classes,))

    # fc head padded to a lane-dense 128-wide output.
    NCP = _round_up(max(num_classes, 1), _LANE)
    fcwT = np.zeros((H, NCP), np.float32)
    fcwT[:, :num_classes] = np.asarray(fcw).T
    fcbp = np.zeros((1, NCP), np.float32)
    fcbp[0, :num_classes] = np.asarray(fcb)

    bf16 = jnp.bfloat16
    params = {
        "wih0T": wih0.T.astype(bf16),              # (I, 3H)
        "whh0T": whh0.T.astype(bf16),              # (H, 3H)
        "wih1T": wih1.T.astype(bf16),              # (H, 3H)
        "whh1T": whh1.T.astype(bf16),              # (H, 3H)
        "fcwT": jnp.asarray(fcwT).astype(bf16),    # (H, NCP)
        "bih0": bih0[None, :],                     # (1, 3H) f32
        "bhh0": bhh0[None, :],
        "bih1": bih1[None, :],
        "bhh1": bhh1[None, :],
        "fcb": jnp.asarray(fcbp),                  # (1, NCP) f32
        "num_classes": num_classes,
    }
    raw = dict(wih0=wih0, whh0=whh0, bih0=bih0, bhh0=bhh0,
               wih1=wih1, whh1=whh1, bih1=bih1, bhh1=bhh1,
               fcw=fcw, fcb=fcb)
    return params, raw


def reference_forward(x, raw, cast_dtype=None):
    """Pure-JAX reference (PyTorch GRU eval semantics, gate order r,z,n).

    cast_dtype=jnp.bfloat16 reproduces the kernel's matmul precision
    (bf16 operands, f32 accumulation); None keeps everything f32.
    """
    B, T, I = x.shape
    H = raw["whh0"].shape[1]

    def mm(a, w):
        if cast_dtype is not None:
            a = a.astype(cast_dtype)
            w = w.astype(cast_dtype)
        return jnp.dot(a, w, preferred_element_type=jnp.float32)

    def cell(x_t, h, wih, whh, bih, bhh):
        gi = mm(x_t, wih.T) + bih
        gh = mm(h, whh.T) + bhh
        r = jax.nn.sigmoid(gi[:, 0:H] + gh[:, 0:H])
        z = jax.nn.sigmoid(gi[:, H:2 * H] + gh[:, H:2 * H])
        n = jnp.tanh(gi[:, 2 * H:] + r * gh[:, 2 * H:])
        return (1.0 - z) * n + z * h

    h0 = jnp.zeros((B, H), jnp.float32)
    h1 = jnp.zeros((B, H), jnp.float32)
    for t in range(T):
        h0 = cell(x[:, t, :], h0,
                  raw["wih0"], raw["whh0"], raw["bih0"], raw["bhh0"])
        h1 = cell(h0, h1,
                  raw["wih1"], raw["whh1"], raw["bih1"], raw["bhh1"])
    return mm(h1, raw["fcw"].T) + raw["fcb"]


if __name__ == "__main__":
    B, T, I = 2, 8, 16
    H, NC = 128, 3   # module defaults: hidden_size=128, num_classes=3

    key = jax.random.PRNGKey(0)
    kx, kp = jax.random.split(key)
    x = jax.random.normal(kx, (B, T, I), jnp.float32)
    params, raw = init_params(kp, I, H, NC)

    out = jax.block_until_ready(gru_model_forward(x, params))
    assert out.shape == (B, NC)

    # 1) matched-precision reference (bf16 matmul operands, f32 accumulation)
    ref_bf16 = reference_forward(x, raw, cast_dtype=jnp.bfloat16)
    assert np.allclose(np.asarray(out), np.asarray(ref_bf16),
                       rtol=2e-3, atol=2e-3), (
        f"mismatch vs bf16-matmul reference:\n{out}\nvs\n{ref_bf16}")

    # 2) full-f32 reference, tolerance sized for bf16 matmul rounding
    with jax.default_matmul_precision("float32"):
        ref_f32 = reference_forward(x, raw, cast_dtype=None)
    assert np.allclose(np.asarray(out), np.asarray(ref_f32),
                       rtol=2e-2, atol=2e-2), (
        f"mismatch vs f32 reference:\n{out}\nvs\n{ref_f32}")

    print("KERNEL_OK")
</pallas_src>

<mosaic_0001>
module attributes {stable_mosaic.version = 11 : i64} {
  func.func @kernel(%arg0: i32, %arg1: memref<16x16xbf16, #tpu.memory_space<vmem>>, %arg2: memref<16x384xbf16, #tpu.memory_space<vmem>>, %arg3: memref<1x384xf32, #tpu.memory_space<vmem>>, %arg4: memref<128x384xbf16, #tpu.memory_space<vmem>>, %arg5: memref<1x384xf32, #tpu.memory_space<vmem>>, %arg6: memref<128x384xbf16, #tpu.memory_space<vmem>>, %arg7: memref<1x384xf32, #tpu.memory_space<vmem>>, %arg8: memref<128x384xbf16, #tpu.memory_space<vmem>>, %arg9: memref<1x384xf32, #tpu.memory_space<vmem>>, %arg10: memref<128x128xbf16, #tpu.memory_space<vmem>>, %arg11: memref<1x128xf32, #tpu.memory_space<vmem>>, %arg12: memref<2x128xf32, #tpu.memory_space<vmem>>, %arg13: memref<16x384xf32, #tpu.memory_space<vmem>>) attributes {dimension_semantics = [#tpu.dimension_semantics<arbitrary>], iteration_bounds = array<i64: 1>, scalar_prefetch = 0 : i64, scratch_operands = 1 : i64, tpu.core_type = #tpu.core_type<tc>, window_params = [{pipeline_mode = #tpu.pipeline_mode<synchronous>, transform_indices = @transform_0, window_bounds = array<i64: 16, 16>}, {pipeline_mode = #tpu.pipeline_mode<synchronous>, transform_indices = @transform_1, window_bounds = array<i64: 16, 384>}, {pipeline_mode = #tpu.pipeline_mode<synchronous>, transform_indices = @transform_2, window_bounds = array<i64: 1, 384>}, {pipeline_mode = #tpu.pipeline_mode<synchronous>, transform_indices = @transform_3, window_bounds = array<i64: 128, 384>}, {pipeline_mode = #tpu.pipeline_mode<synchronous>, transform_indices = @transform_4, window_bounds = array<i64: 1, 384>}, {pipeline_mode = #tpu.pipeline_mode<synchronous>, transform_indices = @transform_5, window_bounds = array<i64: 128, 384>}, {pipeline_mode = #tpu.pipeline_mode<synchronous>, transform_indices = @transform_6, window_bounds = array<i64: 1, 384>}, {pipeline_mode = #tpu.pipeline_mode<synchronous>, transform_indices = @transform_7, window_bounds = array<i64: 128, 384>}, {pipeline_mode = #tpu.pipeline_mode<synchronous>, transform_indices = @transform_8, window_bounds = array<i64: 1, 384>}, {pipeline_mode = #tpu.pipeline_mode<synchronous>, transform_indices = @transform_9, window_bounds = array<i64: 128, 128>}, {pipeline_mode = #tpu.pipeline_mode<synchronous>, transform_indices = @transform_10, window_bounds = array<i64: 1, 128>}, {pipeline_mode = #tpu.pipeline_mode<synchronous>, transform_indices = @transform_11, window_bounds = array<i64: 2, 128>}]} {
    %c0 = arith.constant 0 : index
    %c0_0 = arith.constant 0 : index
    %0 = vector.load %arg1[%c0, %c0_0] : memref<16x16xbf16, #tpu.memory_space<vmem>>, vector<16x16xbf16>
    %c0_1 = arith.constant 0 : index
    %c0_2 = arith.constant 0 : index
    %1 = vector.load %arg2[%c0_1, %c0_2] : memref<16x384xbf16, #tpu.memory_space<vmem>>, vector<16x384xbf16>
    %cst = arith.constant dense<0.000000e+00> : vector<16x384xf32>
    %2 = tpu.matmul %0, %1, %cst {dimension_numbers = #tpu.dot_dimension_numbers<[1], [0], [0], [1], [0, 0, 1, 1], [], []>} : vector<16x16xbf16>, vector<16x384xbf16>, vector<16x384xf32> -> vector<16x384xf32>
    %c0_3 = arith.constant 0 : index
    %c0_4 = arith.constant 0 : index
    %3 = vector.load %arg3[%c0_3, %c0_4] : memref<1x384xf32, #tpu.memory_space<vmem>>, vector<1x384xf32>
    %4 = vector.broadcast %3 : vector<1x384xf32> to vector<16x384xf32>
    %5 = arith.addf %2, %4 : vector<16x384xf32>
    %c0_5 = arith.constant 0 : index
    %c0_6 = arith.constant 0 : index
    %6 = vector.load %arg13[%c0_5, %c0_6] : memref<16x384xf32, #tpu.memory_space<vmem>>, vector<16x384xf32>
    tpu.vector_store %arg13[%c0_5, %c0_6], %5 {strides = array<i32>} : memref<16x384xf32, #tpu.memory_space<vmem>>, vector<16x384xf32>,
    %c0_7 = arith.constant 0 : index
    %c0_8 = arith.constant 0 : index
    %7 = vector.load %arg5[%c0_7, %c0_8] : memref<1x384xf32, #tpu.memory_space<vmem>>, vector<1x384xf32>
    %8 = vector.shape_cast %7 : vector<1x384xf32> to vector<1x384xf32>
    %9 = vector.broadcast %8 : vector<1x384xf32> to vector<2x384xf32>
    %c0_9 = arith.constant 0 : index
    %c0_10 = arith.constant 0 : index
    %10 = vector.load %arg7[%c0_9, %c0_10] : memref<1x384xf32, #tpu.memory_space<vmem>>, vector<1x384xf32>
    %11 = vector.shape_cast %10 : vector<1x384xf32> to vector<1x384xf32>
    %12 = vector.broadcast %11 : vector<1x384xf32> to vector<2x384xf32>
    %c0_11 = arith.constant 0 : index
    %c0_12 = arith.constant 0 : index
    %13 = vector.load %arg9[%c0_11, %c0_12] : memref<1x384xf32, #tpu.memory_space<vmem>>, vector<1x384xf32>
    %14 = vector.shape_cast %13 : vector<1x384xf32> to vector<1x384xf32>
    %15 = vector.broadcast %14 : vector<1x384xf32> to vector<2x384xf32>
    %c0_13 = arith.constant 0 : index
    %c0_14 = arith.constant 0 : index
    %16 = vector.load %arg4[%c0_13, %c0_14] : memref<128x384xbf16, #tpu.memory_space<vmem>>, vector<128x384xbf16>
    %c0_15 = arith.constant 0 : index
    %c0_16 = arith.constant 0 : index
    %17 = vector.load %arg6[%c0_15, %c0_16] : memref<128x384xbf16, #tpu.memory_space<vmem>>, vector<128x384xbf16>
    %c0_17 = arith.constant 0 : index
    %c0_18 = arith.constant 0 : index
    %18 = vector.load %arg8[%c0_17, %c0_18] : memref<128x384xbf16, #tpu.memory_space<vmem>>, vector<128x384xbf16>
    %cst_19 = arith.constant 0.000000e+00 : f32
    %19 = vector.broadcast %cst_19 : f32 to vector<2x128xf32>
    %c0_20 = arith.constant 0 : index
    %c0_21 = arith.constant 0 : index
    %20 = vector.load %arg13[%c0_20, %c0_21] : memref<16x384xf32, #tpu.memory_space<vmem>>, vector<2x384xf32>
    %21 = arith.truncf %19 : vector<2x128xf32> to vector<2x128xbf16>
    %cst_22 = arith.constant dense<0.000000e+00> : vector<2x384xf32>
    %22 = tpu.matmul %21, %16, %cst_22 {dimension_numbers = #tpu.dot_dimension_numbers<[1], [0], [0], [1], [0, 0, 1, 1], [], []>} : vector<2x128xbf16>, vector<128x384xbf16>, vector<2x384xf32> -> vector<2x384xf32>
    %23 = arith.addf %22, %9 : vector<2x384xf32>
    %24 = vector.extract_strided_slice %20 {offsets = [0, 0], sizes = [2, 256], strides = [1, 1]} : vector<2x384xf32> to vector<2x256xf32>
    %25 = vector.extract_strided_slice %23 {offsets = [0, 0], sizes = [2, 256], strides = [1, 1]} : vector<2x384xf32> to vector<2x256xf32>
    %26 = arith.addf %24, %25 : vector<2x256xf32>
    %27 = arith.negf %26 : vector<2x256xf32>
    %28 = math.exp %27 : vector<2x256xf32>
    %cst_23 = arith.constant 1.000000e+00 : f32
    %29 = vector.broadcast %cst_23 : f32 to vector<2x256xf32>
    %30 = arith.addf %29, %28 : vector<2x256xf32>
    %31 = arith.divf %29, %30 : vector<2x256xf32>
    %32 = vector.extract_strided_slice %31 {offsets = [0, 0], sizes = [2, 128], strides = [1, 1]} : vector<2x256xf32> to vector<2x128xf32>
    %33 = vector.extract_strided_slice %31 {offsets = [0, 128], sizes = [2, 128], strides = [1, 1]} : vector<2x256xf32> to vector<2x128xf32>
    %34 = vector.extract_strided_slice %20 {offsets = [0, 256], sizes = [2, 128], strides = [1, 1]} : vector<2x384xf32> to vector<2x128xf32>
    %35 = vector.extract_strided_slice %23 {offsets = [0, 256], sizes = [2, 128], strides = [1, 1]} : vector<2x384xf32> to vector<2x128xf32>
    %36 = arith.mulf %32, %35 : vector<2x128xf32>
    %37 = arith.addf %34, %36 : vector<2x128xf32>
    %38 = math.tanh %37 : vector<2x128xf32>
    %cst_24 = arith.constant 1.000000e+00 : f32
    %39 = vector.broadcast %cst_24 : f32 to vector<2x128xf32>
    %40 = arith.subf %39, %33 : vector<2x128xf32>
    %41 = arith.mulf %40, %38 : vector<2x128xf32>
    %42 = arith.mulf %33, %19 : vector<2x128xf32>
    %43 = arith.addf %41, %42 : vector<2x128xf32>
    %cst_25 = arith.constant 0.000000e+00 : f32
    %44 = vector.broadcast %cst_25 : f32 to vector<2x128xf32>
    %c0_i32 = arith.constant 0 : i32
    %45 = arith.truncf %43 : vector<2x128xf32> to vector<2x128xbf16>
    %cst_26 = arith.constant dense<0.000000e+00> : vector<2x384xf32>
    %46 = tpu.matmul %45, %17, %cst_26 {dimension_numbers = #tpu.dot_dimension_numbers<[1], [0], [0], [1], [0, 0, 1, 1], [], []>} : vector<2x128xbf16>, vector<128x384xbf16>, vector<2x384xf32> -> vector<2x384xf32>
    %47 = arith.addf %46, %12 : vector<2x384xf32>
    %48 = arith.truncf %44 : vector<2x128xf32> to vector<2x128xbf16>
    %cst_27 = arith.constant dense<0.000000e+00> : vector<2x384xf32>
    %49 = tpu.matmul %48, %18, %cst_27 {dimension_numbers = #tpu.dot_dimension_numbers<[1], [0], [0], [1], [0, 0, 1, 1], [], []>} : vector<2x128xbf16>, vector<128x384xbf16>, vector<2x384xf32> -> vector<2x384xf32>
    %50 = arith.addf %49, %15 : vector<2x384xf32>
    %51 = vector.extract_strided_slice %47 {offsets = [0, 0], sizes = [2, 256], strides = [1, 1]} : vector<2x384xf32> to vector<2x256xf32>
    %52 = vector.extract_strided_slice %50 {offsets = [0, 0], sizes = [2, 256], strides = [1, 1]} : vector<2x384xf32> to vector<2x256xf32>
    %53 = arith.addf %51, %52 : vector<2x256xf32>
    %54 = arith.negf %53 : vector<2x256xf32>
    %55 = math.exp %54 : vector<2x256xf32>
    %cst_28 = arith.constant 1.000000e+00 : f32
    %56 = vector.broadcast %cst_28 : f32 to vector<2x256xf32>
    %57 = arith.addf %56, %55 : vector<2x256xf32>
    %58 = arith.divf %56, %57 : vector<2x256xf32>
    %59 = vector.extract_strided_slice %58 {offsets = [0, 0], sizes = [2, 128], strides = [1, 1]} : vector<2x256xf32> to vector<2x128xf32>
    %60 = vector.extract_strided_slice %58 {offsets = [0, 128], sizes = [2, 128], strides = [1, 1]} : vector<2x256xf32> to vector<2x128xf32>
    %61 = vector.extract_strided_slice %47 {offsets = [0, 256], sizes = [2, 128], strides = [1, 1]} : vector<2x384xf32> to vector<2x128xf32>
    %62 = vector.extract_strided_slice %50 {offsets = [0, 256], sizes = [2, 128], strides = [1, 1]} : vector<2x384xf32> to vector<2x128xf32>
    %63 = arith.mulf %59, %62 : vector<2x128xf32>
    %64 = arith.addf %61, %63 : vector<2x128xf32>
    %65 = math.tanh %64 : vector<2x128xf32>
    %cst_29 = arith.constant 1.000000e+00 : f32
    %66 = vector.broadcast %cst_29 : f32 to vector<2x128xf32>
    %67 = arith.subf %66, %60 : vector<2x128xf32>
    %68 = arith.mulf %67, %65 : vector<2x128xf32>
    %69 = arith.mulf %60, %44 : vector<2x128xf32>
    %70 = arith.addf %68, %69 : vector<2x128xf32>
    %c1_i32 = arith.constant 1 : i32
    %71 = arith.addi %c0_i32, %c1_i32 : i32
    %c2_i32 = arith.constant 2 : i32
    %72 = arith.muli %71, %c2_i32 : i32
    %73 = arith.index_cast %72 : i32 to index
    %c0_30 = arith.constant 0 : index
    %74 = vector.load %arg13[%73, %c0_30] : memref<16x384xf32, #tpu.memory_space<vmem>>, vector<2x384xf32>
    %75 = arith.truncf %43 : vector<2x128xf32> to vector<2x128xbf16>
    %cst_31 = arith.constant dense<0.000000e+00> : vector<2x384xf32>
    %76 = tpu.matmul %75, %16, %cst_31 {dimension_numbers = #tpu.dot_dimension_numbers<[1], [0], [0], [1], [0, 0, 1, 1], [], []>} : vector<2x128xbf16>, vector<128x384xbf16>, vector<2x384xf32> -> vector<2x384xf32>
    %77 = arith.addf %76, %9 : vector<2x384xf32>
    %78 = vector.extract_strided_slice %74 {offsets = [0, 0], sizes = [2, 256], strides = [1, 1]} : vector<2x384xf32> to vector<2x256xf32>
    %79 = vector.extract_strided_slice %77 {offsets = [0, 0], sizes = [2, 256], strides = [1, 1]} : vector<2x384xf32> to vector<2x256xf32>
    %80 = arith.addf %78, %79 : vector<2x256xf32>
    %81 = arith.negf %80 : vector<2x256xf32>
    %82 = math.exp %81 : vector<2x256xf32>
    %cst_32 = arith.constant 1.000000e+00 : f32
    %83 = vector.broadcast %cst_32 : f32 to vector<2x256xf32>
    %84 = arith.addf %83, %82 : vector<2x256xf32>
    %85 = arith.divf %83, %84 : vector<2x256xf32>
    %86 = vector.extract_strided_slice %85 {offsets = [0, 0], sizes = [2, 128], strides = [1, 1]} : vector<2x256xf32> to vector<2x128xf32>
    %87 = vector.extract_strided_slice %85 {offsets = [0, 128], sizes = [2, 128], strides = [1, 1]} : vector<2x256xf32> to vector<2x128xf32>
    %88 = vector.extract_strided_slice %74 {offsets = [0, 256], sizes = [2, 128], strides = [1, 1]} : vector<2x384xf32> to vector<2x128xf32>
    %89 = vector.extract_strided_slice %77 {offsets = [0, 256], sizes = [2, 128], strides = [1, 1]} : vector<2x384xf32> to vector<2x128xf32>
    %90 = arith.mulf %86, %89 : vector<2x128xf32>
    %91 = arith.addf %88, %90 : vector<2x128xf32>
    %92 = math.tanh %91 : vector<2x128xf32>
    %cst_33 = arith.constant 1.000000e+00 : f32
    %93 = vector.broadcast %cst_33 : f32 to vector<2x128xf32>
    %94 = arith.subf %93, %87 : vector<2x128xf32>
    %95 = arith.mulf %94, %92 : vector<2x128xf32>
    %96 = arith.mulf %87, %43 : vector<2x128xf32>
    %97 = arith.addf %95, %96 : vector<2x128xf32>
    %c1_i32_34 = arith.constant 1 : i32
    %98 = arith.truncf %97 : vector<2x128xf32> to vector<2x128xbf16>
    %cst_35 = arith.constant dense<0.000000e+00> : vector<2x384xf32>
    %99 = tpu.matmul %98, %17, %cst_35 {dimension_numbers = #tpu.dot_dimension_numbers<[1], [0], [0], [1], [0, 0, 1, 1], [], []>} : vector<2x128xbf16>, vector<128x384xbf16>, vector<2x384xf32> -> vector<2x384xf32>
    %100 = arith.addf %99, %12 : vector<2x384xf32>
    %101 = arith.truncf %70 : vector<2x128xf32> to vector<2x128xbf16>
    %cst_36 = arith.constant dense<0.000000e+00> : vector<2x384xf32>
    %102 = tpu.matmul %101, %18, %cst_36 {dimension_numbers = #tpu.dot_dimension_numbers<[1], [0], [0], [1], [0, 0, 1, 1], [], []>} : vector<2x128xbf16>, vector<128x384xbf16>, vector<2x384xf32> -> vector<2x384xf32>
    %103 = arith.addf %102, %15 : vector<2x384xf32>
    %104 = vector.extract_strided_slice %100 {offsets = [0, 0], sizes = [2, 256], strides = [1, 1]} : vector<2x384xf32> to vector<2x256xf32>
    %105 = vector.extract_strided_slice %103 {offsets = [0, 0], sizes = [2, 256], strides = [1, 1]} : vector<2x384xf32> to vector<2x256xf32>
    %106 = arith.addf %104, %105 : vector<2x256xf32>
    %107 = arith.negf %106 : vector<2x256xf32>
    %108 = math.exp %107 : vector<2x256xf32>
    %cst_37 = arith.constant 1.000000e+00 : f32
    %109 = vector.broadcast %cst_37 : f32 to vector<2x256xf32>
    %110 = arith.addf %109, %108 : vector<2x256xf32>
    %111 = arith.divf %109, %110 : vector<2x256xf32>
    %112 = vector.extract_strided_slice %111 {offsets = [0, 0], sizes = [2, 128], strides = [1, 1]} : vector<2x256xf32> to vector<2x128xf32>
    %113 = vector.extract_strided_slice %111 {offsets = [0, 128], sizes = [2, 128], strides = [1, 1]} : vector<2x256xf32> to vector<2x128xf32>
    %114 = vector.extract_strided_slice %100 {offsets = [0, 256], sizes = [2, 128], strides = [1, 1]} : vector<2x384xf32> to vector<2x128xf32>
    %115 = vector.extract_strided_slice %103 {offsets = [0, 256], sizes = [2, 128], strides = [1, 1]} : vector<2x384xf32> to vector<2x128xf32>
    %116 = arith.mulf %112, %115 : vector<2x128xf32>
    %117 = arith.addf %114, %116 : vector<2x128xf32>
    %118 = math.tanh %117 : vector<2x128xf32>
    %cst_38 = arith.constant 1.000000e+00 : f32
    %119 = vector.broadcast %cst_38 : f32 to vector<2x128xf32>
    %120 = arith.subf %119, %113 : vector<2x128xf32>
    %121 = arith.mulf %120, %118 : vector<2x128xf32>
    %122 = arith.mulf %113, %70 : vector<2x128xf32>
    %123 = arith.addf %121, %122 : vector<2x128xf32>
    %c1_i32_39 = arith.constant 1 : i32
    %124 = arith.addi %c1_i32_34, %c1_i32_39 : i32
    %c2_i32_40 = arith.constant 2 : i32
    %125 = arith.muli %124, %c2_i32_40 : i32
    %126 = arith.index_cast %125 : i32 to index
    %c0_41 = arith.constant 0 : index
    %127 = vector.load %arg13[%126, %c0_41] : memref<16x384xf32, #tpu.memory_space<vmem>>, vector<2x384xf32>
    %128 = arith.truncf %97 : vector<2x128xf32> to vector<2x128xbf16>
    %cst_42 = arith.constant dense<0.000000e+00> : vector<2x384xf32>
    %129 = tpu.matmul %128, %16, %cst_42 {dimension_numbers = #tpu.dot_dimension_numbers<[1], [0], [0], [1], [0, 0, 1, 1], [], []>} : vector<2x128xbf16>, vector<128x384xbf16>, vector<2x384xf32> -> vector<2x384xf32>
    %130 = arith.addf %129, %9 : vector<2x384xf32>
    %131 = vector.extract_strided_slice %127 {offsets = [0, 0], sizes = [2, 256], strides = [1, 1]} : vector<2x384xf32> to vector<2x256xf32>
    %132 = vector.extract_strided_slice %130 {offsets = [0, 0], sizes = [2, 256], strides = [1, 1]} : vector<2x384xf32> to vector<2x256xf32>
    %133 = arith.addf %131, %132 : vector<2x256xf32>
    %134 = arith.negf %133 : vector<2x256xf32>
    %135 = math.exp %134 : vector<2x256xf32>
    %cst_43 = arith.constant 1.000000e+00 : f32
    %136 = vector.broadcast %cst_43 : f32 to vector<2x256xf32>
    %137 = arith.addf %136, %135 : vector<2x256xf32>
    %138 = arith.divf %136, %137 : vector<2x256xf32>
    %139 = vector.extract_strided_slice %138 {offsets = [0, 0], sizes = [2, 128], strides = [1, 1]} : vector<2x256xf32> to vector<2x128xf32>
    %140 = vector.extract_strided_slice %138 {offsets = [0, 128], sizes = [2, 128], strides = [1, 1]} : vector<2x256xf32> to vector<2x128xf32>
    %141 = vector.extract_strided_slice %127 {offsets = [0, 256], sizes = [2, 128], strides = [1, 1]} : vector<2x384xf32> to vector<2x128xf32>
    %142 = vector.extract_strided_slice %130 {offsets = [0, 256], sizes = [2, 128], strides = [1, 1]} : vector<2x384xf32> to vector<2x128xf32>
    %143 = arith.mulf %139, %142 : vector<2x128xf32>
    %144 = arith.addf %141, %143 : vector<2x128xf32>
    %145 = math.tanh %144 : vector<2x128xf32>
    %cst_44 = arith.constant 1.000000e+00 : f32
    %146 = vector.broadcast %cst_44 : f32 to vector<2x128xf32>
    %147 = arith.subf %146, %140 : vector<2x128xf32>
    %148 = arith.mulf %147, %145 : vector<2x128xf32>
    %149 = arith.mulf %140, %97 : vector<2x128xf32>
    %150 = arith.addf %148, %149 : vector<2x128xf32>
    %c2_i32_45 = arith.constant 2 : i32
    %151 = arith.truncf %150 : vector<2x128xf32> to vector<2x128xbf16>
    %cst_46 = arith.constant dense<0.000000e+00> : vector<2x384xf32>
    %152 = tpu.matmul %151, %17, %cst_46 {dimension_numbers = #tpu.dot_dimension_numbers<[1], [0], [0], [1], [0, 0, 1, 1], [], []>} : vector<2x128xbf16>, vector<128x384xbf16>, vector<2x384xf32> -> vector<2x384xf32>
    %153 = arith.addf %152, %12 : vector<2x384xf32>
    %154 = arith.truncf %123 : vector<2x128xf32> to vector<2x128xbf16>
    %cst_47 = arith.constant dense<0.000000e+00> : vector<2x384xf32>
    %155 = tpu.matmul %154, %18, %cst_47 {dimension_numbers = #tpu.dot_dimension_numbers<[1], [0], [0], [1], [0, 0, 1, 1], [], []>} : vector<2x128xbf16>, vector<128x384xbf16>, vector<2x384xf32> -> vector<2x384xf32>
    %156 = arith.addf %155, %15 : vector<2x384xf32>
    %157 = vector.extract_strided_slice %153 {offsets = [0, 0], sizes = [2, 256], strides = [1, 1]} : vector<2x384xf32> to vector<2x256xf32>
    %158 = vector.extract_strided_slice %156 {offsets = [0, 0], sizes = [2, 256], strides = [1, 1]} : vector<2x384xf32> to vector<2x256xf32>
    %159 = arith.addf %157, %158 : vector<2x256xf32>
    %160 = arith.negf %159 : vector<2x256xf32>
    %161 = math.exp %160 : vector<2x256xf32>
    %cst_48 = arith.constant 1.000000e+00 : f32
    %162 = vector.broadcast %cst_48 : f32 to vector<2x256xf32>
    %163 = arith.addf %162, %161 : vector<2x256xf32>
    %164 = arith.divf %162, %163 : vector<2x256xf32>
    %165 = vector.extract_strided_slice %164 {offsets = [0, 0], sizes = [2, 128], strides = [1, 1]} : vector<2x256xf32> to vector<2x128xf32>
    %166 = vector.extract_strided_slice %164 {offsets = [0, 128], sizes = [2, 128], strides = [1, 1]} : vector<2x256xf32> to vector<2x128xf32>
    %167 = vector.extract_strided_slice %153 {offsets = [0, 256], sizes = [2, 128], strides = [1, 1]} : vector<2x384xf32> to vector<2x128xf32>
    %168 = vector.extract_strided_slice %156 {offsets = [0, 256], sizes = [2, 128], strides = [1, 1]} : vector<2x384xf32> to vector<2x128xf32>
    %169 = arith.mulf %165, %168 : vector<2x128xf32>
    %170 = arith.addf %167, %169 : vector<2x128xf32>
    %171 = math.tanh %170 : vector<2x128xf32>
    %cst_49 = arith.constant 1.000000e+00 : f32
    %172 = vector.broadcast %cst_49 : f32 to vector<2x128xf32>
    %173 = arith.subf %172, %166 : vector<2x128xf32>
    %174 = arith.mulf %173, %171 : vector<2x128xf32>
    %175 = arith.mulf %166, %123 : vector<2x128xf32>
    %176 = arith.addf %174, %175 : vector<2x128xf32>
    %c1_i32_50 = arith.constant 1 : i32
    %177 = arith.addi %c2_i32_45, %c1_i32_50 : i32
    %c2_i32_51 = arith.constant 2 : i32
    %178 = arith.muli %177, %c2_i32_51 : i32
    %179 = arith.index_cast %178 : i32 to index
    %c0_52 = arith.constant 0 : index
    %180 = vector.load %arg13[%179, %c0_52] : memref<16x384xf32, #tpu.memory_space<vmem>>, vector<2x384xf32>
    %181 = arith.truncf %150 : vector<2x128xf32> to vector<2x128xbf16>
    %cst_53 = arith.constant dense<0.000000e+00> : vector<2x384xf32>
    %182 = tpu.matmul %181, %16, %cst_53 {dimension_numbers = #tpu.dot_dimension_numbers<[1], [0], [0], [1], [0, 0, 1, 1], [], []>} : vector<2x128xbf16>, vector<128x384xbf16>, vector<2x384xf32> -> vector<2x384xf32>
    %183 = arith.addf %182, %9 : vector<2x384xf32>
    %184 = vector.extract_strided_slice %180 {offsets = [0, 0], sizes = [2, 256], strides = [1, 1]} : vector<2x384xf32> to vector<2x256xf32>
    %185 = vector.extract_strided_slice %183 {offsets = [0, 0], sizes = [2, 256], strides = [1, 1]} : vector<2x384xf32> to vector<2x256xf32>
    %186 = arith.addf %184, %185 : vector<2x256xf32>
    %187 = arith.negf %186 : vector<2x256xf32>
    %188 = math.exp %187 : vector<2x256xf32>
    %cst_54 = arith.constant 1.000000e+00 : f32
    %189 = vector.broadcast %cst_54 : f32 to vector<2x256xf32>
    %190 = arith.addf %189, %188 : vector<2x256xf32>
    %191 = arith.divf %189, %190 : vector<2x256xf32>
    %192 = vector.extract_strided_slice %191 {offsets = [0, 0], sizes = [2, 128], strides = [1, 1]} : vector<2x256xf32> to vector<2x128xf32>
    %193 = vector.extract_strided_slice %191 {offsets = [0, 128], sizes = [2, 128], strides = [1, 1]} : vector<2x256xf32> to vector<2x128xf32>
    %194 = vector.extract_strided_slice %180 {offsets = [0, 256], sizes = [2, 128], strides = [1, 1]} : vector<2x384xf32> to vector<2x128xf32>
    %195 = vector.extract_strided_slice %183 {offsets = [0, 256], sizes = [2, 128], strides = [1, 1]} : vector<2x384xf32> to vector<2x128xf32>
    %196 = arith.mulf %192, %195 : vector<2x128xf32>
    %197 = arith.addf %194, %196 : vector<2x128xf32>
    %198 = math.tanh %197 : vector<2x128xf32>
    %cst_55 = arith.constant 1.000000e+00 : f32
    %199 = vector.broadcast %cst_55 : f32 to vector<2x128xf32>
    %200 = arith.subf %199, %193 : vector<2x128xf32>
    %201 = arith.mulf %200, %198 : vector<2x128xf32>
    %202 = arith.mulf %193, %150 : vector<2x128xf32>
    %203 = arith.addf %201, %202 : vector<2x128xf32>
    %c3_i32 = arith.constant 3 : i32
    %204 = arith.truncf %203 : vector<2x128xf32> to vector<2x128xbf16>
    %cst_56 = arith.constant dense<0.000000e+00> : vector<2x384xf32>
    %205 = tpu.matmul %204, %17, %cst_56 {dimension_numbers = #tpu.dot_dimension_numbers<[1], [0], [0], [1], [0, 0, 1, 1], [], []>} : vector<2x128xbf16>, vector<128x384xbf16>, vector<2x384xf32> -> vector<2x384xf32>
    %206 = arith.addf %205, %12 : vector<2x384xf32>
    %207 = arith.truncf %176 : vector<2x128xf32> to vector<2x128xbf16>
    %cst_57 = arith.constant dense<0.000000e+00> : vector<2x384xf32>
    %208 = tpu.matmul %207, %18, %cst_57 {dimension_numbers = #tpu.dot_dimension_numbers<[1], [0], [0], [1], [0, 0, 1, 1], [], []>} : vector<2x128xbf16>, vector<128x384xbf16>, vector<2x384xf32> -> vector<2x384xf32>
    %209 = arith.addf %208, %15 : vector<2x384xf32>
    %210 = vector.extract_strided_slice %206 {offsets = [0, 0], sizes = [2, 256], strides = [1, 1]} : vector<2x384xf32> to vector<2x256xf32>
    %211 = vector.extract_strided_slice %209 {offsets = [0, 0], sizes = [2, 256], strides = [1, 1]} : vector<2x384xf32> to vector<2x256xf32>
    %212 = arith.addf %210, %211 : vector<2x256xf32>
    %213 = arith.negf %212 : vector<2x256xf32>
    %214 = math.exp %213 : vector<2x256xf32>
    %cst_58 = arith.constant 1.000000e+00 : f32
    %215 = vector.broadcast %cst_58 : f32 to vector<2x256xf32>
    %216 = arith.addf %215, %214 : vector<2x256xf32>
    %217 = arith.divf %215, %216 : vector<2x256xf32>
    %218 = vector.extract_strided_slice %217 {offsets = [0, 0], sizes = [2, 128], strides = [1, 1]} : vector<2x256xf32> to vector<2x128xf32>
    %219 = vector.extract_strided_slice %217 {offsets = [0, 128], sizes = [2, 128], strides = [1, 1]} : vector<2x256xf32> to vector<2x128xf32>
    %220 = vector.extract_strided_slice %206 {offsets = [0, 256], sizes = [2, 128], strides = [1, 1]} : vector<2x384xf32> to vector<2x128xf32>
    %221 = vector.extract_strided_slice %209 {offsets = [0, 256], sizes = [2, 128], strides = [1, 1]} : vector<2x384xf32> to vector<2x128xf32>
    %222 = arith.mulf %218, %221 : vector<2x128xf32>
    %223 = arith.addf %220, %222 : vector<2x128xf32>
    %224 = math.tanh %223 : vector<2x128xf32>
    %cst_59 = arith.constant 1.000000e+00 : f32
    %225 = vector.broadcast %cst_59 : f32 to vector<2x128xf32>
    %226 = arith.subf %225, %219 : vector<2x128xf32>
    %227 = arith.mulf %226, %224 : vector<2x128xf32>
    %228 = arith.mulf %219, %176 : vector<2x128xf32>
    %229 = arith.addf %227, %228 : vector<2x128xf32>
    %c1_i32_60 = arith.constant 1 : i32
    %230 = arith.addi %c3_i32, %c1_i32_60 : i32
    %c2_i32_61 = arith.constant 2 : i32
    %231 = arith.muli %230, %c2_i32_61 : i32
    %232 = arith.index_cast %231 : i32 to index
    %c0_62 = arith.constant 0 : index
    %233 = vector.load %arg13[%232, %c0_62] : memref<16x384xf32, #tpu.memory_space<vmem>>, vector<2x384xf32>
    %234 = arith.truncf %203 : vector<2x128xf32> to vector<2x128xbf16>
    %cst_63 = arith.constant dense<0.000000e+00> : vector<2x384xf32>
    %235 = tpu.matmul %234, %16, %cst_63 {dimension_numbers = #tpu.dot_dimension_numbers<[1], [0], [0], [1], [0, 0, 1, 1], [], []>} : vector<2x128xbf16>, vector<128x384xbf16>, vector<2x384xf32> -> vector<2x384xf32>
    %236 = arith.addf %235, %9 : vector<2x384xf32>
    %237 = vector.extract_strided_slice %233 {offsets = [0, 0], sizes = [2, 256], strides = [1, 1]} : vector<2x384xf32> to vector<2x256xf32>
    %238 = vector.extract_strided_slice %236 {offsets = [0, 0], sizes = [2, 256], strides = [1, 1]} : vector<2x384xf32> to vector<2x256xf32>
    %239 = arith.addf %237, %238 : vector<2x256xf32>
    %240 = arith.negf %239 : vector<2x256xf32>
    %241 = math.exp %240 : vector<2x256xf32>
    %cst_64 = arith.constant 1.000000e+00 : f32
    %242 = vector.broadcast %cst_64 : f32 to vector<2x256xf32>
    %243 = arith.addf %242, %241 : vector<2x256xf32>
    %244 = arith.divf %242, %243 : vector<2x256xf32>
    %245 = vector.extract_strided_slice %244 {offsets = [0, 0], sizes = [2, 128], strides = [1, 1]} : vector<2x256xf32> to vector<2x128xf32>
    %246 = vector.extract_strided_slice %244 {offsets = [0, 128], sizes = [2, 128], strides = [1, 1]} : vector<2x256xf32> to vector<2x128xf32>
    %247 = vector.extract_strided_slice %233 {offsets = [0, 256], sizes = [2, 128], strides = [1, 1]} : vector<2x384xf32> to vector<2x128xf32>
    %248 = vector.extract_strided_slice %236 {offsets = [0, 256], sizes = [2, 128], strides = [1, 1]} : vector<2x384xf32> to vector<2x128xf32>
    %249 = arith.mulf %245, %248 : vector<2x128xf32>
    %250 = arith.addf %247, %249 : vector<2x128xf32>
    %251 = math.tanh %250 : vector<2x128xf32>
    %cst_65 = arith.constant 1.000000e+00 : f32
    %252 = vector.broadcast %cst_65 : f32 to vector<2x128xf32>
    %253 = arith.subf %252, %246 : vector<2x128xf32>
    %254 = arith.mulf %253, %251 : vector<2x128xf32>
    %255 = arith.mulf %246, %203 : vector<2x128xf32>
    %256 = arith.addf %254, %255 : vector<2x128xf32>
    %c4_i32 = arith.constant 4 : i32
    %257 = arith.truncf %256 : vector<2x128xf32> to vector<2x128xbf16>
    %cst_66 = arith.constant dense<0.000000e+00> : vector<2x384xf32>
    %258 = tpu.matmul %257, %17, %cst_66 {dimension_numbers = #tpu.dot_dimension_numbers<[1], [0], [0], [1], [0, 0, 1, 1], [], []>} : vector<2x128xbf16>, vector<128x384xbf16>, vector<2x384xf32> -> vector<2x384xf32>
    %259 = arith.addf %258, %12 : vector<2x384xf32>
    %260 = arith.truncf %229 : vector<2x128xf32> to vector<2x128xbf16>
    %cst_67 = arith.constant dense<0.000000e+00> : vector<2x384xf32>
    %261 = tpu.matmul %260, %18, %cst_67 {dimension_numbers = #tpu.dot_dimension_numbers<[1], [0], [0], [1], [0, 0, 1, 1], [], []>} : vector<2x128xbf16>, vector<128x384xbf16>, vector<2x384xf32> -> vector<2x384xf32>
    %262 = arith.addf %261, %15 : vector<2x384xf32>
    %263 = vector.extract_strided_slice %259 {offsets = [0, 0], sizes = [2, 256], strides = [1, 1]} : vector<2x384xf32> to vector<2x256xf32>
    %264 = vector.extract_strided_slice %262 {offsets = [0, 0], sizes = [2, 256], strides = [1, 1]} : vector<2x384xf32> to vector<2x256xf32>
    %265 = arith.addf %263, %264 : vector<2x256xf32>
    %266 = arith.negf %265 : vector<2x256xf32>
    %267 = math.exp %266 : vector<2x256xf32>
    %cst_68 = arith.constant 1.000000e+00 : f32
    %268 = vector.broadcast %cst_68 : f32 to vector<2x256xf32>
    %269 = arith.addf %268, %267 : vector<2x256xf32>
    %270 = arith.divf %268, %269 : vector<2x256xf32>
    %271 = vector.extract_strided_slice %270 {offsets = [0, 0], sizes = [2, 128], strides = [1, 1]} : vector<2x256xf32> to vector<2x128xf32>
    %272 = vector.extract_strided_slice %270 {offsets = [0, 128], sizes = [2, 128], strides = [1, 1]} : vector<2x256xf32> to vector<2x128xf32>
    %273 = vector.extract_strided_slice %259 {offsets = [0, 256], sizes = [2, 128], strides = [1, 1]} : vector<2x384xf32> to vector<2x128xf32>
    %274 = vector.extract_strided_slice %262 {offsets = [0, 256], sizes = [2, 128], strides = [1, 1]} : vector<2x384xf32> to vector<2x128xf32>
    %275 = arith.mulf %271, %274 : vector<2x128xf32>
    %276 = arith.addf %273, %275 : vector<2x128xf32>
    %277 = math.tanh %276 : vector<2x128xf32>
    %cst_69 = arith.constant 1.000000e+00 : f32
    %278 = vector.broadcast %cst_69 : f32 to vector<2x128xf32>
    %279 = arith.subf %278, %272 : vector<2x128xf32>
    %280 = arith.mulf %279, %277 : vector<2x128xf32>
    %281 = arith.mulf %272, %229 : vector<2x128xf32>
    %282 = arith.addf %280, %281 : vector<2x128xf32>
    %c1_i32_70 = arith.constant 1 : i32
    %283 = arith.addi %c4_i32, %c1_i32_70 : i32
    %c2_i32_71 = arith.constant 2 : i32
    %284 = arith.muli %283, %c2_i32_71 : i32
    %285 = arith.index_cast %284 : i32 to index
    %c0_72 = arith.constant 0 : index
    %286 = vector.load %arg13[%285, %c0_72] : memref<16x384xf32, #tpu.memory_space<vmem>>, vector<2x384xf32>
    %287 = arith.truncf %256 : vector<2x128xf32> to vector<2x128xbf16>
    %cst_73 = arith.constant dense<0.000000e+00> : vector<2x384xf32>
    %288 = tpu.matmul %287, %16, %cst_73 {dimension_numbers = #tpu.dot_dimension_numbers<[1], [0], [0], [1], [0, 0, 1, 1], [], []>} : vector<2x128xbf16>, vector<128x384xbf16>, vector<2x384xf32> -> vector<2x384xf32>
    %289 = arith.addf %288, %9 : vector<2x384xf32>
    %290 = vector.extract_strided_slice %286 {offsets = [0, 0], sizes = [2, 256], strides = [1, 1]} : vector<2x384xf32> to vector<2x256xf32>
    %291 = vector.extract_strided_slice %289 {offsets = [0, 0], sizes = [2, 256], strides = [1, 1]} : vector<2x384xf32> to vector<2x256xf32>
    %292 = arith.addf %290, %291 : vector<2x256xf32>
    %293 = arith.negf %292 : vector<2x256xf32>
    %294 = math.exp %293 : vector<2x256xf32>
    %cst_74 = arith.constant 1.000000e+00 : f32
    %295 = vector.broadcast %cst_74 : f32 to vector<2x256xf32>
    %296 = arith.addf %295, %294 : vector<2x256xf32>
    %297 = arith.divf %295, %296 : vector<2x256xf32>
    %298 = vector.extract_strided_slice %297 {offsets = [0, 0], sizes = [2, 128], strides = [1, 1]} : vector<2x256xf32> to vector<2x128xf32>
    %299 = vector.extract_strided_slice %297 {offsets = [0, 128], sizes = [2, 128], strides = [1, 1]} : vector<2x256xf32> to vector<2x128xf32>
    %300 = vector.extract_strided_slice %286 {offsets = [0, 256], sizes = [2, 128], strides = [1, 1]} : vector<2x384xf32> to vector<2x128xf32>
    %301 = vector.extract_strided_slice %289 {offsets = [0, 256], sizes = [2, 128], strides = [1, 1]} : vector<2x384xf32> to vector<2x128xf32>
    %302 = arith.mulf %298, %301 : vector<2x128xf32>
    %303 = arith.addf %300, %302 : vector<2x128xf32>
    %304 = math.tanh %303 : vector<2x128xf32>
    %cst_75 = arith.constant 1.000000e+00 : f32
    %305 = vector.broadcast %cst_75 : f32 to vector<2x128xf32>
    %306 = arith.subf %305, %299 : vector<2x128xf32>
    %307 = arith.mulf %306, %304 : vector<2x128xf32>
    %308 = arith.mulf %299, %256 : vector<2x128xf32>
    %309 = arith.addf %307, %308 : vector<2x128xf32>
    %c5_i32 = arith.constant 5 : i32
    %310 = arith.truncf %309 : vector<2x128xf32> to vector<2x128xbf16>
    %cst_76 = arith.constant dense<0.000000e+00> : vector<2x384xf32>
    %311 = tpu.matmul %310, %17, %cst_76 {dimension_numbers = #tpu.dot_dimension_numbers<[1], [0], [0], [1], [0, 0, 1, 1], [], []>} : vector<2x128xbf16>, vector<128x384xbf16>, vector<2x384xf32> -> vector<2x384xf32>
    %312 = arith.addf %311, %12 : vector<2x384xf32>
    %313 = arith.truncf %282 : vector<2x128xf32> to vector<2x128xbf16>
    %cst_77 = arith.constant dense<0.000000e+00> : vector<2x384xf32>
    %314 = tpu.matmul %313, %18, %cst_77 {dimension_numbers = #tpu.dot_dimension_numbers<[1], [0], [0], [1], [0, 0, 1, 1], [], []>} : vector<2x128xbf16>, vector<128x384xbf16>, vector<2x384xf32> -> vector<2x384xf32>
    %315 = arith.addf %314, %15 : vector<2x384xf32>
    %316 = vector.extract_strided_slice %312 {offsets = [0, 0], sizes = [2, 256], strides = [1, 1]} : vector<2x384xf32> to vector<2x256xf32>
    %317 = vector.extract_strided_slice %315 {offsets = [0, 0], sizes = [2, 256], strides = [1, 1]} : vector<2x384xf32> to vector<2x256xf32>
    %318 = arith.addf %316, %317 : vector<2x256xf32>
    %319 = arith.negf %318 : vector<2x256xf32>
    %320 = math.exp %319 : vector<2x256xf32>
    %cst_78 = arith.constant 1.000000e+00 : f32
    %321 = vector.broadcast %cst_78 : f32 to vector<2x256xf32>
    %322 = arith.addf %321, %320 : vector<2x256xf32>
    %323 = arith.divf %321, %322 : vector<2x256xf32>
    %324 = vector.extract_strided_slice %323 {offsets = [0, 0], sizes = [2, 128], strides = [1, 1]} : vector<2x256xf32> to vector<2x128xf32>
    %325 = vector.extract_strided_slice %323 {offsets = [0, 128], sizes = [2, 128], strides = [1, 1]} : vector<2x256xf32> to vector<2x128xf32>
    %326 = vector.extract_strided_slice %312 {offsets = [0, 256], sizes = [2, 128], strides = [1, 1]} : vector<2x384xf32> to vector<2x128xf32>
    %327 = vector.extract_strided_slice %315 {offsets = [0, 256], sizes = [2, 128], strides = [1, 1]} : vector<2x384xf32> to vector<2x128xf32>
    %328 = arith.mulf %324, %327 : vector<2x128xf32>
    %329 = arith.addf %326, %328 : vector<2x128xf32>
    %330 = math.tanh %329 : vector<2x128xf32>
    %cst_79 = arith.constant 1.000000e+00 : f32
    %331 = vector.broadcast %cst_79 : f32 to vector<2x128xf32>
    %332 = arith.subf %331, %325 : vector<2x128xf32>
    %333 = arith.mulf %332, %330 : vector<2x128xf32>
    %334 = arith.mulf %325, %282 : vector<2x128xf32>
    %335 = arith.addf %333, %334 : vector<2x128xf32>
    %c1_i32_80 = arith.constant 1 : i32
    %336 = arith.addi %c5_i32, %c1_i32_80 : i32
    %c2_i32_81 = arith.constant 2 : i32
    %337 = arith.muli %336, %c2_i32_81 : i32
    %338 = arith.index_cast %337 : i32 to index
    %c0_82 = arith.constant 0 : index
    %339 = vector.load %arg13[%338, %c0_82] : memref<16x384xf32, #tpu.memory_space<vmem>>, vector<2x384xf32>
    %340 = arith.truncf %309 : vector<2x128xf32> to vector<2x128xbf16>
    %cst_83 = arith.constant dense<0.000000e+00> : vector<2x384xf32>
    %341 = tpu.matmul %340, %16, %cst_83 {dimension_numbers = #tpu.dot_dimension_numbers<[1], [0], [0], [1], [0, 0, 1, 1], [], []>} : vector<2x128xbf16>, vector<128x384xbf16>, vector<2x384xf32> -> vector<2x384xf32>
    %342 = arith.addf %341, %9 : vector<2x384xf32>
    %343 = vector.extract_strided_slice %339 {offsets = [0, 0], sizes = [2, 256], strides = [1, 1]} : vector<2x384xf32> to vector<2x256xf32>
    %344 = vector.extract_strided_slice %342 {offsets = [0, 0], sizes = [2, 256], strides = [1, 1]} : vector<2x384xf32> to vector<2x256xf32>
    %345 = arith.addf %343, %344 : vector<2x256xf32>
    %346 = arith.negf %345 : vector<2x256xf32>
    %347 = math.exp %346 : vector<2x256xf32>
    %cst_84 = arith.constant 1.000000e+00 : f32
    %348 = vector.broadcast %cst_84 : f32 to vector<2x256xf32>
    %349 = arith.addf %348, %347 : vector<2x256xf32>
    %350 = arith.divf %348, %349 : vector<2x256xf32>
    %351 = vector.extract_strided_slice %350 {offsets = [0, 0], sizes = [2, 128], strides = [1, 1]} : vector<2x256xf32> to vector<2x128xf32>
    %352 = vector.extract_strided_slice %350 {offsets = [0, 128], sizes = [2, 128], strides = [1, 1]} : vector<2x256xf32> to vector<2x128xf32>
    %353 = vector.extract_strided_slice %339 {offsets = [0, 256], sizes = [2, 128], strides = [1, 1]} : vector<2x384xf32> to vector<2x128xf32>
    %354 = vector.extract_strided_slice %342 {offsets = [0, 256], sizes = [2, 128], strides = [1, 1]} : vector<2x384xf32> to vector<2x128xf32>
    %355 = arith.mulf %351, %354 : vector<2x128xf32>
    %356 = arith.addf %353, %355 : vector<2x128xf32>
    %357 = math.tanh %356 : vector<2x128xf32>
    %cst_85 = arith.constant 1.000000e+00 : f32
    %358 = vector.broadcast %cst_85 : f32 to vector<2x128xf32>
    %359 = arith.subf %358, %352 : vector<2x128xf32>
    %360 = arith.mulf %359, %357 : vector<2x128xf32>
    %361 = arith.mulf %352, %309 : vector<2x128xf32>
    %362 = arith.addf %360, %361 : vector<2x128xf32>
    %c6_i32 = arith.constant 6 : i32
    %363 = arith.truncf %362 : vector<2x128xf32> to vector<2x128xbf16>
    %cst_86 = arith.constant dense<0.000000e+00> : vector<2x384xf32>
    %364 = tpu.matmul %363, %17, %cst_86 {dimension_numbers = #tpu.dot_dimension_numbers<[1], [0], [0], [1], [0, 0, 1, 1], [], []>} : vector<2x128xbf16>, vector<128x384xbf16>, vector<2x384xf32> -> vector<2x384xf32>
    %365 = arith.addf %364, %12 : vector<2x384xf32>
    %366 = arith.truncf %335 : vector<2x128xf32> to vector<2x128xbf16>
    %cst_87 = arith.constant dense<0.000000e+00> : vector<2x384xf32>
    %367 = tpu.matmul %366, %18, %cst_87 {dimension_numbers = #tpu.dot_dimension_numbers<[1], [0], [0], [1], [0, 0, 1, 1], [], []>} : vector<2x128xbf16>, vector<128x384xbf16>, vector<2x384xf32> -> vector<2x384xf32>
    %368 = arith.addf %367, %15 : vector<2x384xf32>
    %369 = vector.extract_strided_slice %365 {offsets = [0, 0], sizes = [2, 256], strides = [1, 1]} : vector<2x384xf32> to vector<2x256xf32>
    %370 = vector.extract_strided_slice %368 {offsets = [0, 0], sizes = [2, 256], strides = [1, 1]} : vector<2x384xf32> to vector<2x256xf32>
    %371 = arith.addf %369, %370 : vector<2x256xf32>
    %372 = arith.negf %371 : vector<2x256xf32>
    %373 = math.exp %372 : vector<2x256xf32>
    %cst_88 = arith.constant 1.000000e+00 : f32
    %374 = vector.broadcast %cst_88 : f32 to vector<2x256xf32>
    %375 = arith.addf %374, %373 : vector<2x256xf32>
    %376 = arith.divf %374, %375 : vector<2x256xf32>
    %377 = vector.extract_strided_slice %376 {offsets = [0, 0], sizes = [2, 128], strides = [1, 1]} : vector<2x256xf32> to vector<2x128xf32>
    %378 = vector.extract_strided_slice %376 {offsets = [0, 128], sizes = [2, 128], strides = [1, 1]} : vector<2x256xf32> to vector<2x128xf32>
    %379 = vector.extract_strided_slice %365 {offsets = [0, 256], sizes = [2, 128], strides = [1, 1]} : vector<2x384xf32> to vector<2x128xf32>
    %380 = vector.extract_strided_slice %368 {offsets = [0, 256], sizes = [2, 128], strides = [1, 1]} : vector<2x384xf32> to vector<2x128xf32>
    %381 = arith.mulf %377, %380 : vector<2x128xf32>
    %382 = arith.addf %379, %381 : vector<2x128xf32>
    %383 = math.tanh %382 : vector<2x128xf32>
    %cst_89 = arith.constant 1.000000e+00 : f32
    %384 = vector.broadcast %cst_89 : f32 to vector<2x128xf32>
    %385 = arith.subf %384, %378 : vector<2x128xf32>
    %386 = arith.mulf %385, %383 : vector<2x128xf32>
    %387 = arith.mulf %378, %335 : vector<2x128xf32>
    %388 = arith.addf %386, %387 : vector<2x128xf32>
    %c1_i32_90 = arith.constant 1 : i32
    %389 = arith.addi %c6_i32, %c1_i32_90 : i32
    %c2_i32_91 = arith.constant 2 : i32
    %390 = arith.muli %389, %c2_i32_91 : i32
    %391 = arith.index_cast %390 : i32 to index
    %c0_92 = arith.constant 0 : index
    %392 = vector.load %arg13[%391, %c0_92] : memref<16x384xf32, #tpu.memory_space<vmem>>, vector<2x384xf32>
    %393 = arith.truncf %362 : vector<2x128xf32> to vector<2x128xbf16>
    %cst_93 = arith.constant dense<0.000000e+00> : vector<2x384xf32>
    %394 = tpu.matmul %393, %16, %cst_93 {dimension_numbers = #tpu.dot_dimension_numbers<[1], [0], [0], [1], [0, 0, 1, 1], [], []>} : vector<2x128xbf16>, vector<128x384xbf16>, vector<2x384xf32> -> vector<2x384xf32>
    %395 = arith.addf %394, %9 : vector<2x384xf32>
    %396 = vector.extract_strided_slice %392 {offsets = [0, 0], sizes = [2, 256], strides = [1, 1]} : vector<2x384xf32> to vector<2x256xf32>
    %397 = vector.extract_strided_slice %395 {offsets = [0, 0], sizes = [2, 256], strides = [1, 1]} : vector<2x384xf32> to vector<2x256xf32>
    %398 = arith.addf %396, %397 : vector<2x256xf32>
    %399 = arith.negf %398 : vector<2x256xf32>
    %400 = math.exp %399 : vector<2x256xf32>
    %cst_94 = arith.constant 1.000000e+00 : f32
    %401 = vector.broadcast %cst_94 : f32 to vector<2x256xf32>
    %402 = arith.addf %401, %400 : vector<2x256xf32>
    %403 = arith.divf %401, %402 : vector<2x256xf32>
    %404 = vector.extract_strided_slice %403 {offsets = [0, 0], sizes = [2, 128], strides = [1, 1]} : vector<2x256xf32> to vector<2x128xf32>
    %405 = vector.extract_strided_slice %403 {offsets = [0, 128], sizes = [2, 128], strides = [1, 1]} : vector<2x256xf32> to vector<2x128xf32>
    %406 = vector.extract_strided_slice %392 {offsets = [0, 256], sizes = [2, 128], strides = [1, 1]} : vector<2x384xf32> to vector<2x128xf32>
    %407 = vector.extract_strided_slice %395 {offsets = [0, 256], sizes = [2, 128], strides = [1, 1]} : vector<2x384xf32> to vector<2x128xf32>
    %408 = arith.mulf %404, %407 : vector<2x128xf32>
    %409 = arith.addf %406, %408 : vector<2x128xf32>
    %410 = math.tanh %409 : vector<2x128xf32>
    %cst_95 = arith.constant 1.000000e+00 : f32
    %411 = vector.broadcast %cst_95 : f32 to vector<2x128xf32>
    %412 = arith.subf %411, %405 : vector<2x128xf32>
    %413 = arith.mulf %412, %410 : vector<2x128xf32>
    %414 = arith.mulf %405, %362 : vector<2x128xf32>
    %415 = arith.addf %413, %414 : vector<2x128xf32>
    %c7_i32 = arith.constant 7 : i32
    %416 = arith.truncf %415 : vector<2x128xf32> to vector<2x128xbf16>
    %cst_96 = arith.constant dense<0.000000e+00> : vector<2x384xf32>
    %417 = tpu.matmul %416, %17, %cst_96 {dimension_numbers = #tpu.dot_dimension_numbers<[1], [0], [0], [1], [0, 0, 1, 1], [], []>} : vector<2x128xbf16>, vector<128x384xbf16>, vector<2x384xf32> -> vector<2x384xf32>
    %418 = arith.addf %417, %12 : vector<2x384xf32>
    %419 = arith.truncf %388 : vector<2x128xf32> to vector<2x128xbf16>
    %cst_97 = arith.constant dense<0.000000e+00> : vector<2x384xf32>
    %420 = tpu.matmul %419, %18, %cst_97 {dimension_numbers = #tpu.dot_dimension_numbers<[1], [0], [0], [1], [0, 0, 1, 1], [], []>} : vector<2x128xbf16>, vector<128x384xbf16>, vector<2x384xf32> -> vector<2x384xf32>
    %421 = arith.addf %420, %15 : vector<2x384xf32>
    %422 = vector.extract_strided_slice %418 {offsets = [0, 0], sizes = [2, 256], strides = [1, 1]} : vector<2x384xf32> to vector<2x256xf32>
    %423 = vector.extract_strided_slice %421 {offsets = [0, 0], sizes = [2, 256], strides = [1, 1]} : vector<2x384xf32> to vector<2x256xf32>
    %424 = arith.addf %422, %423 : vector<2x256xf32>
    %425 = arith.negf %424 : vector<2x256xf32>
    %426 = math.exp %425 : vector<2x256xf32>
    %cst_98 = arith.constant 1.000000e+00 : f32
    %427 = vector.broadcast %cst_98 : f32 to vector<2x256xf32>
    %428 = arith.addf %427, %426 : vector<2x256xf32>
    %429 = arith.divf %427, %428 : vector<2x256xf32>
    %430 = vector.extract_strided_slice %429 {offsets = [0, 0], sizes = [2, 128], strides = [1, 1]} : vector<2x256xf32> to vector<2x128xf32>
    %431 = vector.extract_strided_slice %429 {offsets = [0, 128], sizes = [2, 128], strides = [1, 1]} : vector<2x256xf32> to vector<2x128xf32>
    %432 = vector.extract_strided_slice %418 {offsets = [0, 256], sizes = [2, 128], strides = [1, 1]} : vector<2x384xf32> to vector<2x128xf32>
    %433 = vector.extract_strided_slice %421 {offsets = [0, 256], sizes = [2, 128], strides = [1, 1]} : vector<2x384xf32> to vector<2x128xf32>
    %434 = arith.mulf %430, %433 : vector<2x128xf32>
    %435 = arith.addf %432, %434 : vector<2x128xf32>
    %436 = math.tanh %435 : vector<2x128xf32>
    %cst_99 = arith.constant 1.000000e+00 : f32
    %437 = vector.broadcast %cst_99 : f32 to vector<2x128xf32>
    %438 = arith.subf %437, %431 : vector<2x128xf32>
    %439 = arith.mulf %438, %436 : vector<2x128xf32>
    %440 = arith.mulf %431, %388 : vector<2x128xf32>
    %441 = arith.addf %439, %440 : vector<2x128xf32>
    %442 = arith.truncf %441 : vector<2x128xf32> to vector<2x128xbf16>
    %c0_100 = arith.constant 0 : index
    %c0_101 = arith.constant 0 : index
    %443 = vector.load %arg10[%c0_100, %c0_101] : memref<128x128xbf16, #tpu.memory_space<vmem>>, vector<128x128xbf16>
    %cst_102 = arith.constant dense<0.000000e+00> : vector<2x128xf32>
    %444 = tpu.matmul %442, %443, %cst_102 {dimension_numbers = #tpu.dot_dimension_numbers<[1], [0], [0], [1], [0, 0, 1, 1], [], []>} : vector<2x128xbf16>, vector<128x128xbf16>, vector<2x128xf32> -> vector<2x128xf32>
    %c0_103 = arith.constant 0 : index
    %c0_104 = arith.constant 0 : index
    %445 = vector.load %arg11[%c0_103, %c0_104] : memref<1x128xf32, #tpu.memory_space<vmem>>, vector<1x128xf32>
    %446 = vector.broadcast %445 : vector<1x128xf32> to vector<2x128xf32>
    %447 = arith.addf %444, %446 : vector<2x128xf32>
    %c0_105 = arith.constant 0 : index
    %c0_106 = arith.constant 0 : index
    %448 = vector.load %arg12[%c0_105, %c0_106] : memref<2x128xf32, #tpu.memory_space<vmem>>, vector<2x128xf32>
    tpu.vector_store %arg12[%c0_105, %c0_106], %447 {strides = array<i32>} : memref<2x128xf32, #tpu.memory_space<vmem>>, vector<2x128xf32>,
    return
  }
  func.func @transform_0(%arg0: i32) -> (i32, i32) {
    %c0_i32 = arith.constant 0 : i32
    %c0_i32_0 = arith.constant 0 : i32
    %c0_i32_1 = arith.constant 0 : i32
    return %c0_i32, %c0_i32_0 : i32, i32
  }
  func.func @transform_1(%arg0: i32) -> (i32, i32) {
    %c0_i32 = arith.constant 0 : i32
    %c0_i32_0 = arith.constant 0 : i32
    %c0_i32_1 = arith.constant 0 : i32
    return %c0_i32, %c0_i32_0 : i32, i32
  }
  func.func @transform_2(%arg0: i32) -> (i32, i32) {
    %c0_i32 = arith.constant 0 : i32
    %c0_i32_0 = arith.constant 0 : i32
    %c0_i32_1 = arith.constant 0 : i32
    return %c0_i32, %c0_i32_0 : i32, i32
  }
  func.func @transform_3(%arg0: i32) -> (i32, i32) {
    %c0_i32 = arith.constant 0 : i32
    %c0_i32_0 = arith.constant 0 : i32
    %c0_i32_1 = arith.constant 0 : i32
    return %c0_i32, %c0_i32_0 : i32, i32
  }
  func.func @transform_4(%arg0: i32) -> (i32, i32) {
    %c0_i32 = arith.constant 0 : i32
    %c0_i32_0 = arith.constant 0 : i32
    %c0_i32_1 = arith.constant 0 : i32
    return %c0_i32, %c0_i32_0 : i32, i32
  }
  func.func @transform_5(%arg0: i32) -> (i32, i32) {
    %c0_i32 = arith.constant 0 : i32
    %c0_i32_0 = arith.constant 0 : i32
    %c0_i32_1 = arith.constant 0 : i32
    return %c0_i32, %c0_i32_0 : i32, i32
  }
  func.func @transform_6(%arg0: i32) -> (i32, i32) {
    %c0_i32 = arith.constant 0 : i32
    %c0_i32_0 = arith.constant 0 : i32
    %c0_i32_1 = arith.constant 0 : i32
    return %c0_i32, %c0_i32_0 : i32, i32
  }
  func.func @transform_7(%arg0: i32) -> (i32, i32) {
    %c0_i32 = arith.constant 0 : i32
    %c0_i32_0 = arith.constant 0 : i32
    %c0_i32_1 = arith.constant 0 : i32
    return %c0_i32, %c0_i32_0 : i32, i32
  }
  func.func @transform_8(%arg0: i32) -> (i32, i32) {
    %c0_i32 = arith.constant 0 : i32
    %c0_i32_0 = arith.constant 0 : i32
    %c0_i32_1 = arith.constant 0 : i32
    return %c0_i32, %c0_i32_0 : i32, i32
  }
  func.func @transform_9(%arg0: i32) -> (i32, i32) {
    %c0_i32 = arith.constant 0 : i32
    %c0_i32_0 = arith.constant 0 : i32
    %c0_i32_1 = arith.constant 0 : i32
    return %c0_i32, %c0_i32_0 : i32, i32
  }
  func.func @transform_10(%arg0: i32) -> (i32, i32) {
    %c0_i32 = arith.constant 0 : i32
    %c0_i32_0 = arith.constant 0 : i32
    %c0_i32_1 = arith.constant 0 : i32
    return %c0_i32, %c0_i32_0 : i32, i32
  }
  func.func @transform_11(%arg0: i32) -> (i32, i32) {
    %c0_i32 = arith.constant 0 : i32
    %c0_i32_0 = arith.constant 0 : i32
    %c0_i32_1 = arith.constant 0 : i32
    return %c0_i32, %c0_i32_0 : i32, i32
  }
}

</mosaic_0001>

<llo_original>
// kernel: tpu_custom_call.1
$region0: #{tpu_custom_call.1}
  #allocation0 [shape = 'u32[]', space=smem, size = 0x4, offset = 0x4, fixed_abs, tag = 'smem constant byte address 0x4 - core index']
  #allocation1 [shape = 'u32[72,128]{1,0:T(1,128)}', space=vmem, size = 0x9000, scoped, tag = 'internal scratch']
  #allocation2 [shape = 'f32[16,384]{1,0:T(8,128)}', space=vmem, size = 0x6000, scoped, tag = 'scratch operand']
  %s0 = inlined_call_operand.hbm [shape: bf16[16,16], index: 0, kind: input, shape index: {}]
  %s1 = inlined_call_operand.hbm [shape: bf16[16,384], index: 1, kind: input, shape index: {}]
  %s2 = inlined_call_operand.hbm [shape: f32[1,384], index: 2, kind: input, shape index: {}]
  %s3 = inlined_call_operand.hbm [shape: bf16[128,384], index: 3, kind: input, shape index: {}]
  %s4 = inlined_call_operand.vmem [shape: f32[1,384], index: 4, kind: input, shape index: {}]
  %s5 = inlined_call_operand.hbm [shape: bf16[128,384], index: 5, kind: input, shape index: {}]
  %s6 = inlined_call_operand.hbm [shape: f32[1,384], index: 6, kind: input, shape index: {}]
  %s7 = inlined_call_operand.hbm [shape: bf16[128,384], index: 7, kind: input, shape index: {}]
  %s8 = inlined_call_operand.vmem [shape: f32[1,384], index: 8, kind: input, shape index: {}]
  %s9 = inlined_call_operand.hbm [shape: bf16[128,128], index: 9, kind: input, shape index: {}]
  %s10 = inlined_call_operand.vmem [shape: f32[1,128], index: 10, kind: input, shape index: {}]
  %s11 = inlined_call_operand.hbm [shape: f32[2,128], index: 11, kind: output, shape index: {}]
  %s12 = sld [smem:[#allocation0]]
  $region86: #{tpu_custom_call.1} parent=0
    _
  %s14 = ssub.s32 1, %s12
  %s15 = scalar_select 0, %s14, %s12
  $region1: #{tpu_custom_call.1} parent=0
    #allocation3 [shape = 'u8[4096]{0}', space=vmem, size = 0x1000, scoped, tag = 'input window, operand 0, single buffered']
    #allocation4 [shape = 's32[1]{0}', space=sflag, size = 0x4, scoped, tag = 'scoped memory for tpu_custom_call.1']
    #allocation5 [shape = 's32[1]{0}', space=sflag, size = 0x4, scoped, tag = 'scoped memory for tpu_custom_call.1']
    #allocation6 [shape = 'u8[12288]{0}', space=vmem, size = 0x3000, scoped, tag = 'input window, operand 1, single buffered']
    #allocation7 [shape = 's32[1]{0}', space=sflag, size = 0x4, scoped, tag = 'scoped memory for tpu_custom_call.1']
    #allocation8 [shape = 'u8[1536]{0}', space=vmem, size = 0x800, scoped, tag = 'input window, operand 2, single buffered']
    #allocation9 [shape = 'u8[98304]{0}', space=vmem, size = 0x18000, scoped, tag = 'input window, operand 3, single buffered']
    #allocation10 [shape = 's32[1]{0}', space=sflag, size = 0x4, scoped, tag = 'scoped memory for tpu_custom_call.1']
    #allocation11 [shape = 'u8[98304]{0}', space=vmem, size = 0x18000, scoped, tag = 'input window, operand 5, single buffered']
    #allocation12 [shape = 'u8[1536]{0}', space=vmem, size = 0x800, scoped, tag = 'input window, operand 6, single buffered']
    #allocation13 [shape = 's32[1]{0}', space=sflag, size = 0x4, scoped, tag = 'scoped memory for tpu_custom_call.1']
    #allocation14 [shape = 'u8[98304]{0}', space=vmem, size = 0x18000, scoped, tag = 'input window, operand 7, single buffered']
    #allocation15 [shape = 'u8[32768]{0}', space=vmem, size = 0x8000, scoped, tag = 'input window, operand 9, single buffered']
    #allocation16 [shape = 's32[1]{0}', space=sflag, size = 0x4, scoped, tag = 'scoped memory for tpu_custom_call.1']
    #allocation17 [shape = 'u8[1024]{0}', space=vmem, size = 0x400, scoped, tag = 'output window, operand 0, single buffered']
    %16 = vsyncpa [#allocation4], 0
    %17 = vsyncpa [#allocation7], 0
    %18 = vsyncpa [#allocation10], 0
    %19 = vsyncpa [#allocation13], 0
    %20 = vsyncpa [#allocation16], 0
    %21 = vsyncpa [#allocation5], 0
    // Predicated region
    $region2: #{tpu_custom_call.1} parent=1 // pred_check
      _
    $region3: #{tpu_custom_call.1} parent=1 // pred_check_branch
      %23 = sbr.rel (0) target = $region5
    $region4: #{tpu_custom_call.1} parent=1 // pred_region
      %25 = vsyncadd [#allocation4], 0
      %s26 = sshll.u32 %s0, 4
      %s27 = int_to_ptr.hbm [resolvable:$true] %s26
      %s28 = sshll.u32 [#allocation3], 4
      %s29 = int_to_ptr.vmem [resolvable:$true] %s28
      %34 = dma.hbm_to_vmem [thread:$0]  %s27, 128, %s29, [#allocation4], 64, 64, 4
    $region5: #{tpu_custom_call.1} parent=1 // pred_fallthru
      _
    // Predicated region
    $region6: #{tpu_custom_call.1} parent=1 // pred_check
      _
    $region7: #{tpu_custom_call.1} parent=1 // pred_check_branch
      %36 = sbr.rel (0) target = $region9
    $region8: #{tpu_custom_call.1} parent=1 // pred_region
      %38 = vsyncadd [#allocation7], 0
      %s39 = sshll.u32 %s1, 4
      %s40 = int_to_ptr.hbm [resolvable:$true] %s39
      %s41 = sshll.u32 [#allocation6], 4
      %s42 = int_to_ptr.vmem [resolvable:$true] %s41
      %47 = dma.hbm_to_vmem [thread:$0]  %s40, 384, %s42, [#allocation7], 192, 192, 12
    $region9: #{tpu_custom_call.1} parent=1 // pred_fallthru
      _
    // Predicated region
    $region10: #{tpu_custom_call.1} parent=1 // pred_check
      _
    $region11: #{tpu_custom_call.1} parent=1 // pred_check_branch
      %49 = sbr.rel (0) target = $region13
    $region12: #{tpu_custom_call.1} parent=1 // pred_region
      %51 = vsyncadd [#allocation7], 0
      %s53 = sshll.u32 %s2, 4
      %s54 = int_to_ptr.hbm [resolvable:$true] %s53
      %s55 = sshll.u32 [#allocation8], 4
      %s56 = int_to_ptr.vmem [resolvable:$true] %s55
      %58 = dma.hbm_to_vmem [thread:$0]  %s54, 48, %s56, [#allocation7]
    $region13: #{tpu_custom_call.1} parent=1 // pred_fallthru
      _
    // Predicated region
    $region14: #{tpu_custom_call.1} parent=1 // pred_check
      _
    $region15: #{tpu_custom_call.1} parent=1 // pred_check_branch
      %60 = sbr.rel (0) target = $region17
    $region16: #{tpu_custom_call.1} parent=1 // pred_region
      %62 = vsyncadd [#allocation10], 0
      %s63 = sshll.u32 %s3, 4
      %s64 = int_to_ptr.hbm [resolvable:$true] %s63
      %s65 = sshll.u32 [#allocation9], 4
      %s66 = int_to_ptr.vmem [resolvable:$true] %s65
      %71 = dma.hbm_to_vmem [thread:$0]  %s64, 3072, %s66, [#allocation10], 192, 192, 12
    $region17: #{tpu_custom_call.1} parent=1 // pred_fallthru
      _
    // Predicated region
    $region18: #{tpu_custom_call.1} parent=1 // pred_check
      _
    $region19: #{tpu_custom_call.1} parent=1 // pred_check_branch
      %73 = sbr.rel (0) target = $region21
    $region20: #{tpu_custom_call.1} parent=1 // pred_region
      _
    $region21: #{tpu_custom_call.1} parent=1 // pred_fallthru
      _
    // Predicated region
    $region22: #{tpu_custom_call.1} parent=1 // pred_check
      _
    $region23: #{tpu_custom_call.1} parent=1 // pred_check_branch
      %75 = sbr.rel (0) target = $region25
    $region24: #{tpu_custom_call.1} parent=1 // pred_region
      %77 = vsyncadd [#allocation10], 0
      %s78 = sshll.u32 %s5, 4
      %s79 = int_to_ptr.hbm [resolvable:$true] %s78
      %s80 = sshll.u32 [#allocation11], 4
      %s81 = int_to_ptr.vmem [resolvable:$true] %s80
      %86 = dma.hbm_to_vmem [thread:$0]  %s79, 3072, %s81, [#allocation10], 192, 192, 12
    $region25: #{tpu_custom_call.1} parent=1 // pred_fallthru
      _
    // Predicated region
    $region26: #{tpu_custom_call.1} parent=1 // pred_check
      _
    $region27: #{tpu_custom_call.1} parent=1 // pred_check_branch
      %88 = sbr.rel (0) target = $region29
    $region28: #{tpu_custom_call.1} parent=1 // pred_region
      %90 = vsyncadd [#allocation13], 0
      %s92 = sshll.u32 %s6, 4
      %s93 = int_to_ptr.hbm [resolvable:$true] %s92
      %s94 = sshll.u32 [#allocation12], 4
      %s95 = int_to_ptr.vmem [resolvable:$true] %s94
      %97 = dma.hbm_to_vmem [thread:$0]  %s93, 48, %s95, [#allocation13]
    $region29: #{tpu_custom_call.1} parent=1 // pred_fallthru
      _
    // Predicated region
    $region30: #{tpu_custom_call.1} parent=1 // pred_check
      _
    $region31: #{tpu_custom_call.1} parent=1 // pred_check_branch
      %99 = sbr.rel (0) target = $region33
    $region32: #{tpu_custom_call.1} parent=1 // pred_region
      %101 = vsyncadd [#allocation13], 0
      %s102 = sshll.u32 %s7, 4
      %s103 = int_to_ptr.hbm [resolvable:$true] %s102
      %s104 = sshll.u32 [#allocation14], 4
      %s105 = int_to_ptr.vmem [resolvable:$true] %s104
      %110 = dma.hbm_to_vmem [thread:$0]  %s103, 3072, %s105, [#allocation13], 192, 192, 12
    $region33: #{tpu_custom_call.1} parent=1 // pred_fallthru
      _
    // Predicated region
    $region34: #{tpu_custom_call.1} parent=1 // pred_check
      _
    $region35: #{tpu_custom_call.1} parent=1 // pred_check_branch
      %112 = sbr.rel (0) target = $region37
    $region36: #{tpu_custom_call.1} parent=1 // pred_region
      _
    $region37: #{tpu_custom_call.1} parent=1 // pred_fallthru
      _
    // Predicated region
    $region38: #{tpu_custom_call.1} parent=1 // pred_check
      _
    $region39: #{tpu_custom_call.1} parent=1 // pred_check_branch
      %114 = sbr.rel (0) target = $region41
    $region40: #{tpu_custom_call.1} parent=1 // pred_region
      %116 = vsyncadd [#allocation16], 0
      %s117 = sshll.u32 %s9, 4
      %s118 = int_to_ptr.hbm [resolvable:$true] %s117
      %s119 = sshll.u32 [#allocation15], 4
      %s120 = int_to_ptr.vmem [resolvable:$true] %s119
      %125 = dma.hbm_to_vmem [thread:$0]  %s118, 1024, %s120, [#allocation16], 64, 64, 4
    $region41: #{tpu_custom_call.1} parent=1 // pred_fallthru
      _
    // Predicated region
    $region42: #{tpu_custom_call.1} parent=1 // pred_check
      _
    $region43: #{tpu_custom_call.1} parent=1 // pred_check_branch
      %127 = sbr.rel (0) target = $region45
    $region44: #{tpu_custom_call.1} parent=1 // pred_region
      _
    $region45: #{tpu_custom_call.1} parent=1 // pred_fallthru
      _
    // Predicated region
    $region46: #{tpu_custom_call.1} parent=1 // pred_check
      _
    $region47: #{tpu_custom_call.1} parent=1 // pred_check_branch
      %129 = sbr.rel (0) target = $region49
    $region48: #{tpu_custom_call.1} parent=1 // pred_region
      %131 = dma.done [#allocation4], 128
    $region49: #{tpu_custom_call.1} parent=1 // pred_fallthru
      _
    // Predicated region
    $region50: #{tpu_custom_call.1} parent=1 // pred_check
      _
    $region51: #{tpu_custom_call.1} parent=1 // pred_check_branch
      %133 = sbr.rel (0) target = $region53
    $region52: #{tpu_custom_call.1} parent=1 // pred_region
      %135 = dma.done [#allocation7], 384
    $region53: #{tpu_custom_call.1} parent=1 // pred_fallthru
      _
    // Predicated region
    $region54: #{tpu_custom_call.1} parent=1 // pred_check
      _
    $region55: #{tpu_custom_call.1} parent=1 // pred_check_branch
      %137 = sbr.rel (0) target = $region57
    $region56: #{tpu_custom_call.1} parent=1 // pred_region
      %139 = dma.done [#allocation7], 48
    $region57: #{tpu_custom_call.1} parent=1 // pred_fallthru
      _
    // Predicated region
    $region58: #{tpu_custom_call.1} parent=1 // pred_check
      _
    $region59: #{tpu_custom_call.1} parent=1 // pred_check_branch
      %141 = sbr.rel (0) target = $region61
    $region60: #{tpu_custom_call.1} parent=1 // pred_region
      %143 = dma.done [#allocation10], 3072
    $region61: #{tpu_custom_call.1} parent=1 // pred_fallthru
      _
    // Predicated region
    $region62: #{tpu_custom_call.1} parent=1 // pred_check
      _
    $region63: #{tpu_custom_call.1} parent=1 // pred_check_branch
      %145 = sbr.rel (0) target = $region65
    $region64: #{tpu_custom_call.1} parent=1 // pred_region
      %147 = dma.done [#allocation10], 3072
    $region65: #{tpu_custom_call.1} parent=1 // pred_fallthru
      _
    // Predicated region
    $region66: #{tpu_custom_call.1} parent=1 // pred_check
      _
    $region67: #{tpu_custom_call.1} parent=1 // pred_check_branch
      %149 = sbr.rel (0) target = $region69
    $region68: #{tpu_custom_call.1} parent=1 // pred_region
      %151 = dma.done [#allocation13], 48
    $region69: #{tpu_custom_call.1} parent=1 // pred_fallthru
      _
    // Predicated region
    $region70: #{tpu_custom_call.1} parent=1 // pred_check
      _
    $region71: #{tpu_custom_call.1} parent=1 // pred_check_branch
      %153 = sbr.rel (0) target = $region73
    $region72: #{tpu_custom_call.1} parent=1 // pred_region
      %155 = dma.done [#allocation13], 3072
    $region73: #{tpu_custom_call.1} parent=1 // pred_fallthru
      _
    // Predicated region
    $region74: #{tpu_custom_call.1} parent=1 // pred_check
      _
    $region75: #{tpu_custom_call.1} parent=1 // pred_check_branch
      %157 = sbr.rel (0) target = $region77
    $region76: #{tpu_custom_call.1} parent=1 // pred_region
      %159 = dma.done [#allocation16], 1024
    $region77: #{tpu_custom_call.1} parent=1 // pred_fallthru
      _
    %v161 = vld [vmem:[#allocation3] sm:$0xf]
    %v162 = vld [vmem:[#allocation3 + $0x4] sm:$0xf]
    %v163 = vld [vmem:[#allocation6] sm:$0xff]
    %v164 = vld [vmem:[#allocation6 + $0x8] sm:$0xf]
    %v165 = vld [vmem:[#allocation6 + $0xc] sm:$0xff]
    %v166 = vld [vmem:[#allocation6 + $0x14] sm:$0xf]
    %v167 = vld [vmem:[#allocation8] sm:$0x7]
    %v169 = vperm.slane %v167, 0
    %v170 = vperm.slane %v167, 1
    %v171 = vperm.slane %v167, 2
    %v177 = vunpack.c.l.b16 %v161
    %v178 = vunpack.c.l.b16 %v162
    %v179 = vpack.c.b16 %v178, %v177
    %v184 = vunpack.c.l.b16 %v163
    %v185 = vunpack.c.h.b16 %v163
    %v186 = vunpack.c.l.b16 %v164
    %v187 = vunpack.c.l.b16 %v165
    %v188 = vunpack.c.h.b16 %v165
    %v189 = vunpack.c.l.b16 %v166
    %v190 = vpack.c.b16 %v187, %v184
    %v191 = vpack.c.b16 %v188, %v185
    %v192 = vpack.c.b16 %v189, %v186
    %vm196 = vcmask 130048
    %v198 = vsel %vm196, %v179, 0
    %200 = vmatpush.bf16.msra.mxu0 0
    %201 = vmatpush.bf16.msra.mxu0 0
    %202 = vmatpush.bf16.msra.mxu0 0
    %203 = vmatpush.bf16.msra.mxu0 0
    %204 = vmatpush.bf16.msra.mxu0 0
    %205 = vmatpush.bf16.msra.mxu0 0
    %206 = vmatpush.bf16.msra.mxu0 0
    %207 = vmatpush.bf16.msra.mxu0 %v190
    %208 = vmatmul.bf16.gmra.mxu0 %v198
    %v209 = vpop.f32.mrf.mxu0
    %v210 = vadd.f32 %v169, %v209
    %v211 = vpop.f32.mrf.mxu0
    %v212 = vadd.f32 %v169, %v211
    %213 = vdwg.mxu0
    %214 = vmatpush.bf16.msra.mxu0 0
    %215 = vmatpush.bf16.msra.mxu0 0
    %216 = vmatpush.bf16.msra.mxu0 0
    %217 = vmatpush.bf16.msra.mxu0 0
    %218 = vmatpush.bf16.msra.mxu0 0
    %219 = vmatpush.bf16.msra.mxu0 0
    %220 = vmatpush.bf16.msra.mxu0 0
    %221 = vmatpush.bf16.msra.mxu0 %v191
    %222 = vmatmul.bf16.gmra.mxu0 %v198
    %v223 = vpop.f32.mrf.mxu0
    %v224 = vadd.f32 %v170, %v223
    %v225 = vpop.f32.mrf.mxu0
    %v226 = vadd.f32 %v170, %v225
    %227 = vdwg.mxu0
    %228 = vmatpush.bf16.msra.mxu0 0
    %229 = vmatpush.bf16.msra.mxu0 0
    %230 = vmatpush.bf16.msra.mxu0 0
    %231 = vmatpush.bf16.msra.mxu0 0
    %232 = vmatpush.bf16.msra.mxu0 0
    %233 = vmatpush.bf16.msra.mxu0 0
    %234 = vmatpush.bf16.msra.mxu0 0
    %235 = vmatpush.bf16.msra.mxu0 %v192
    %236 = vmatmul.bf16.gmra.mxu0 %v198
    %v237 = vpop.f32.mrf.mxu0
    %v238 = vadd.f32 %v171, %v237
    %v239 = vpop.f32.mrf.mxu0
    %v240 = vadd.f32 %v171, %v239
    %241 = vdwg.mxu0
    %242 = vst [vmem:[#allocation2] sm:$0xff] %v210
    %243 = vst [vmem:[#allocation2 + $0x8] sm:$0xff] %v224
    %244 = vst [vmem:[#allocation2 + $0x10] sm:$0xff] %v238
    %245 = vst [vmem:[#allocation2 + $0x18] sm:$0xff] %v212
    %246 = vst [vmem:[#allocation2 + $0x20] sm:$0xff] %v226
    %247 = vst [vmem:[#allocation2 + $0x28] sm:$0xff] %v240
    %v248 = vld [vmem:[%s4] sm:$0x7]
    %v250 = vperm.slane %v248, 0
    %v251 = vperm.slane %v248, 1
    %v252 = vperm.slane %v248, 2
    %v256 = vld [vmem:[#allocation12] sm:$0x7]
    %v258 = vperm.slane %v256, 0
    %v259 = vperm.slane %v256, 1
    %v260 = vperm.slane %v256, 2
    %v264 = vld [vmem:[%s8] sm:$0x7]
    %v266 = vperm.slane %v264, 0
    %v267 = vperm.slane %v264, 1
    %v268 = vperm.slane %v264, 2
    %v272 = vld [vmem:[#allocation9] sm:$0xff]
    %v273 = vld [vmem:[#allocation9 + $0x8] sm:$0xf]
    %v274 = vld [vmem:[#allocation9 + $0xc] sm:$0xff]
    %v275 = vld [vmem:[#allocation9 + $0x14] sm:$0xf]
    %v276 = vld [vmem:[#allocation9 + $0x18] sm:$0xff]
    %v277 = vld [vmem:[#allocation9 + $0x20] sm:$0xf]
    %v278 = vld [vmem:[#allocation9 + $0x24] sm:$0xff]
    %v279 = vld [vmem:[#allocation9 + $0x2c] sm:$0xf]
    %v280 = vld [vmem:[#allocation9 + $0x30] sm:$0xff]
    %v281 = vld [vmem:[#allocation9 + $0x38] sm:$0xf]
    %v282 = vld [vmem:[#allocation9 + $0x3c] sm:$0xff]
    %v283 = vld [vmem:[#allocation9 + $0x44] sm:$0xf]
    %v284 = vld [vmem:[#allocation9 + $0x48] sm:$0xff]
    %v285 = vld [vmem:[#allocation9 + $0x50] sm:$0xf]
    %v286 = vld [vmem:[#allocation9 + $0x54] sm:$0xff]
    %v287 = vld [vmem:[#allocation9 + $0x5c] sm:$0xf]
    %v288 = vld [vmem:[#allocation9 + $0x60] sm:$0xff]
    %v289 = vld [vmem:[#allocation9 + $0x68] sm:$0xf]
    %v290 = vld [vmem:[#allocation9 + $0x6c] sm:$0xff]
    %v291 = vld [vmem:[#allocation9 + $0x74] sm:$0xf]
    %v292 = vld [vmem:[#allocation9 + $0x78] sm:$0xff]
    %v293 = vld [vmem:[#allocation9 + $0x80] sm:$0xf]
    %v294 = vld [vmem:[#allocation9 + $0x84] sm:$0xff]
    %v295 = vld [vmem:[#allocation9 + $0x8c] sm:$0xf]
    %v296 = vld [vmem:[#allocation9 + $0x90] sm:$0xff]
    %v297 = vld [vmem:[#allocation9 + $0x98] sm:$0xf]
    %v298 = vld [vmem:[#allocation9 + $0x9c] sm:$0xff]
    %v299 = vld [vmem:[#allocation9 + $0xa4] sm:$0xf]
    %v300 = vld [vmem:[#allocation9 + $0xa8] sm:$0xff]
    %v301 = vld [vmem:[#allocation9 + $0xb0] sm:$0xf]
    %v302 = vld [vmem:[#allocation9 + $0xb4] sm:$0xff]
    %v303 = vld [vmem:[#allocation9 + $0xbc] sm:$0xf]
    %v304 = vld [vmem:[#allocation11] sm:$0xff]
    %v305 = vld [vmem:[#allocation11 + $0x8] sm:$0xf]
    %v306 = vld [vmem:[#allocation11 + $0xc] sm:$0xff]
    %v307 = vld [vmem:[#allocation11 + $0x14] sm:$0xf]
    %v308 = vld [vmem:[#allocation11 + $0x18] sm:$0xff]
    %v309 = vld [vmem:[#allocation11 + $0x20] sm:$0xf]
    %v310 = vld [vmem:[#allocation11 + $0x24] sm:$0xff]
    %v311 = vld [vmem:[#allocation11 + $0x2c] sm:$0xf]
    %v312 = vld [vmem:[#allocation11 + $0x30] sm:$0xff]
    %v313 = vld [vmem:[#allocation11 + $0x38] sm:$0xf]
    %v314 = vld [vmem:[#allocation11 + $0x3c] sm:$0xff]
    %v315 = vld [vmem:[#allocation11 + $0x44] sm:$0xf]
    %v316 = vld [vmem:[#allocation11 + $0x48] sm:$0xff]
    %v317 = vld [vmem:[#allocation11 + $0x50] sm:$0xf]
    %v318 = vld [vmem:[#allocation11 + $0x54] sm:$0xff]
    %v319 = vld [vmem:[#allocation11 + $0x5c] sm:$0xf]
    %v320 = vld [vmem:[#allocation11 + $0x60] sm:$0xff]
    %v321 = vld [vmem:[#allocation11 + $0x68] sm:$0xf]
    %v322 = vld [vmem:[#allocation11 + $0x6c] sm:$0xff]
    %v323 = vld [vmem:[#allocation11 + $0x74] sm:$0xf]
    %v324 = vld [vmem:[#allocation11 + $0x78] sm:$0xff]
    %v325 = vld [vmem:[#allocation11 + $0x80] sm:$0xf]
    %v326 = vld [vmem:[#allocation11 + $0x84] sm:$0xff]
    %v327 = vld [vmem:[#allocation11 + $0x8c] sm:$0xf]
    %v328 = vld [vmem:[#allocation11 + $0x90] sm:$0xff]
    %v329 = vld [vmem:[#allocation11 + $0x98] sm:$0xf]
    %v330 = vld [vmem:[#allocation11 + $0x9c] sm:$0xff]
    %v331 = vld [vmem:[#allocation11 + $0xa4] sm:$0xf]
    %v332 = vld [vmem:[#allocation11 + $0xa8] sm:$0xff]
    %v333 = vld [vmem:[#allocation11 + $0xb0] sm:$0xf]
    %v334 = vld [vmem:[#allocation11 + $0xb4] sm:$0xff]
    %v335 = vld [vmem:[#allocation11 + $0xbc] sm:$0xf]
    %v336 = vld [vmem:[#allocation14] sm:$0xff]
    %v337 = vld [vmem:[#allocation14 + $0x8] sm:$0xf]
    %v338 = vld [vmem:[#allocation14 + $0xc] sm:$0xff]
    %v339 = vld [vmem:[#allocation14 + $0x14] sm:$0xf]
    %v340 = vld [vmem:[#allocation14 + $0x18] sm:$0xff]
    %v341 = vld [vmem:[#allocation14 + $0x20] sm:$0xf]
    %v342 = vld [vmem:[#allocation14 + $0x24] sm:$0xff]
    %v343 = vld [vmem:[#allocation14 + $0x2c] sm:$0xf]
    %v344 = vld [vmem:[#allocation14 + $0x30] sm:$0xff]
    %v345 = vld [vmem:[#allocation14 + $0x38] sm:$0xf]
    %v346 = vld [vmem:[#allocation14 + $0x3c] sm:$0xff]
    %v347 = vld [vmem:[#allocation14 + $0x44] sm:$0xf]
    %v348 = vld [vmem:[#allocation14 + $0x48] sm:$0xff]
    %v349 = vld [vmem:[#allocation14 + $0x50] sm:$0xf]
    %v350 = vld [vmem:[#allocation14 + $0x54] sm:$0xff]
    %v351 = vld [vmem:[#allocation14 + $0x5c] sm:$0xf]
    %v352 = vld [vmem:[#allocation14 + $0x60] sm:$0xff]
    %v353 = vld [vmem:[#allocation14 + $0x68] sm:$0xf]
    %v354 = vld [vmem:[#allocation14 + $0x6c] sm:$0xff]
    %v355 = vld [vmem:[#allocation14 + $0x74] sm:$0xf]
    %v356 = vld [vmem:[#allocation14 + $0x78] sm:$0xff]
    %v357 = vld [vmem:[#allocation14 + $0x80] sm:$0xf]
    %v358 = vld [vmem:[#allocation14 + $0x84] sm:$0xff]
    %v359 = vld [vmem:[#allocation14 + $0x8c] sm:$0xf]
    %v360 = vld [vmem:[#allocation14 + $0x90] sm:$0xff]
    %v361 = vld [vmem:[#allocation14 + $0x98] sm:$0xf]
    %v362 = vld [vmem:[#allocation14 + $0x9c] sm:$0xff]
    %v363 = vld [vmem:[#allocation14 + $0xa4] sm:$0xf]
    %v364 = vld [vmem:[#allocation14 + $0xa8] sm:$0xff]
    %v365 = vld [vmem:[#allocation14 + $0xb0] sm:$0xf]
    %v366 = vld [vmem:[#allocation14 + $0xb4] sm:$0xff]
    %v367 = vld [vmem:[#allocation14 + $0xbc] sm:$0xf]
    %v368 = vld [vmem:[#allocation2] sm:$0x3]
    %v369 = vld [vmem:[#allocation2 + $0x8] sm:$0x3]
    %v370 = vld [vmem:[#allocation2 + $0x10] sm:$0x3]
    %v403 = vunpack.c.l.b16 %v272
    %v404 = vunpack.c.h.b16 %v272
    %v405 = vunpack.c.l.b16 %v273
    %v406 = vunpack.c.l.b16 %v274
    %v407 = vunpack.c.h.b16 %v274
    %v408 = vunpack.c.l.b16 %v275
    %v409 = vunpack.c.l.b16 %v276
    %v410 = vunpack.c.h.b16 %v276
    %v411 = vunpack.c.l.b16 %v277
    %v412 = vunpack.c.l.b16 %v278
    %v413 = vunpack.c.h.b16 %v278
    %v414 = vunpack.c.l.b16 %v279
    %v415 = vunpack.c.l.b16 %v280
    %v416 = vunpack.c.h.b16 %v280
    %v417 = vunpack.c.l.b16 %v281
    %v418 = vunpack.c.l.b16 %v282
    %v419 = vunpack.c.h.b16 %v282
    %v420 = vunpack.c.l.b16 %v283
    %v421 = vunpack.c.l.b16 %v284
    %v422 = vunpack.c.h.b16 %v284
    %v423 = vunpack.c.l.b16 %v285
    %v424 = vunpack.c.l.b16 %v286
    %v425 = vunpack.c.h.b16 %v286
    %v426 = vunpack.c.l.b16 %v287
    %v427 = vunpack.c.l.b16 %v288
    %v428 = vunpack.c.h.b16 %v288
    %v429 = vunpack.c.l.b16 %v289
    %v430 = vunpack.c.l.b16 %v290
    %v431 = vunpack.c.h.b16 %v290
    %v432 = vunpack.c.l.b16 %v291
    %v433 = vunpack.c.l.b16 %v292
    %v434 = vunpack.c.h.b16 %v292
    %v435 = vunpack.c.l.b16 %v293
    %v436 = vunpack.c.l.b16 %v294
    %v437 = vunpack.c.h.b16 %v294
    %v438 = vunpack.c.l.b16 %v295
    %v439 = vunpack.c.l.b16 %v296
    %v440 = vunpack.c.h.b16 %v296
    %v441 = vunpack.c.l.b16 %v297
    %v442 = vunpack.c.l.b16 %v298
    %v443 = vunpack.c.h.b16 %v298
    %v444 = vunpack.c.l.b16 %v299
    %v445 = vunpack.c.l.b16 %v300
    %v446 = vunpack.c.h.b16 %v300
    %v447 = vunpack.c.l.b16 %v301
    %v448 = vunpack.c.l.b16 %v302
    %v449 = vunpack.c.h.b16 %v302
    %v450 = vunpack.c.l.b16 %v303
    %v451 = vpack.c.b16 %v406, %v403
    %v452 = vpack.c.b16 %v407, %v404
    %v453 = vpack.c.b16 %v408, %v405
    %v454 = vpack.c.b16 %v412, %v409
    %v455 = vpack.c.b16 %v413, %v410
    %v456 = vpack.c.b16 %v414, %v411
    %v457 = vpack.c.b16 %v418, %v415
    %v458 = vpack.c.b16 %v419, %v416
    %v459 = vpack.c.b16 %v420, %v417
    %v460 = vpack.c.b16 %v424, %v421
    %v461 = vpack.c.b16 %v425, %v422
    %v462 = vpack.c.b16 %v426, %v423
    %v463 = vpack.c.b16 %v430, %v427
    %v464 = vpack.c.b16 %v431, %v428
    %v465 = vpack.c.b16 %v432, %v429
    %v466 = vpack.c.b16 %v436, %v433
    %v467 = vpack.c.b16 %v437, %v434
    %v468 = vpack.c.b16 %v438, %v435
    %v469 = vpack.c.b16 %v442, %v439
    %v470 = vpack.c.b16 %v443, %v440
    %v471 = vpack.c.b16 %v444, %v441
    %v472 = vpack.c.b16 %v448, %v445
    %v473 = vpack.c.b16 %v449, %v446
    %v474 = vpack.c.b16 %v450, %v447
    %499 = vmatpush.bf16.msra.mxu0 %v472
    %500 = vmatpush.bf16.msra.mxu0 %v469
    %501 = vmatpush.bf16.msra.mxu0 %v466
    %502 = vmatpush.bf16.msra.mxu0 %v463
    %503 = vmatpush.bf16.msra.mxu0 %v460
    %504 = vmatpush.bf16.msra.mxu0 %v457
    %505 = vmatpush.bf16.msra.mxu0 %v454
    %506 = vmatpush.bf16.msra.mxu0 %v451
    %507 = vmatmul.bf16.gmra.mxu0 0
    %v508 = vpop.f32.mrf.mxu0
    %v509 = vadd.f32 %v250, %v508
    %v510 = vpop.f32.mrf.mxu0
    %511 = vdwg.mxu0
    %512 = vmatpush.bf16.msra.mxu0 %v473
    %513 = vmatpush.bf16.msra.mxu0 %v470
    %514 = vmatpush.bf16.msra.mxu0 %v467
    %515 = vmatpush.bf16.msra.mxu0 %v464
    %516 = vmatpush.bf16.msra.mxu0 %v461
    %517 = vmatpush.bf16.msra.mxu0 %v458
    %518 = vmatpush.bf16.msra.mxu0 %v455
    %519 = vmatpush.bf16.msra.mxu0 %v452
    %520 = vmatmul.bf16.gmra.mxu0 0
    %v521 = vpop.f32.mrf.mxu0
    %v522 = vadd.f32 %v251, %v521
    %v523 = vpop.f32.mrf.mxu0
    %524 = vdwg.mxu0
    %525 = vmatpush.bf16.msra.mxu0 %v474
    %526 = vmatpush.bf16.msra.mxu0 %v471
    %527 = vmatpush.bf16.msra.mxu0 %v468
    %528 = vmatpush.bf16.msra.mxu0 %v465
    %529 = vmatpush.bf16.msra.mxu0 %v462
    %530 = vmatpush.bf16.msra.mxu0 %v459
    %531 = vmatpush.bf16.msra.mxu0 %v456
    %532 = vmatpush.bf16.msra.mxu0 %v453
    %533 = vmatmul.bf16.gmra.mxu0 0
    %v534 = vpop.f32.mrf.mxu0
    %v535 = vadd.f32 %v252, %v534
    %v536 = vpop.f32.mrf.mxu0
    %537 = vdwg.mxu0
    %v538 = vadd.f32 %v368, %v509
    %v539 = vadd.f32 %v369, %v522
    %v540 = vxor.u32 %v538, 2147483648
    %v541 = vxor.u32 %v539, 2147483648
    %v542 = vmul.f32 %v540, 1.442695
    %v543 = vpow.pop %v542
    %v544 = vmul.f32 %v541, 1.442695
    %v545 = vpow.pop %v544
    %v546 = vadd.f32 %v543, 1.0
    %v547 = vadd.f32 %v545, 1.0
    %v548 = vrcp.pop %v546
    %v549 = vmul.f32 %v546, %v548
    %v550 = vsub.f32 1.0, %v549
    %v551 = vmul.f32 %v548, %v550
    %v552 = vadd.f32 %v548, %v551
    %vm553 = vweird.f32 %v546
    %vm554 = vweird.f32 %v548
    %vm555 = vmor %vm553, %vm554
    %v556 = vsel %vm555, %v548, %v552
    %v557 = vand.u32 2147483647, %v546
    %vm558 = vcmp.eq.f32.partialorder %v557, 8.507059e+37
    %v559 = vand.u32 %v546, 2147483648
    %v560 = vor.u32 1.1754944e-38, %v559
    %v561 = vsel %vm558, %v560, %v556
    %v562 = vmul.f32 1.0, %v561
    %v563 = vrcp.pop %v547
    %v564 = vmul.f32 %v547, %v563
    %v565 = vsub.f32 1.0, %v564
    %v566 = vmul.f32 %v563, %v565
    %v567 = vadd.f32 %v563, %v566
    %vm568 = vweird.f32 %v547
    %vm569 = vweird.f32 %v563
    %vm570 = vmor %vm568, %vm569
    %v571 = vsel %vm570, %v563, %v567
    %v572 = vand.u32 2147483647, %v547
    %vm573 = vcmp.eq.f32.partialorder %v572, 8.507059e+37
    %v574 = vand.u32 %v547, 2147483648
    %v575 = vor.u32 1.1754944e-38, %v574
    %v576 = vsel %vm573, %v575, %v571
    %v577 = vmul.f32 1.0, %v576
    %v578 = vmul.f32 %v562, %v535
    %v579 = vadd.f32 %v370, %v578
    %v580 = vtanh.pop %v579
    %v581 = vsub.f32 1.0, %v577
    %v582 = vmul.f32 %v581, %v580
    %v583 = vmul.f32 %v577, 0.0
    %v584 = vadd.f32 %v582, %v583
    %v585 = vpack.c.bf16 %v584, %v584
    %v618 = vunpack.c.l.b16 %v304
    %v619 = vunpack.c.h.b16 %v304
    %v620 = vunpack.c.l.b16 %v305
    %v621 = vunpack.c.l.b16 %v306
    %v622 = vunpack.c.h.b16 %v306
    %v623 = vunpack.c.l.b16 %v307
    %v624 = vunpack.c.l.b16 %v308
    %v625 = vunpack.c.h.b16 %v308
    %v626 = vunpack.c.l.b16 %v309
    %v627 = vunpack.c.l.b16 %v310
    %v628 = vunpack.c.h.b16 %v310
    %v629 = vunpack.c.l.b16 %v311
    %v630 = vunpack.c.l.b16 %v312
    %v631 = vunpack.c.h.b16 %v312
    %v632 = vunpack.c.l.b16 %v313
    %v633 = vunpack.c.l.b16 %v314
    %v634 = vunpack.c.h.b16 %v314
    %v635 = vunpack.c.l.b16 %v315
    %v636 = vunpack.c.l.b16 %v316
    %v637 = vunpack.c.h.b16 %v316
    %v638 = vunpack.c.l.b16 %v317
    %v639 = vunpack.c.l.b16 %v318
    %v640 = vunpack.c.h.b16 %v318
    %v641 = vunpack.c.l.b16 %v319
    %v642 = vunpack.c.l.b16 %v320
    %v643 = vunpack.c.h.b16 %v320
    %v644 = vunpack.c.l.b16 %v321
    %v645 = vunpack.c.l.b16 %v322
    %v646 = vunpack.c.h.b16 %v322
    %v647 = vunpack.c.l.b16 %v323
    %v648 = vunpack.c.l.b16 %v324
    %v649 = vunpack.c.h.b16 %v324
    %v650 = vunpack.c.l.b16 %v325
    %v651 = vunpack.c.l.b16 %v326
    %v652 = vunpack.c.h.b16 %v326
    %v653 = vunpack.c.l.b16 %v327
    %v654 = vunpack.c.l.b16 %v328
    %v655 = vunpack.c.h.b16 %v328
    %v656 = vunpack.c.l.b16 %v329
    %v657 = vunpack.c.l.b16 %v330
    %v658 = vunpack.c.h.b16 %v330
    %v659 = vunpack.c.l.b16 %v331
    %v660 = vunpack.c.l.b16 %v332
    %v661 = vunpack.c.h.b16 %v332
    %v662 = vunpack.c.l.b16 %v333
    %v663 = vunpack.c.l.b16 %v334
    %v664 = vunpack.c.h.b16 %v334
    %v665 = vunpack.c.l.b16 %v335
    %v666 = vpack.c.b16 %v621, %v618
    %v667 = vpack.c.b16 %v622, %v619
    %v668 = vpack.c.b16 %v623, %v620
    %v669 = vpack.c.b16 %v627, %v624
    %v670 = vpack.c.b16 %v628, %v625
    %v671 = vpack.c.b16 %v629, %v626
    %v672 = vpack.c.b16 %v633, %v630
    %v673 = vpack.c.b16 %v634, %v631
    %v674 = vpack.c.b16 %v635, %v632
    %v675 = vpack.c.b16 %v639, %v636
    %v676 = vpack.c.b16 %v640, %v637
    %v677 = vpack.c.b16 %v641, %v638
    %v678 = vpack.c.b16 %v645, %v642
    %v679 = vpack.c.b16 %v646, %v643
    %v680 = vpack.c.b16 %v647, %v644
    %v681 = vpack.c.b16 %v651, %v648
    %v682 = vpack.c.b16 %v652, %v649
    %v683 = vpack.c.b16 %v653, %v650
    %v684 = vpack.c.b16 %v657, %v654
    %v685 = vpack.c.b16 %v658, %v655
    %v686 = vpack.c.b16 %v659, %v656
    %v687 = vpack.c.b16 %v663, %v660
    %v688 = vpack.c.b16 %v664, %v661
    %v689 = vpack.c.b16 %v665, %v662
    %714 = vmatpush.bf16.msra.mxu0 %v687
    %715 = vmatpush.bf16.msra.mxu0 %v684
    %716 = vmatpush.bf16.msra.mxu0 %v681
    %717 = vmatpush.bf16.msra.mxu0 %v678
    %718 = vmatpush.bf16.msra.mxu0 %v675
    %719 = vmatpush.bf16.msra.mxu0 %v672
    %720 = vmatpush.bf16.msra.mxu0 %v669
    %721 = vmatpush.bf16.msra.mxu0 %v666
    %722 = vmatmul.bf16.gmra.mxu0 %v585
    %v723 = vpop.f32.mrf.mxu0
    %v724 = vadd.f32 %v258, %v723
    %v725 = vpop.f32.mrf.mxu0
    %726 = vdwg.mxu0
    %727 = vmatpush.bf16.msra.mxu0 %v688
    %728 = vmatpush.bf16.msra.mxu0 %v685
    %729 = vmatpush.bf16.msra.mxu0 %v682
    %730 = vmatpush.bf16.msra.mxu0 %v679
    %731 = vmatpush.bf16.msra.mxu0 %v676
    %732 = vmatpush.bf16.msra.mxu0 %v673
    %733 = vmatpush.bf16.msra.mxu0 %v670
    %734 = vmatpush.bf16.msra.mxu0 %v667
    %735 = vmatmul.bf16.gmra.mxu0 %v585
    %v736 = vpop.f32.mrf.mxu0
    %v737 = vadd.f32 %v259, %v736
    %v738 = vpop.f32.mrf.mxu0
    %739 = vdwg.mxu0
    %740 = vmatpush.bf16.msra.mxu0 %v689
    %741 = vmatpush.bf16.msra.mxu0 %v686
    %742 = vmatpush.bf16.msra.mxu0 %v683
    %743 = vmatpush.bf16.msra.mxu0 %v680
    %744 = vmatpush.bf16.msra.mxu0 %v677
    %745 = vmatpush.bf16.msra.mxu0 %v674
    %746 = vmatpush.bf16.msra.mxu0 %v671
    %747 = vmatpush.bf16.msra.mxu0 %v668
    %748 = vmatmul.bf16.gmra.mxu0 %v585
    %v749 = vpop.f32.mrf.mxu0
    %v750 = vadd.f32 %v260, %v749
    %v751 = vpop.f32.mrf.mxu0
    %752 = vdwg.mxu0
    %v785 = vunpack.c.l.b16 %v336
    %v786 = vunpack.c.h.b16 %v336
    %v787 = vunpack.c.l.b16 %v337
    %v788 = vunpack.c.l.b16 %v338
    %v789 = vunpack.c.h.b16 %v338
    %v790 = vunpack.c.l.b16 %v339
    %v791 = vunpack.c.l.b16 %v340
    %v792 = vunpack.c.h.b16 %v340
    %v793 = vunpack.c.l.b16 %v341
    %v794 = vunpack.c.l.b16 %v342
    %v795 = vunpack.c.h.b16 %v342
    %v796 = vunpack.c.l.b16 %v343
    %v797 = vunpack.c.l.b16 %v344
    %v798 = vunpack.c.h.b16 %v344
    %v799 = vunpack.c.l.b16 %v345
    %v800 = vunpack.c.l.b16 %v346
    %v801 = vunpack.c.h.b16 %v346
    %v802 = vunpack.c.l.b16 %v347
    %v803 = vunpack.c.l.b16 %v348
    %v804 = vunpack.c.h.b16 %v348
    %v805 = vunpack.c.l.b16 %v349
    %v806 = vunpack.c.l.b16 %v350
    %v807 = vunpack.c.h.b16 %v350
    %v808 = vunpack.c.l.b16 %v351
    %v809 = vunpack.c.l.b16 %v352
    %v810 = vunpack.c.h.b16 %v352
    %v811 = vunpack.c.l.b16 %v353
    %v812 = vunpack.c.l.b16 %v354
    %v813 = vunpack.c.h.b16 %v354
    %v814 = vunpack.c.l.b16 %v355
    %v815 = vunpack.c.l.b16 %v356
    %v816 = vunpack.c.h.b16 %v356
    %v817 = vunpack.c.l.b16 %v357
    %v818 = vunpack.c.l.b16 %v358
    %v819 = vunpack.c.h.b16 %v358
    %v820 = vunpack.c.l.b16 %v359
    %v821 = vunpack.c.l.b16 %v360
    %v822 = vunpack.c.h.b16 %v360
    %v823 = vunpack.c.l.b16 %v361
    %v824 = vunpack.c.l.b16 %v362
    %v825 = vunpack.c.h.b16 %v362
    %v826 = vunpack.c.l.b16 %v363
    %v827 = vunpack.c.l.b16 %v364
    %v828 = vunpack.c.h.b16 %v364
    %v829 = vunpack.c.l.b16 %v365
    %v830 = vunpack.c.l.b16 %v366
    %v831 = vunpack.c.h.b16 %v366
    %v832 = vunpack.c.l.b16 %v367
    %v833 = vpack.c.b16 %v788, %v785
    %v834 = vpack.c.b16 %v789, %v786
    %v835 = vpack.c.b16 %v790, %v787
    %v836 = vpack.c.b16 %v794, %v791
    %v837 = vpack.c.b16 %v795, %v792
    %v838 = vpack.c.b16 %v796, %v793
    %v839 = vpack.c.b16 %v800, %v797
    %v840 = vpack.c.b16 %v801, %v798
    %v841 = vpack.c.b16 %v802, %v799
    %v842 = vpack.c.b16 %v806, %v803
    %v843 = vpack.c.b16 %v807, %v804
    %v844 = vpack.c.b16 %v808, %v805
    %v845 = vpack.c.b16 %v812, %v809
    %v846 = vpack.c.b16 %v813, %v810
    %v847 = vpack.c.b16 %v814, %v811
    %v848 = vpack.c.b16 %v818, %v815
    %v849 = vpack.c.b16 %v819, %v816
    %v850 = vpack.c.b16 %v820, %v817
    %v851 = vpack.c.b16 %v824, %v821
    %v852 = vpack.c.b16 %v825, %v822
    %v853 = vpack.c.b16 %v826, %v823
    %v854 = vpack.c.b16 %v830, %v827
    %v855 = vpack.c.b16 %v831, %v828
    %v856 = vpack.c.b16 %v832, %v829
    %881 = vmatpush.bf16.msra.mxu0 %v854
    %882 = vmatpush.bf16.msra.mxu0 %v851
    %883 = vmatpush.bf16.msra.mxu0 %v848
    %884 = vmatpush.bf16.msra.mxu0 %v845
    %885 = vmatpush.bf16.msra.mxu0 %v842
    %886 = vmatpush.bf16.msra.mxu0 %v839
    %887 = vmatpush.bf16.msra.mxu0 %v836
    %888 = vmatpush.bf16.msra.mxu0 %v833
    %889 = vmatmul.bf16.gmra.mxu0 0
    %v890 = vpop.f32.mrf.mxu0
    %v891 = vadd.f32 %v266, %v890
    %v892 = vpop.f32.mrf.mxu0
    %893 = vdwg.mxu0
    %894 = vmatpush.bf16.msra.mxu0 %v855
    %895 = vmatpush.bf16.msra.mxu0 %v852
    %896 = vmatpush.bf16.msra.mxu0 %v849
    %897 = vmatpush.bf16.msra.mxu0 %v846
    %898 = vmatpush.bf16.msra.mxu0 %v843
    %899 = vmatpush.bf16.msra.mxu0 %v840
    %900 = vmatpush.bf16.msra.mxu0 %v837
    %901 = vmatpush.bf16.msra.mxu0 %v834
    %902 = vmatmul.bf16.gmra.mxu0 0
    %v903 = vpop.f32.mrf.mxu0
    %v904 = vadd.f32 %v267, %v903
    %v905 = vpop.f32.mrf.mxu0
    %906 = vdwg.mxu0
    %907 = vmatpush.bf16.msra.mxu0 %v856
    %908 = vmatpush.bf16.msra.mxu0 %v853
    %909 = vmatpush.bf16.msra.mxu0 %v850
    %910 = vmatpush.bf16.msra.mxu0 %v847
    %911 = vmatpush.bf16.msra.mxu0 %v844
    %912 = vmatpush.bf16.msra.mxu0 %v841
    %913 = vmatpush.bf16.msra.mxu0 %v838
    %914 = vmatpush.bf16.msra.mxu0 %v835
    %915 = vmatmul.bf16.gmra.mxu0 0
    %v916 = vpop.f32.mrf.mxu0
    %v917 = vadd.f32 %v268, %v916
    %v918 = vpop.f32.mrf.mxu0
    %919 = vdwg.mxu0
    %v920 = vadd.f32 %v724, %v891
    %v921 = vadd.f32 %v737, %v904
    %v922 = vxor.u32 %v920, 2147483648
    %v923 = vxor.u32 %v921, 2147483648
    %v924 = vmul.f32 %v922, 1.442695
    %v925 = vpow.pop %v924
    %v926 = vmul.f32 %v923, 1.442695
    %v927 = vpow.pop %v926
    %v928 = vadd.f32 %v925, 1.0
    %v929 = vadd.f32 %v927, 1.0
    %v930 = vrcp.pop %v928
    %v931 = vmul.f32 %v928, %v930
    %v932 = vsub.f32 1.0, %v931
    %v933 = vmul.f32 %v930, %v932
    %v934 = vadd.f32 %v930, %v933
    %vm935 = vweird.f32 %v928
    %vm936 = vweird.f32 %v930
    %vm937 = vmor %vm935, %vm936
    %v938 = vsel %vm937, %v930, %v934
    %v939 = vand.u32 2147483647, %v928
    %vm940 = vcmp.eq.f32.partialorder %v939, 8.507059e+37
    %v941 = vand.u32 %v928, 2147483648
    %v942 = vor.u32 1.1754944e-38, %v941
    %v943 = vsel %vm940, %v942, %v938
    %v944 = vmul.f32 1.0, %v943
    %v945 = vrcp.pop %v929
    %v946 = vmul.f32 %v929, %v945
    %v947 = vsub.f32 1.0, %v946
    %v948 = vmul.f32 %v945, %v947
    %v949 = vadd.f32 %v945, %v948
    %vm950 = vweird.f32 %v929
    %vm951 = vweird.f32 %v945
    %vm952 = vmor %vm950, %vm951
    %v953 = vsel %vm952, %v945, %v949
    %v954 = vand.u32 2147483647, %v929
    %vm955 = vcmp.eq.f32.partialorder %v954, 8.507059e+37
    %v956 = vand.u32 %v929, 2147483648
    %v957 = vor.u32 1.1754944e-38, %v956
    %v958 = vsel %vm955, %v957, %v953
    %v959 = vmul.f32 1.0, %v958
    %v960 = vmul.f32 %v944, %v917
    %v961 = vadd.f32 %v750, %v960
    %v962 = vtanh.pop %v961
    %v963 = vsub.f32 1.0, %v959
    %v964 = vmul.f32 %v963, %v962
    %v965 = vmul.f32 %v959, 0.0
    %v966 = vadd.f32 %v964, %v965
    %v967 = vld [vmem:[#allocation2] sm:$0xc]
    %v968 = vld [vmem:[#allocation2 + $0x8] sm:$0xc]
    %v969 = vld [vmem:[#allocation2 + $0x10] sm:$0xc]
    %970 = vmatpush.bf16.msra.mxu0 %v472
    %971 = vmatpush.bf16.msra.mxu0 %v469
    %972 = vmatpush.bf16.msra.mxu0 %v466
    %973 = vmatpush.bf16.msra.mxu0 %v463
    %974 = vmatpush.bf16.msra.mxu0 %v460
    %975 = vmatpush.bf16.msra.mxu0 %v457
    %976 = vmatpush.bf16.msra.mxu0 %v454
    %977 = vmatpush.bf16.msra.mxu0 %v451
    %978 = vmatmul.bf16.gmra.mxu0 %v585
    %v979 = vpop.f32.mrf.mxu0
    %v980 = vadd.f32 %v250, %v979
    %v981 = vpop.f32.mrf.mxu0
    %982 = vdwg.mxu0
    %983 = vmatpush.bf16.msra.mxu0 %v473
    %984 = vmatpush.bf16.msra.mxu0 %v470
    %985 = vmatpush.bf16.msra.mxu0 %v467
    %986 = vmatpush.bf16.msra.mxu0 %v464
    %987 = vmatpush.bf16.msra.mxu0 %v461
    %988 = vmatpush.bf16.msra.mxu0 %v458
    %989 = vmatpush.bf16.msra.mxu0 %v455
    %990 = vmatpush.bf16.msra.mxu0 %v452
    %991 = vmatmul.bf16.gmra.mxu0 %v585
    %v992 = vpop.f32.mrf.mxu0
    %v993 = vadd.f32 %v251, %v992
    %v994 = vpop.f32.mrf.mxu0
    %995 = vdwg.mxu0
    %996 = vmatpush.bf16.msra.mxu0 %v474
    %997 = vmatpush.bf16.msra.mxu0 %v471
    %998 = vmatpush.bf16.msra.mxu0 %v468
    %999 = vmatpush.bf16.msra.mxu0 %v465
    %1000 = vmatpush.bf16.msra.mxu0 %v462
    %1001 = vmatpush.bf16.msra.mxu0 %v459
    %1002 = vmatpush.bf16.msra.mxu0 %v456
    %1003 = vmatpush.bf16.msra.mxu0 %v453
    %1004 = vmatmul.bf16.gmra.mxu0 %v585
    %v1005 = vpop.f32.mrf.mxu0
    %v1006 = vadd.f32 %v252, %v1005
    %v1007 = vpop.f32.mrf.mxu0
    %1008 = vdwg.mxu0
    %v1011 = vrot.slane %v980, 6
    %v1012 = vrot.slane %v993, 6
    %v1015 = vadd.f32 %v967, %v1011
    %v1016 = vadd.f32 %v968, %v1012
    %v1017 = vxor.u32 %v1015, 2147483648
    %v1018 = vxor.u32 %v1016, 2147483648
    %v1019 = vmul.f32 %v1017, 1.442695
    %v1020 = vpow.pop %v1019
    %v1021 = vmul.f32 %v1018, 1.442695
    %v1022 = vpow.pop %v1021
    %v1023 = vadd.f32 %v1020, 1.0
    %v1024 = vadd.f32 %v1022, 1.0
    %v1025 = vrcp.pop %v1023
    %v1026 = vmul.f32 %v1023, %v1025
    %v1027 = vsub.f32 1.0, %v1026
    %v1028 = vmul.f32 %v1025, %v1027
    %v1029 = vadd.f32 %v1025, %v1028
    %vm1030 = vweird.f32 %v1023
    %vm1031 = vweird.f32 %v1025
    %vm1032 = vmor %vm1030, %vm1031
    %v1033 = vsel %vm1032, %v1025, %v1029
    %v1034 = vand.u32 2147483647, %v1023
    %vm1035 = vcmp.eq.f32.partialorder %v1034, 8.507059e+37
    %v1036 = vand.u32 %v1023, 2147483648
    %v1037 = vor.u32 1.1754944e-38, %v1036
    %v1038 = vsel %vm1035, %v1037, %v1033
    %v1039 = vmul.f32 1.0, %v1038
    %v1040 = vrcp.pop %v1024
    %v1041 = vmul.f32 %v1024, %v1040
    %v1042 = vsub.f32 1.0, %v1041
    %v1043 = vmul.f32 %v1040, %v1042
    %v1044 = vadd.f32 %v1040, %v1043
    %vm1045 = vweird.f32 %v1024
    %vm1046 = vweird.f32 %v1040
    %vm1047 = vmor %vm1045, %vm1046
    %v1048 = vsel %vm1047, %v1040, %v1044
    %v1049 = vand.u32 2147483647, %v1024
    %vm1050 = vcmp.eq.f32.partialorder %v1049, 8.507059e+37
    %v1051 = vand.u32 %v1024, 2147483648
    %v1052 = vor.u32 1.1754944e-38, %v1051
    %v1053 = vsel %vm1050, %v1052, %v1048
    %v1054 = vmul.f32 1.0, %v1053
    %v1056 = vrot.slane %v1006, 6
    %v1058 = vmul.f32 %v1039, %v1056
    %v1059 = vadd.f32 %v969, %v1058
    %v1060 = vtanh.pop %v1059
    %v1061 = vsub.f32 1.0, %v1054
    %v1062 = vmul.f32 %v1061, %v1060
    %v1064 = vrot.slane %v584, 6
    %v1066 = vmul.f32 %v1054, %v1064
    %v1067 = vadd.f32 %v1062, %v1066
    %v1068 = vpack.c.bf16 %v1067, %v1067
    %v1070 = vrot.slane %v1068, 1
    %1072 = vmatpush.bf16.msra.mxu0 %v687
    %1073 = vmatpush.bf16.msra.mxu0 %v684
    %1074 = vmatpush.bf16.msra.mxu0 %v681
    %1075 = vmatpush.bf16.msra.mxu0 %v678
    %1076 = vmatpush.bf16.msra.mxu0 %v675
    %1077 = vmatpush.bf16.msra.mxu0 %v672
    %1078 = vmatpush.bf16.msra.mxu0 %v669
    %1079 = vmatpush.bf16.msra.mxu0 %v666
    %1080 = vmatmul.bf16.gmra.mxu0 %v1070
    %v1081 = vpop.f32.mrf.mxu0
    %v1082 = vadd.f32 %v258, %v1081
    %v1083 = vpop.f32.mrf.mxu0
    %1084 = vdwg.mxu0
    %1085 = vmatpush.bf16.msra.mxu0 %v688
    %1086 = vmatpush.bf16.msra.mxu0 %v685
    %1087 = vmatpush.bf16.msra.mxu0 %v682
    %1088 = vmatpush.bf16.msra.mxu0 %v679
    %1089 = vmatpush.bf16.msra.mxu0 %v676
    %1090 = vmatpush.bf16.msra.mxu0 %v673
    %1091 = vmatpush.bf16.msra.mxu0 %v670
    %1092 = vmatpush.bf16.msra.mxu0 %v667
    %1093 = vmatmul.bf16.gmra.mxu0 %v1070
    %v1094 = vpop.f32.mrf.mxu0
    %v1095 = vadd.f32 %v259, %v1094
    %v1096 = vpop.f32.mrf.mxu0
    %1097 = vdwg.mxu0
    %1098 = vmatpush.bf16.msra.mxu0 %v689
    %1099 = vmatpush.bf16.msra.mxu0 %v686
    %1100 = vmatpush.bf16.msra.mxu0 %v683
    %1101 = vmatpush.bf16.msra.mxu0 %v680
    %1102 = vmatpush.bf16.msra.mxu0 %v677
    %1103 = vmatpush.bf16.msra.mxu0 %v674
    %1104 = vmatpush.bf16.msra.mxu0 %v671
    %1105 = vmatpush.bf16.msra.mxu0 %v668
    %1106 = vmatmul.bf16.gmra.mxu0 %v1070
    %v1107 = vpop.f32.mrf.mxu0
    %v1108 = vadd.f32 %v260, %v1107
    %v1109 = vpop.f32.mrf.mxu0
    %1110 = vdwg.mxu0
    %v1111 = vpack.c.bf16 %v966, %v966
    %1112 = vmatpush.bf16.msra.mxu0 %v854
    %1113 = vmatpush.bf16.msra.mxu0 %v851
    %1114 = vmatpush.bf16.msra.mxu0 %v848
    %1115 = vmatpush.bf16.msra.mxu0 %v845
    %1116 = vmatpush.bf16.msra.mxu0 %v842
    %1117 = vmatpush.bf16.msra.mxu0 %v839
    %1118 = vmatpush.bf16.msra.mxu0 %v836
    %1119 = vmatpush.bf16.msra.mxu0 %v833
    %1120 = vmatmul.bf16.gmra.mxu0 %v1111
    %v1121 = vpop.f32.mrf.mxu0
    %v1122 = vadd.f32 %v266, %v1121
    %v1123 = vpop.f32.mrf.mxu0
    %1124 = vdwg.mxu0
    %1125 = vmatpush.bf16.msra.mxu0 %v855
    %1126 = vmatpush.bf16.msra.mxu0 %v852
    %1127 = vmatpush.bf16.msra.mxu0 %v849
    %1128 = vmatpush.bf16.msra.mxu0 %v846
    %1129 = vmatpush.bf16.msra.mxu0 %v843
    %1130 = vmatpush.bf16.msra.mxu0 %v840
    %1131 = vmatpush.bf16.msra.mxu0 %v837
    %1132 = vmatpush.bf16.msra.mxu0 %v834
    %1133 = vmatmul.bf16.gmra.mxu0 %v1111
    %v1134 = vpop.f32.mrf.mxu0
    %v1135 = vadd.f32 %v267, %v1134
    %v1136 = vpop.f32.mrf.mxu0
    %1137 = vdwg.mxu0
    %1138 = vmatpush.bf16.msra.mxu0 %v856
    %1139 = vmatpush.bf16.msra.mxu0 %v853
    %1140 = vmatpush.bf16.msra.mxu0 %v850
    %1141 = vmatpush.bf16.msra.mxu0 %v847
    %1142 = vmatpush.bf16.msra.mxu0 %v844
    %1143 = vmatpush.bf16.msra.mxu0 %v841
    %1144 = vmatpush.bf16.msra.mxu0 %v838
    %1145 = vmatpush.bf16.msra.mxu0 %v835
    %1146 = vmatmul.bf16.gmra.mxu0 %v1111
    %v1147 = vpop.f32.mrf.mxu0
    %v1148 = vadd.f32 %v268, %v1147
    %v1149 = vpop.f32.mrf.mxu0
    %1150 = vdwg.mxu0
    %v1151 = vadd.f32 %v1082, %v1122
    %v1152 = vadd.f32 %v1095, %v1135
    %v1153 = vxor.u32 %v1151, 2147483648
    %v1154 = vxor.u32 %v1152, 2147483648
    %v1155 = vmul.f32 %v1153, 1.442695
    %v1156 = vpow.pop %v1155
    %v1157 = vmul.f32 %v1154, 1.442695
    %v1158 = vpow.pop %v1157
    %v1159 = vadd.f32 %v1156, 1.0
    %v1160 = vadd.f32 %v1158, 1.0
    %v1161 = vrcp.pop %v1159
    %v1162 = vmul.f32 %v1159, %v1161
    %v1163 = vsub.f32 1.0, %v1162
    %v1164 = vmul.f32 %v1161, %v1163
    %v1165 = vadd.f32 %v1161, %v1164
    %vm1166 = vweird.f32 %v1159
    %vm1167 = vweird.f32 %v1161
    %vm1168 = vmor %vm1166, %vm1167
    %v1169 = vsel %vm1168, %v1161, %v1165
    %v1170 = vand.u32 2147483647, %v1159
    %vm1171 = vcmp.eq.f32.partialorder %v1170, 8.507059e+37
    %v1172 = vand.u32 %v1159, 2147483648
    %v1173 = vor.u32 1.1754944e-38, %v1172
    %v1174 = vsel %vm1171, %v1173, %v1169
    %v1175 = vmul.f32 1.0, %v1174
    %v1176 = vrcp.pop %v1160
    %v1177 = vmul.f32 %v1160, %v1176
    %v1178 = vsub.f32 1.0, %v1177
    %v1179 = vmul.f32 %v1176, %v1178
    %v1180 = vadd.f32 %v1176, %v1179
    %vm1181 = vweird.f32 %v1160
    %vm1182 = vweird.f32 %v1176
    %vm1183 = vmor %vm1181, %vm1182
    %v1184 = vsel %vm1183, %v1176, %v1180
    %v1185 = vand.u32 2147483647, %v1160
    %vm1186 = vcmp.eq.f32.partialorder %v1185, 8.507059e+37
    %v1187 = vand.u32 %v1160, 2147483648
    %v1188 = vor.u32 1.1754944e-38, %v1187
    %v1189 = vsel %vm1186, %v1188, %v1184
    %v1190 = vmul.f32 1.0, %v1189
    %v1191 = vmul.f32 %v1175, %v1148
    %v1192 = vadd.f32 %v1108, %v1191
    %v1193 = vtanh.pop %v1192
    %v1194 = vsub.f32 1.0, %v1190
    %v1195 = vmul.f32 %v1194, %v1193
    %v1196 = vmul.f32 %v1190, %v966
    %v1197 = vadd.f32 %v1195, %v1196
    %v1198 = vld [vmem:[#allocation2] sm:$0x30]
    %v1199 = vld [vmem:[#allocation2 + $0x8] sm:$0x30]
    %v1200 = vld [vmem:[#allocation2 + $0x10] sm:$0x30]
    %1201 = vmatpush.bf16.msra.mxu0 %v472
    %1202 = vmatpush.bf16.msra.mxu0 %v469
    %1203 = vmatpush.bf16.msra.mxu0 %v466
    %1204 = vmatpush.bf16.msra.mxu0 %v463
    %1205 = vmatpush.bf16.msra.mxu0 %v460
    %1206 = vmatpush.bf16.msra.mxu0 %v457
    %1207 = vmatpush.bf16.msra.mxu0 %v454
    %1208 = vmatpush.bf16.msra.mxu0 %v451
    %1209 = vmatmul.bf16.gmra.mxu0 %v1070
    %v1210 = vpop.f32.mrf.mxu0
    %v1211 = vadd.f32 %v250, %v1210
    %v1212 = vpop.f32.mrf.mxu0
    %1213 = vdwg.mxu0
    %1214 = vmatpush.bf16.msra.mxu0 %v473
    %1215 = vmatpush.bf16.msra.mxu0 %v470
    %1216 = vmatpush.bf16.msra.mxu0 %v467
    %1217 = vmatpush.bf16.msra.mxu0 %v464
    %1218 = vmatpush.bf16.msra.mxu0 %v461
    %1219 = vmatpush.bf16.msra.mxu0 %v458
    %1220 = vmatpush.bf16.msra.mxu0 %v455
    %1221 = vmatpush.bf16.msra.mxu0 %v452
    %1222 = vmatmul.bf16.gmra.mxu0 %v1070
    %v1223 = vpop.f32.mrf.mxu0
    %v1224 = vadd.f32 %v251, %v1223
    %v1225 = vpop.f32.mrf.mxu0
    %1226 = vdwg.mxu0
    %1227 = vmatpush.bf16.msra.mxu0 %v474
    %1228 = vmatpush.bf16.msra.mxu0 %v471
    %1229 = vmatpush.bf16.msra.mxu0 %v468
    %1230 = vmatpush.bf16.msra.mxu0 %v465
    %1231 = vmatpush.bf16.msra.mxu0 %v462
    %1232 = vmatpush.bf16.msra.mxu0 %v459
    %1233 = vmatpush.bf16.msra.mxu0 %v456
    %1234 = vmatpush.bf16.msra.mxu0 %v453
    %1235 = vmatmul.bf16.gmra.mxu0 %v1070
    %v1236 = vpop.f32.mrf.mxu0
    %v1237 = vadd.f32 %v252, %v1236
    %v1238 = vpop.f32.mrf.mxu0
    %1239 = vdwg.mxu0
    %v1242 = vrot.slane %v1211, 4
    %v1243 = vrot.slane %v1224, 4
    %v1246 = vadd.f32 %v1198, %v1242
    %v1247 = vadd.f32 %v1199, %v1243
    %v1248 = vxor.u32 %v1246, 2147483648
    %v1249 = vxor.u32 %v1247, 2147483648
    %v1250 = vmul.f32 %v1248, 1.442695
    %v1251 = vpow.pop %v1250
    %v1252 = vmul.f32 %v1249, 1.442695
    %v1253 = vpow.pop %v1252
    %v1254 = vadd.f32 %v1251, 1.0
    %v1255 = vadd.f32 %v1253, 1.0
    %v1256 = vrcp.pop %v1254
    %v1257 = vmul.f32 %v1254, %v1256
    %v1258 = vsub.f32 1.0, %v1257
    %v1259 = vmul.f32 %v1256, %v1258
    %v1260 = vadd.f32 %v1256, %v1259
    %vm1261 = vweird.f32 %v1254
    %vm1262 = vweird.f32 %v1256
    %vm1263 = vmor %vm1261, %vm1262
    %v1264 = vsel %vm1263, %v1256, %v1260
    %v1265 = vand.u32 2147483647, %v1254
    %vm1266 = vcmp.eq.f32.partialorder %v1265, 8.507059e+37
    %v1267 = vand.u32 %v1254, 2147483648
    %v1268 = vor.u32 1.1754944e-38, %v1267
    %v1269 = vsel %vm1266, %v1268, %v1264
    %v1270 = vmul.f32 1.0, %v1269
    %v1271 = vrcp.pop %v1255
    %v1272 = vmul.f32 %v1255, %v1271
    %v1273 = vsub.f32 1.0, %v1272
    %v1274 = vmul.f32 %v1271, %v1273
    %v1275 = vadd.f32 %v1271, %v1274
    %vm1276 = vweird.f32 %v1255
    %vm1277 = vweird.f32 %v1271
    %vm1278 = vmor %vm1276, %vm1277
    %v1279 = vsel %vm1278, %v1271, %v1275
    %v1280 = vand.u32 2147483647, %v1255
    %vm1281 = vcmp.eq.f32.partialorder %v1280, 8.507059e+37
    %v1282 = vand.u32 %v1255, 2147483648
    %v1283 = vor.u32 1.1754944e-38, %v1282
    %v1284 = vsel %vm1281, %v1283, %v1279
    %v1285 = vmul.f32 1.0, %v1284
    %v1287 = vrot.slane %v1237, 4
    %v1289 = vmul.f32 %v1270, %v1287
    %v1290 = vadd.f32 %v1200, %v1289
    %v1291 = vtanh.pop %v1290
    %v1292 = vsub.f32 1.0, %v1285
    %v1293 = vmul.f32 %v1292, %v1291
    %v1295 = vrot.slane %v1067, 6
    %v1297 = vmul.f32 %v1285, %v1295
    %v1298 = vadd.f32 %v1293, %v1297
    %v1299 = vpack.c.bf16 %v1298, %v1298
    %v1301 = vrot.slane %v1299, 2
    %1303 = vmatpush.bf16.msra.mxu0 %v687
    %1304 = vmatpush.bf16.msra.mxu0 %v684
    %1305 = vmatpush.bf16.msra.mxu0 %v681
    %1306 = vmatpush.bf16.msra.mxu0 %v678
    %1307 = vmatpush.bf16.msra.mxu0 %v675
    %1308 = vmatpush.bf16.msra.mxu0 %v672
    %1309 = vmatpush.bf16.msra.mxu0 %v669
    %1310 = vmatpush.bf16.msra.mxu0 %v666
    %1311 = vmatmul.bf16.gmra.mxu0 %v1301
    %v1312 = vpop.f32.mrf.mxu0
    %v1313 = vadd.f32 %v258, %v1312
    %v1314 = vpop.f32.mrf.mxu0
    %1315 = vdwg.mxu0
    %1316 = vmatpush.bf16.msra.mxu0 %v688
    %1317 = vmatpush.bf16.msra.mxu0 %v685
    %1318 = vmatpush.bf16.msra.mxu0 %v682
    %1319 = vmatpush.bf16.msra.mxu0 %v679
    %1320 = vmatpush.bf16.msra.mxu0 %v676
    %1321 = vmatpush.bf16.msra.mxu0 %v673
    %1322 = vmatpush.bf16.msra.mxu0 %v670
    %1323 = vmatpush.bf16.msra.mxu0 %v667
    %1324 = vmatmul.bf16.gmra.mxu0 %v1301
    %v1325 = vpop.f32.mrf.mxu0
    %v1326 = vadd.f32 %v259, %v1325
    %v1327 = vpop.f32.mrf.mxu0
    %1328 = vdwg.mxu0
    %1329 = vmatpush.bf16.msra.mxu0 %v689
    %1330 = vmatpush.bf16.msra.mxu0 %v686
    %1331 = vmatpush.bf16.msra.mxu0 %v683
    %1332 = vmatpush.bf16.msra.mxu0 %v680
    %1333 = vmatpush.bf16.msra.mxu0 %v677
    %1334 = vmatpush.bf16.msra.mxu0 %v674
    %1335 = vmatpush.bf16.msra.mxu0 %v671
    %1336 = vmatpush.bf16.msra.mxu0 %v668
    %1337 = vmatmul.bf16.gmra.mxu0 %v1301
    %v1338 = vpop.f32.mrf.mxu0
    %v1339 = vadd.f32 %v260, %v1338
    %v1340 = vpop.f32.mrf.mxu0
    %1341 = vdwg.mxu0
    %v1342 = vpack.c.bf16 %v1197, %v1197
    %1343 = vmatpush.bf16.msra.mxu0 %v854
    %1344 = vmatpush.bf16.msra.mxu0 %v851
    %1345 = vmatpush.bf16.msra.mxu0 %v848
    %1346 = vmatpush.bf16.msra.mxu0 %v845
    %1347 = vmatpush.bf16.msra.mxu0 %v842
    %1348 = vmatpush.bf16.msra.mxu0 %v839
    %1349 = vmatpush.bf16.msra.mxu0 %v836
    %1350 = vmatpush.bf16.msra.mxu0 %v833
    %1351 = vmatmul.bf16.gmra.mxu0 %v1342
    %v1352 = vpop.f32.mrf.mxu0
    %v1353 = vadd.f32 %v266, %v1352
    %v1354 = vpop.f32.mrf.mxu0
    %1355 = vdwg.mxu0
    %1356 = vmatpush.bf16.msra.mxu0 %v855
    %1357 = vmatpush.bf16.msra.mxu0 %v852
    %1358 = vmatpush.bf16.msra.mxu0 %v849
    %1359 = vmatpush.bf16.msra.mxu0 %v846
    %1360 = vmatpush.bf16.msra.mxu0 %v843
    %1361 = vmatpush.bf16.msra.mxu0 %v840
    %1362 = vmatpush.bf16.msra.mxu0 %v837
    %1363 = vmatpush.bf16.msra.mxu0 %v834
    %1364 = vmatmul.bf16.gmra.mxu0 %v1342
    %v1365 = vpop.f32.mrf.mxu0
    %v1366 = vadd.f32 %v267, %v1365
    %v1367 = vpop.f32.mrf.mxu0
    %1368 = vdwg.mxu0
    %1369 = vmatpush.bf16.msra.mxu0 %v856
    %1370 = vmatpush.bf16.msra.mxu0 %v853
    %1371 = vmatpush.bf16.msra.mxu0 %v850
    %1372 = vmatpush.bf16.msra.mxu0 %v847
    %1373 = vmatpush.bf16.msra.mxu0 %v844
    %1374 = vmatpush.bf16.msra.mxu0 %v841
    %1375 = vmatpush.bf16.msra.mxu0 %v838
    %1376 = vmatpush.bf16.msra.mxu0 %v835
    %1377 = vmatmul.bf16.gmra.mxu0 %v1342
    %v1378 = vpop.f32.mrf.mxu0
    %v1379 = vadd.f32 %v268, %v1378
    %v1380 = vpop.f32.mrf.mxu0
    %1381 = vdwg.mxu0
    %v1382 = vadd.f32 %v1313, %v1353
    %v1383 = vadd.f32 %v1326, %v1366
    %v1384 = vxor.u32 %v1382, 2147483648
    %v1385 = vxor.u32 %v1383, 2147483648
    %v1386 = vmul.f32 %v1384, 1.442695
    %v1387 = vpow.pop %v1386
    %v1388 = vmul.f32 %v1385, 1.442695
    %v1389 = vpow.pop %v1388
    %v1390 = vadd.f32 %v1387, 1.0
    %v1391 = vadd.f32 %v1389, 1.0
    %v1392 = vrcp.pop %v1390
    %v1393 = vmul.f32 %v1390, %v1392
    %v1394 = vsub.f32 1.0, %v1393
    %v1395 = vmul.f32 %v1392, %v1394
    %v1396 = vadd.f32 %v1392, %v1395
    %vm1397 = vweird.f32 %v1390
    %vm1398 = vweird.f32 %v1392
    %vm1399 = vmor %vm1397, %vm1398
    %v1400 = vsel %vm1399, %v1392, %v1396
    %v1401 = vand.u32 2147483647, %v1390
    %vm1402 = vcmp.eq.f32.partialorder %v1401, 8.507059e+37
    %v1403 = vand.u32 %v1390, 2147483648
    %v1404 = vor.u32 1.1754944e-38, %v1403
    %v1405 = vsel %vm1402, %v1404, %v1400
    %v1406 = vmul.f32 1.0, %v1405
    %v1407 = vrcp.pop %v1391
    %v1408 = vmul.f32 %v1391, %v1407
    %v1409 = vsub.f32 1.0, %v1408
    %v1410 = vmul.f32 %v1407, %v1409
    %v1411 = vadd.f32 %v1407, %v1410
    %vm1412 = vweird.f32 %v1391
    %vm1413 = vweird.f32 %v1407
    %vm1414 = vmor %vm1412, %vm1413
    %v1415 = vsel %vm1414, %v1407, %v1411
    %v1416 = vand.u32 2147483647, %v1391
    %vm1417 = vcmp.eq.f32.partialorder %v1416, 8.507059e+37
    %v1418 = vand.u32 %v1391, 2147483648
    %v1419 = vor.u32 1.1754944e-38, %v1418
    %v1420 = vsel %vm1417, %v1419, %v1415
    %v1421 = vmul.f32 1.0, %v1420
    %v1422 = vmul.f32 %v1406, %v1379
    %v1423 = vadd.f32 %v1339, %v1422
    %v1424 = vtanh.pop %v1423
    %v1425 = vsub.f32 1.0, %v1421
    %v1426 = vmul.f32 %v1425, %v1424
    %v1427 = vmul.f32 %v1421, %v1197
    %v1428 = vadd.f32 %v1426, %v1427
    %v1429 = vld [vmem:[#allocation2] sm:$0xc0]
    %v1430 = vld [vmem:[#allocation2 + $0x8] sm:$0xc0]
    %v1431 = vld [vmem:[#allocation2 + $0x10] sm:$0xc0]
    %1432 = vmatpush.bf16.msra.mxu0 %v472
    %1433 = vmatpush.bf16.msra.mxu0 %v469
    %1434 = vmatpush.bf16.msra.mxu0 %v466
    %1435 = vmatpush.bf16.msra.mxu0 %v463
    %1436 = vmatpush.bf16.msra.mxu0 %v460
    %1437 = vmatpush.bf16.msra.mxu0 %v457
    %1438 = vmatpush.bf16.msra.mxu0 %v454
    %1439 = vmatpush.bf16.msra.mxu0 %v451
    %1440 = vmatmul.bf16.gmra.mxu0 %v1301
    %v1441 = vpop.f32.mrf.mxu0
    %v1442 = vadd.f32 %v250, %v1441
    %v1443 = vpop.f32.mrf.mxu0
    %1444 = vdwg.mxu0
    %1445 = vmatpush.bf16.msra.mxu0 %v473
    %1446 = vmatpush.bf16.msra.mxu0 %v470
    %1447 = vmatpush.bf16.msra.mxu0 %v467
    %1448 = vmatpush.bf16.msra.mxu0 %v464
    %1449 = vmatpush.bf16.msra.mxu0 %v461
    %1450 = vmatpush.bf16.msra.mxu0 %v458
    %1451 = vmatpush.bf16.msra.mxu0 %v455
    %1452 = vmatpush.bf16.msra.mxu0 %v452
    %1453 = vmatmul.bf16.gmra.mxu0 %v1301
    %v1454 = vpop.f32.mrf.mxu0
    %v1455 = vadd.f32 %v251, %v1454
    %v1456 = vpop.f32.mrf.mxu0
    %1457 = vdwg.mxu0
    %1458 = vmatpush.bf16.msra.mxu0 %v474
    %1459 = vmatpush.bf16.msra.mxu0 %v471
    %1460 = vmatpush.bf16.msra.mxu0 %v468
    %1461 = vmatpush.bf16.msra.mxu0 %v465
    %1462 = vmatpush.bf16.msra.mxu0 %v462
    %1463 = vmatpush.bf16.msra.mxu0 %v459
    %1464 = vmatpush.bf16.msra.mxu0 %v456
    %1465 = vmatpush.bf16.msra.mxu0 %v453
    %1466 = vmatmul.bf16.gmra.mxu0 %v1301
    %v1467 = vpop.f32.mrf.mxu0
    %v1468 = vadd.f32 %v252, %v1467
    %v1469 = vpop.f32.mrf.mxu0
    %1470 = vdwg.mxu0
    %v1473 = vrot.slane %v1442, 2
    %v1474 = vrot.slane %v1455, 2
    %v1477 = vadd.f32 %v1429, %v1473
    %v1478 = vadd.f32 %v1430, %v1474
    %v1479 = vxor.u32 %v1477, 2147483648
    %v1480 = vxor.u32 %v1478, 2147483648
    %v1481 = vmul.f32 %v1479, 1.442695
    %v1482 = vpow.pop %v1481
    %v1483 = vmul.f32 %v1480, 1.442695
    %v1484 = vpow.pop %v1483
    %v1485 = vadd.f32 %v1482, 1.0
    %v1486 = vadd.f32 %v1484, 1.0
    %v1487 = vrcp.pop %v1485
    %v1488 = vmul.f32 %v1485, %v1487
    %v1489 = vsub.f32 1.0, %v1488
    %v1490 = vmul.f32 %v1487, %v1489
    %v1491 = vadd.f32 %v1487, %v1490
    %vm1492 = vweird.f32 %v1485
    %vm1493 = vweird.f32 %v1487
    %vm1494 = vmor %vm1492, %vm1493
    %v1495 = vsel %vm1494, %v1487, %v1491
    %v1496 = vand.u32 2147483647, %v1485
    %vm1497 = vcmp.eq.f32.partialorder %v1496, 8.507059e+37
    %v1498 = vand.u32 %v1485, 2147483648
    %v1499 = vor.u32 1.1754944e-38, %v1498
    %v1500 = vsel %vm1497, %v1499, %v1495
    %v1501 = vmul.f32 1.0, %v1500
    %v1502 = vrcp.pop %v1486
    %v1503 = vmul.f32 %v1486, %v1502
    %v1504 = vsub.f32 1.0, %v1503
    %v1505 = vmul.f32 %v1502, %v1504
    %v1506 = vadd.f32 %v1502, %v1505
    %vm1507 = vweird.f32 %v1486
    %vm1508 = vweird.f32 %v1502
    %vm1509 = vmor %vm1507, %vm1508
    %v1510 = vsel %vm1509, %v1502, %v1506
    %v1511 = vand.u32 2147483647, %v1486
    %vm1512 = vcmp.eq.f32.partialorder %v1511, 8.507059e+37
    %v1513 = vand.u32 %v1486, 2147483648
    %v1514 = vor.u32 1.1754944e-38, %v1513
    %v1515 = vsel %vm1512, %v1514, %v1510
    %v1516 = vmul.f32 1.0, %v1515
    %v1518 = vrot.slane %v1468, 2
    %v1520 = vmul.f32 %v1501, %v1518
    %v1521 = vadd.f32 %v1431, %v1520
    %v1522 = vtanh.pop %v1521
    %v1523 = vsub.f32 1.0, %v1516
    %v1524 = vmul.f32 %v1523, %v1522
    %v1526 = vrot.slane %v1298, 6
    %v1528 = vmul.f32 %v1516, %v1526
    %v1529 = vadd.f32 %v1524, %v1528
    %v1530 = vpack.c.bf16 %v1529, %v1529
    %v1532 = vrot.slane %v1530, 3
    %1534 = vmatpush.bf16.msra.mxu0 %v687
    %1535 = vmatpush.bf16.msra.mxu0 %v684
    %1536 = vmatpush.bf16.msra.mxu0 %v681
    %1537 = vmatpush.bf16.msra.mxu0 %v678
    %1538 = vmatpush.bf16.msra.mxu0 %v675
    %1539 = vmatpush.bf16.msra.mxu0 %v672
    %1540 = vmatpush.bf16.msra.mxu0 %v669
    %1541 = vmatpush.bf16.msra.mxu0 %v666
    %1542 = vmatmul.bf16.gmra.mxu0 %v1532
    %v1543 = vpop.f32.mrf.mxu0
    %v1544 = vadd.f32 %v258, %v1543
    %v1545 = vpop.f32.mrf.mxu0
    %1546 = vdwg.mxu0
    %1547 = vmatpush.bf16.msra.mxu0 %v688
    %1548 = vmatpush.bf16.msra.mxu0 %v685
    %1549 = vmatpush.bf16.msra.mxu0 %v682
    %1550 = vmatpush.bf16.msra.mxu0 %v679
    %1551 = vmatpush.bf16.msra.mxu0 %v676
    %1552 = vmatpush.bf16.msra.mxu0 %v673
    %1553 = vmatpush.bf16.msra.mxu0 %v670
    %1554 = vmatpush.bf16.msra.mxu0 %v667
    %1555 = vmatmul.bf16.gmra.mxu0 %v1532
    %v1556 = vpop.f32.mrf.mxu0
    %v1557 = vadd.f32 %v259, %v1556
    %v1558 = vpop.f32.mrf.mxu0
    %1559 = vdwg.mxu0
    %1560 = vmatpush.bf16.msra.mxu0 %v689
    %1561 = vmatpush.bf16.msra.mxu0 %v686
    %1562 = vmatpush.bf16.msra.mxu0 %v683
    %1563 = vmatpush.bf16.msra.mxu0 %v680
    %1564 = vmatpush.bf16.msra.mxu0 %v677
    %1565 = vmatpush.bf16.msra.mxu0 %v674
    %1566 = vmatpush.bf16.msra.mxu0 %v671
    %1567 = vmatpush.bf16.msra.mxu0 %v668
    %1568 = vmatmul.bf16.gmra.mxu0 %v1532
    %v1569 = vpop.f32.mrf.mxu0
    %v1570 = vadd.f32 %v260, %v1569
    %v1571 = vpop.f32.mrf.mxu0
    %1572 = vdwg.mxu0
    %v1573 = vpack.c.bf16 %v1428, %v1428
    %1574 = vmatpush.bf16.msra.mxu0 %v854
    %1575 = vmatpush.bf16.msra.mxu0 %v851
    %1576 = vmatpush.bf16.msra.mxu0 %v848
    %1577 = vmatpush.bf16.msra.mxu0 %v845
    %1578 = vmatpush.bf16.msra.mxu0 %v842
    %1579 = vmatpush.bf16.msra.mxu0 %v839
    %1580 = vmatpush.bf16.msra.mxu0 %v836
    %1581 = vmatpush.bf16.msra.mxu0 %v833
    %1582 = vmatmul.bf16.gmra.mxu0 %v1573
    %v1583 = vpop.f32.mrf.mxu0
    %v1584 = vadd.f32 %v266, %v1583
    %v1585 = vpop.f32.mrf.mxu0
    %1586 = vdwg.mxu0
    %1587 = vmatpush.bf16.msra.mxu0 %v855
    %1588 = vmatpush.bf16.msra.mxu0 %v852
    %1589 = vmatpush.bf16.msra.mxu0 %v849
    %1590 = vmatpush.bf16.msra.mxu0 %v846
    %1591 = vmatpush.bf16.msra.mxu0 %v843
    %1592 = vmatpush.bf16.msra.mxu0 %v840
    %1593 = vmatpush.bf16.msra.mxu0 %v837
    %1594 = vmatpush.bf16.msra.mxu0 %v834
    %1595 = vmatmul.bf16.gmra.mxu0 %v1573
    %v1596 = vpop.f32.mrf.mxu0
    %v1597 = vadd.f32 %v267, %v1596
    %v1598 = vpop.f32.mrf.mxu0
    %1599 = vdwg.mxu0
    %1600 = vmatpush.bf16.msra.mxu0 %v856
    %1601 = vmatpush.bf16.msra.mxu0 %v853
    %1602 = vmatpush.bf16.msra.mxu0 %v850
    %1603 = vmatpush.bf16.msra.mxu0 %v847
    %1604 = vmatpush.bf16.msra.mxu0 %v844
    %1605 = vmatpush.bf16.msra.mxu0 %v841
    %1606 = vmatpush.bf16.msra.mxu0 %v838
    %1607 = vmatpush.bf16.msra.mxu0 %v835
    %1608 = vmatmul.bf16.gmra.mxu0 %v1573
    %v1609 = vpop.f32.mrf.mxu0
    %v1610 = vadd.f32 %v268, %v1609
    %v1611 = vpop.f32.mrf.mxu0
    %1612 = vdwg.mxu0
    %v1613 = vadd.f32 %v1544, %v1584
    %v1614 = vadd.f32 %v1557, %v1597
    %v1615 = vxor.u32 %v1613, 2147483648
    %v1616 = vxor.u32 %v1614, 2147483648
    %v1617 = vmul.f32 %v1615, 1.442695
    %v1618 = vpow.pop %v1617
    %v1619 = vmul.f32 %v1616, 1.442695
    %v1620 = vpow.pop %v1619
    %v1621 = vadd.f32 %v1618, 1.0
    %v1622 = vadd.f32 %v1620, 1.0
    %v1623 = vrcp.pop %v1621
    %v1624 = vmul.f32 %v1621, %v1623
    %v1625 = vsub.f32 1.0, %v1624
    %v1626 = vmul.f32 %v1623, %v1625
    %v1627 = vadd.f32 %v1623, %v1626
    %vm1628 = vweird.f32 %v1621
    %vm1629 = vweird.f32 %v1623
    %vm1630 = vmor %vm1628, %vm1629
    %v1631 = vsel %vm1630, %v1623, %v1627
    %v1632 = vand.u32 2147483647, %v1621
    %vm1633 = vcmp.eq.f32.partialorder %v1632, 8.507059e+37
    %v1634 = vand.u32 %v1621, 2147483648
    %v1635 = vor.u32 1.1754944e-38, %v1634
    %v1636 = vsel %vm1633, %v1635, %v1631
    %v1637 = vmul.f32 1.0, %v1636
    %v1638 = vrcp.pop %v1622
    %v1639 = vmul.f32 %v1622, %v1638
    %v1640 = vsub.f32 1.0, %v1639
    %v1641 = vmul.f32 %v1638, %v1640
    %v1642 = vadd.f32 %v1638, %v1641
    %vm1643 = vweird.f32 %v1622
    %vm1644 = vweird.f32 %v1638
    %vm1645 = vmor %vm1643, %vm1644
    %v1646 = vsel %vm1645, %v1638, %v1642
    %v1647 = vand.u32 2147483647, %v1622
    %vm1648 = vcmp.eq.f32.partialorder %v1647, 8.507059e+37
    %v1649 = vand.u32 %v1622, 2147483648
    %v1650 = vor.u32 1.1754944e-38, %v1649
    %v1651 = vsel %vm1648, %v1650, %v1646
    %v1652 = vmul.f32 1.0, %v1651
    %v1653 = vmul.f32 %v1637, %v1610
    %v1654 = vadd.f32 %v1570, %v1653
    %v1655 = vtanh.pop %v1654
    %v1656 = vsub.f32 1.0, %v1652
    %v1657 = vmul.f32 %v1656, %v1655
    %v1658 = vmul.f32 %v1652, %v1428
    %v1659 = vadd.f32 %v1657, %v1658
    %v1660 = vld [vmem:[#allocation2 + $0x18] sm:$0x3]
    %v1661 = vld [vmem:[#allocation2 + $0x20] sm:$0x3]
    %v1662 = vld [vmem:[#allocation2 + $0x28] sm:$0x3]
    %1663 = vmatpush.bf16.msra.mxu0 %v472
    %1664 = vmatpush.bf16.msra.mxu0 %v469
    %1665 = vmatpush.bf16.msra.mxu0 %v466
    %1666 = vmatpush.bf16.msra.mxu0 %v463
    %1667 = vmatpush.bf16.msra.mxu0 %v460
    %1668 = vmatpush.bf16.msra.mxu0 %v457
    %1669 = vmatpush.bf16.msra.mxu0 %v454
    %1670 = vmatpush.bf16.msra.mxu0 %v451
    %1671 = vmatmul.bf16.gmra.mxu0 %v1532
    %v1672 = vpop.f32.mrf.mxu0
    %v1673 = vadd.f32 %v250, %v1672
    %v1674 = vpop.f32.mrf.mxu0
    %1675 = vdwg.mxu0
    %1676 = vmatpush.bf16.msra.mxu0 %v473
    %1677 = vmatpush.bf16.msra.mxu0 %v470
    %1678 = vmatpush.bf16.msra.mxu0 %v467
    %1679 = vmatpush.bf16.msra.mxu0 %v464
    %1680 = vmatpush.bf16.msra.mxu0 %v461
    %1681 = vmatpush.bf16.msra.mxu0 %v458
    %1682 = vmatpush.bf16.msra.mxu0 %v455
    %1683 = vmatpush.bf16.msra.mxu0 %v452
    %1684 = vmatmul.bf16.gmra.mxu0 %v1532
    %v1685 = vpop.f32.mrf.mxu0
    %v1686 = vadd.f32 %v251, %v1685
    %v1687 = vpop.f32.mrf.mxu0
    %1688 = vdwg.mxu0
    %1689 = vmatpush.bf16.msra.mxu0 %v474
    %1690 = vmatpush.bf16.msra.mxu0 %v471
    %1691 = vmatpush.bf16.msra.mxu0 %v468
    %1692 = vmatpush.bf16.msra.mxu0 %v465
    %1693 = vmatpush.bf16.msra.mxu0 %v462
    %1694 = vmatpush.bf16.msra.mxu0 %v459
    %1695 = vmatpush.bf16.msra.mxu0 %v456
    %1696 = vmatpush.bf16.msra.mxu0 %v453
    %1697 = vmatmul.bf16.gmra.mxu0 %v1532
    %v1698 = vpop.f32.mrf.mxu0
    %v1699 = vadd.f32 %v252, %v1698
    %v1700 = vpop.f32.mrf.mxu0
    %1701 = vdwg.mxu0
    %v1702 = vadd.f32 %v1660, %v1673
    %v1703 = vadd.f32 %v1661, %v1686
    %v1704 = vxor.u32 %v1702, 2147483648
    %v1705 = vxor.u32 %v1703, 2147483648
    %v1706 = vmul.f32 %v1704, 1.442695
    %v1707 = vpow.pop %v1706
    %v1708 = vmul.f32 %v1705, 1.442695
    %v1709 = vpow.pop %v1708
    %v1710 = vadd.f32 %v1707, 1.0
    %v1711 = vadd.f32 %v1709, 1.0
    %v1712 = vrcp.pop %v1710
    %v1713 = vmul.f32 %v1710, %v1712
    %v1714 = vsub.f32 1.0, %v1713
    %v1715 = vmul.f32 %v1712, %v1714
    %v1716 = vadd.f32 %v1712, %v1715
    %vm1717 = vweird.f32 %v1710
    %vm1718 = vweird.f32 %v1712
    %vm1719 = vmor %vm1717, %vm1718
    %v1720 = vsel %vm1719, %v1712, %v1716
    %v1721 = vand.u32 2147483647, %v1710
    %vm1722 = vcmp.eq.f32.partialorder %v1721, 8.507059e+37
    %v1723 = vand.u32 %v1710, 2147483648
    %v1724 = vor.u32 1.1754944e-38, %v1723
    %v1725 = vsel %vm1722, %v1724, %v1720
    %v1726 = vmul.f32 1.0, %v1725
    %v1727 = vrcp.pop %v1711
    %v1728 = vmul.f32 %v1711, %v1727
    %v1729 = vsub.f32 1.0, %v1728
    %v1730 = vmul.f32 %v1727, %v1729
    %v1731 = vadd.f32 %v1727, %v1730
    %vm1732 = vweird.f32 %v1711
    %vm1733 = vweird.f32 %v1727
    %vm1734 = vmor %vm1732, %vm1733
    %v1735 = vsel %vm1734, %v1727, %v1731
    %v1736 = vand.u32 2147483647, %v1711
    %vm1737 = vcmp.eq.f32.partialorder %v1736, 8.507059e+37
    %v1738 = vand.u32 %v1711, 2147483648
    %v1739 = vor.u32 1.1754944e-38, %v1738
    %v1740 = vsel %vm1737, %v1739, %v1735
    %v1741 = vmul.f32 1.0, %v1740
    %v1742 = vmul.f32 %v1726, %v1699
    %v1743 = vadd.f32 %v1662, %v1742
    %v1744 = vtanh.pop %v1743
    %v1745 = vsub.f32 1.0, %v1741
    %v1746 = vmul.f32 %v1745, %v1744
    %v1748 = vrot.slane %v1529, 6
    %v1750 = vmul.f32 %v1741, %v1748
    %v1751 = vadd.f32 %v1746, %v1750
    %v1752 = vpack.c.bf16 %v1751, %v1751
    %1753 = vmatpush.bf16.msra.mxu0 %v687
    %1754 = vmatpush.bf16.msra.mxu0 %v684
    %1755 = vmatpush.bf16.msra.mxu0 %v681
    %1756 = vmatpush.bf16.msra.mxu0 %v678
    %1757 = vmatpush.bf16.msra.mxu0 %v675
    %1758 = vmatpush.bf16.msra.mxu0 %v672
    %1759 = vmatpush.bf16.msra.mxu0 %v669
    %1760 = vmatpush.bf16.msra.mxu0 %v666
    %1761 = vmatmul.bf16.gmra.mxu0 %v1752
    %v1762 = vpop.f32.mrf.mxu0
    %v1763 = vadd.f32 %v258, %v1762
    %v1764 = vpop.f32.mrf.mxu0
    %1765 = vdwg.mxu0
    %1766 = vmatpush.bf16.msra.mxu0 %v688
    %1767 = vmatpush.bf16.msra.mxu0 %v685
    %1768 = vmatpush.bf16.msra.mxu0 %v682
    %1769 = vmatpush.bf16.msra.mxu0 %v679
    %1770 = vmatpush.bf16.msra.mxu0 %v676
    %1771 = vmatpush.bf16.msra.mxu0 %v673
    %1772 = vmatpush.bf16.msra.mxu0 %v670
    %1773 = vmatpush.bf16.msra.mxu0 %v667
    %1774 = vmatmul.bf16.gmra.mxu0 %v1752
    %v1775 = vpop.f32.mrf.mxu0
    %v1776 = vadd.f32 %v259, %v1775
    %v1777 = vpop.f32.mrf.mxu0
    %1778 = vdwg.mxu0
    %1779 = vmatpush.bf16.msra.mxu0 %v689
    %1780 = vmatpush.bf16.msra.mxu0 %v686
    %1781 = vmatpush.bf16.msra.mxu0 %v683
    %1782 = vmatpush.bf16.msra.mxu0 %v680
    %1783 = vmatpush.bf16.msra.mxu0 %v677
    %1784 = vmatpush.bf16.msra.mxu0 %v674
    %1785 = vmatpush.bf16.msra.mxu0 %v671
    %1786 = vmatpush.bf16.msra.mxu0 %v668
    %1787 = vmatmul.bf16.gmra.mxu0 %v1752
    %v1788 = vpop.f32.mrf.mxu0
    %v1789 = vadd.f32 %v260, %v1788
    %v1790 = vpop.f32.mrf.mxu0
    %1791 = vdwg.mxu0
    %v1792 = vpack.c.bf16 %v1659, %v1659
    %1793 = vmatpush.bf16.msra.mxu0 %v854
    %1794 = vmatpush.bf16.msra.mxu0 %v851
    %1795 = vmatpush.bf16.msra.mxu0 %v848
    %1796 = vmatpush.bf16.msra.mxu0 %v845
    %1797 = vmatpush.bf16.msra.mxu0 %v842
    %1798 = vmatpush.bf16.msra.mxu0 %v839
    %1799 = vmatpush.bf16.msra.mxu0 %v836
    %1800 = vmatpush.bf16.msra.mxu0 %v833
    %1801 = vmatmul.bf16.gmra.mxu0 %v1792
    %v1802 = vpop.f32.mrf.mxu0
    %v1803 = vadd.f32 %v266, %v1802
    %v1804 = vpop.f32.mrf.mxu0
    %1805 = vdwg.mxu0
    %1806 = vmatpush.bf16.msra.mxu0 %v855
    %1807 = vmatpush.bf16.msra.mxu0 %v852
    %1808 = vmatpush.bf16.msra.mxu0 %v849
    %1809 = vmatpush.bf16.msra.mxu0 %v846
    %1810 = vmatpush.bf16.msra.mxu0 %v843
    %1811 = vmatpush.bf16.msra.mxu0 %v840
    %1812 = vmatpush.bf16.msra.mxu0 %v837
    %1813 = vmatpush.bf16.msra.mxu0 %v834
    %1814 = vmatmul.bf16.gmra.mxu0 %v1792
    %v1815 = vpop.f32.mrf.mxu0
    %v1816 = vadd.f32 %v267, %v1815
    %v1817 = vpop.f32.mrf.mxu0
    %1818 = vdwg.mxu0
    %1819 = vmatpush.bf16.msra.mxu0 %v856
    %1820 = vmatpush.bf16.msra.mxu0 %v853
    %1821 = vmatpush.bf16.msra.mxu0 %v850
    %1822 = vmatpush.bf16.msra.mxu0 %v847
    %1823 = vmatpush.bf16.msra.mxu0 %v844
    %1824 = vmatpush.bf16.msra.mxu0 %v841
    %1825 = vmatpush.bf16.msra.mxu0 %v838
    %1826 = vmatpush.bf16.msra.mxu0 %v835
    %1827 = vmatmul.bf16.gmra.mxu0 %v1792
    %v1828 = vpop.f32.mrf.mxu0
    %v1829 = vadd.f32 %v268, %v1828
    %v1830 = vpop.f32.mrf.mxu0
    %1831 = vdwg.mxu0
    %v1832 = vadd.f32 %v1763, %v1803
    %v1833 = vadd.f32 %v1776, %v1816
    %v1834 = vxor.u32 %v1832, 2147483648
    %v1835 = vxor.u32 %v1833, 2147483648
    %v1836 = vmul.f32 %v1834, 1.442695
    %v1837 = vpow.pop %v1836
    %v1838 = vmul.f32 %v1835, 1.442695
    %v1839 = vpow.pop %v1838
    %v1840 = vadd.f32 %v1837, 1.0
    %v1841 = vadd.f32 %v1839, 1.0
    %v1842 = vrcp.pop %v1840
    %v1843 = vmul.f32 %v1840, %v1842
    %v1844 = vsub.f32 1.0, %v1843
    %v1845 = vmul.f32 %v1842, %v1844
    %v1846 = vadd.f32 %v1842, %v1845
    %vm1847 = vweird.f32 %v1840
    %vm1848 = vweird.f32 %v1842
    %vm1849 = vmor %vm1847, %vm1848
    %v1850 = vsel %vm1849, %v1842, %v1846
    %v1851 = vand.u32 2147483647, %v1840
    %vm1852 = vcmp.eq.f32.partialorder %v1851, 8.507059e+37
    %v1853 = vand.u32 %v1840, 2147483648
    %v1854 = vor.u32 1.1754944e-38, %v1853
    %v1855 = vsel %vm1852, %v1854, %v1850
    %v1856 = vmul.f32 1.0, %v1855
    %v1857 = vrcp.pop %v1841
    %v1858 = vmul.f32 %v1841, %v1857
    %v1859 = vsub.f32 1.0, %v1858
    %v1860 = vmul.f32 %v1857, %v1859
    %v1861 = vadd.f32 %v1857, %v1860
    %vm1862 = vweird.f32 %v1841
    %vm1863 = vweird.f32 %v1857
    %vm1864 = vmor %vm1862, %vm1863
    %v1865 = vsel %vm1864, %v1857, %v1861
    %v1866 = vand.u32 2147483647, %v1841
    %vm1867 = vcmp.eq.f32.partialorder %v1866, 8.507059e+37
    %v1868 = vand.u32 %v1841, 2147483648
    %v1869 = vor.u32 1.1754944e-38, %v1868
    %v1870 = vsel %vm1867, %v1869, %v1865
    %v1871 = vmul.f32 1.0, %v1870
    %v1872 = vmul.f32 %v1856, %v1829
    %v1873 = vadd.f32 %v1789, %v1872
    %v1874 = vtanh.pop %v1873
    %v1875 = vsub.f32 1.0, %v1871
    %v1876 = vmul.f32 %v1875, %v1874
    %v1877 = vmul.f32 %v1871, %v1659
    %v1878 = vadd.f32 %v1876, %v1877
    %v1879 = vld [vmem:[#allocation2 + $0x18] sm:$0xc]
    %v1880 = vld [vmem:[#allocation2 + $0x20] sm:$0xc]
    %v1881 = vld [vmem:[#allocation2 + $0x28] sm:$0xc]
    %1882 = vmatpush.bf16.msra.mxu0 %v472
    %1883 = vmatpush.bf16.msra.mxu0 %v469
    %1884 = vmatpush.bf16.msra.mxu0 %v466
    %1885 = vmatpush.bf16.msra.mxu0 %v463
    %1886 = vmatpush.bf16.msra.mxu0 %v460
    %1887 = vmatpush.bf16.msra.mxu0 %v457
    %1888 = vmatpush.bf16.msra.mxu0 %v454
    %1889 = vmatpush.bf16.msra.mxu0 %v451
    %1890 = vmatmul.bf16.gmra.mxu0 %v1752
    %v1891 = vpop.f32.mrf.mxu0
    %v1892 = vadd.f32 %v250, %v1891
    %v1893 = vpop.f32.mrf.mxu0
    %1894 = vdwg.mxu0
    %1895 = vmatpush.bf16.msra.mxu0 %v473
    %1896 = vmatpush.bf16.msra.mxu0 %v470
    %1897 = vmatpush.bf16.msra.mxu0 %v467
    %1898 = vmatpush.bf16.msra.mxu0 %v464
    %1899 = vmatpush.bf16.msra.mxu0 %v461
    %1900 = vmatpush.bf16.msra.mxu0 %v458
    %1901 = vmatpush.bf16.msra.mxu0 %v455
    %1902 = vmatpush.bf16.msra.mxu0 %v452
    %1903 = vmatmul.bf16.gmra.mxu0 %v1752
    %v1904 = vpop.f32.mrf.mxu0
    %v1905 = vadd.f32 %v251, %v1904
    %v1906 = vpop.f32.mrf.mxu0
    %1907 = vdwg.mxu0
    %1908 = vmatpush.bf16.msra.mxu0 %v474
    %1909 = vmatpush.bf16.msra.mxu0 %v471
    %1910 = vmatpush.bf16.msra.mxu0 %v468
    %1911 = vmatpush.bf16.msra.mxu0 %v465
    %1912 = vmatpush.bf16.msra.mxu0 %v462
    %1913 = vmatpush.bf16.msra.mxu0 %v459
    %1914 = vmatpush.bf16.msra.mxu0 %v456
    %1915 = vmatpush.bf16.msra.mxu0 %v453
    %1916 = vmatmul.bf16.gmra.mxu0 %v1752
    %v1917 = vpop.f32.mrf.mxu0
    %v1918 = vadd.f32 %v252, %v1917
    %v1919 = vpop.f32.mrf.mxu0
    %1920 = vdwg.mxu0
    %v1923 = vrot.slane %v1892, 6
    %v1924 = vrot.slane %v1905, 6
    %v1927 = vadd.f32 %v1879, %v1923
    %v1928 = vadd.f32 %v1880, %v1924
    %v1929 = vxor.u32 %v1927, 2147483648
    %v1930 = vxor.u32 %v1928, 2147483648
    %v1931 = vmul.f32 %v1929, 1.442695
    %v1932 = vpow.pop %v1931
    %v1933 = vmul.f32 %v1930, 1.442695
    %v1934 = vpow.pop %v1933
    %v1935 = vadd.f32 %v1932, 1.0
    %v1936 = vadd.f32 %v1934, 1.0
    %v1937 = vrcp.pop %v1935
    %v1938 = vmul.f32 %v1935, %v1937
    %v1939 = vsub.f32 1.0, %v1938
    %v1940 = vmul.f32 %v1937, %v1939
    %v1941 = vadd.f32 %v1937, %v1940
    %vm1942 = vweird.f32 %v1935
    %vm1943 = vweird.f32 %v1937
    %vm1944 = vmor %vm1942, %vm1943
    %v1945 = vsel %vm1944, %v1937, %v1941
    %v1946 = vand.u32 2147483647, %v1935
    %vm1947 = vcmp.eq.f32.partialorder %v1946, 8.507059e+37
    %v1948 = vand.u32 %v1935, 2147483648
    %v1949 = vor.u32 1.1754944e-38, %v1948
    %v1950 = vsel %vm1947, %v1949, %v1945
    %v1951 = vmul.f32 1.0, %v1950
    %v1952 = vrcp.pop %v1936
    %v1953 = vmul.f32 %v1936, %v1952
    %v1954 = vsub.f32 1.0, %v1953
    %v1955 = vmul.f32 %v1952, %v1954
    %v1956 = vadd.f32 %v1952, %v1955
    %vm1957 = vweird.f32 %v1936
    %vm1958 = vweird.f32 %v1952
    %vm1959 = vmor %vm1957, %vm1958
    %v1960 = vsel %vm1959, %v1952, %v1956
    %v1961 = vand.u32 2147483647, %v1936
    %vm1962 = vcmp.eq.f32.partialorder %v1961, 8.507059e+37
    %v1963 = vand.u32 %v1936, 2147483648
    %v1964 = vor.u32 1.1754944e-38, %v1963
    %v1965 = vsel %vm1962, %v1964, %v1960
    %v1966 = vmul.f32 1.0, %v1965
    %v1968 = vrot.slane %v1918, 6
    %v1970 = vmul.f32 %v1951, %v1968
    %v1971 = vadd.f32 %v1881, %v1970
    %v1972 = vtanh.pop %v1971
    %v1973 = vsub.f32 1.0, %v1966
    %v1974 = vmul.f32 %v1973, %v1972
    %v1976 = vrot.slane %v1751, 6
    %v1978 = vmul.f32 %v1966, %v1976
    %v1979 = vadd.f32 %v1974, %v1978
    %v1980 = vpack.c.bf16 %v1979, %v1979
    %v1982 = vrot.slane %v1980, 1
    %1984 = vmatpush.bf16.msra.mxu0 %v687
    %1985 = vmatpush.bf16.msra.mxu0 %v684
    %1986 = vmatpush.bf16.msra.mxu0 %v681
    %1987 = vmatpush.bf16.msra.mxu0 %v678
    %1988 = vmatpush.bf16.msra.mxu0 %v675
    %1989 = vmatpush.bf16.msra.mxu0 %v672
    %1990 = vmatpush.bf16.msra.mxu0 %v669
    %1991 = vmatpush.bf16.msra.mxu0 %v666
    %1992 = vmatmul.bf16.gmra.mxu0 %v1982
    %v1993 = vpop.f32.mrf.mxu0
    %v1994 = vadd.f32 %v258, %v1993
    %v1995 = vpop.f32.mrf.mxu0
    %1996 = vdwg.mxu0
    %1997 = vmatpush.bf16.msra.mxu0 %v688
    %1998 = vmatpush.bf16.msra.mxu0 %v685
    %1999 = vmatpush.bf16.msra.mxu0 %v682
    %2000 = vmatpush.bf16.msra.mxu0 %v679
    %2001 = vmatpush.bf16.msra.mxu0 %v676
    %2002 = vmatpush.bf16.msra.mxu0 %v673
    %2003 = vmatpush.bf16.msra.mxu0 %v670
    %2004 = vmatpush.bf16.msra.mxu0 %v667
    %2005 = vmatmul.bf16.gmra.mxu0 %v1982
    %v2006 = vpop.f32.mrf.mxu0
    %v2007 = vadd.f32 %v259, %v2006
    %v2008 = vpop.f32.mrf.mxu0
    %2009 = vdwg.mxu0
    %2010 = vmatpush.bf16.msra.mxu0 %v689
    %2011 = vmatpush.bf16.msra.mxu0 %v686
    %2012 = vmatpush.bf16.msra.mxu0 %v683
    %2013 = vmatpush.bf16.msra.mxu0 %v680
    %2014 = vmatpush.bf16.msra.mxu0 %v677
    %2015 = vmatpush.bf16.msra.mxu0 %v674
    %2016 = vmatpush.bf16.msra.mxu0 %v671
    %2017 = vmatpush.bf16.msra.mxu0 %v668
    %2018 = vmatmul.bf16.gmra.mxu0 %v1982
    %v2019 = vpop.f32.mrf.mxu0
    %v2020 = vadd.f32 %v260, %v2019
    %v2021 = vpop.f32.mrf.mxu0
    %2022 = vdwg.mxu0
    %v2023 = vpack.c.bf16 %v1878, %v1878
    %2024 = vmatpush.bf16.msra.mxu0 %v854
    %2025 = vmatpush.bf16.msra.mxu0 %v851
    %2026 = vmatpush.bf16.msra.mxu0 %v848
    %2027 = vmatpush.bf16.msra.mxu0 %v845
    %2028 = vmatpush.bf16.msra.mxu0 %v842
    %2029 = vmatpush.bf16.msra.mxu0 %v839
    %2030 = vmatpush.bf16.msra.mxu0 %v836
    %2031 = vmatpush.bf16.msra.mxu0 %v833
    %2032 = vmatmul.bf16.gmra.mxu0 %v2023
    %v2033 = vpop.f32.mrf.mxu0
    %v2034 = vadd.f32 %v266, %v2033
    %v2035 = vpop.f32.mrf.mxu0
    %2036 = vdwg.mxu0
    %2037 = vmatpush.bf16.msra.mxu0 %v855
    %2038 = vmatpush.bf16.msra.mxu0 %v852
    %2039 = vmatpush.bf16.msra.mxu0 %v849
    %2040 = vmatpush.bf16.msra.mxu0 %v846
    %2041 = vmatpush.bf16.msra.mxu0 %v843
    %2042 = vmatpush.bf16.msra.mxu0 %v840
    %2043 = vmatpush.bf16.msra.mxu0 %v837
    %2044 = vmatpush.bf16.msra.mxu0 %v834
    %2045 = vmatmul.bf16.gmra.mxu0 %v2023
    %v2046 = vpop.f32.mrf.mxu0
    %v2047 = vadd.f32 %v267, %v2046
    %v2048 = vpop.f32.mrf.mxu0
    %2049 = vdwg.mxu0
    %2050 = vmatpush.bf16.msra.mxu0 %v856
    %2051 = vmatpush.bf16.msra.mxu0 %v853
    %2052 = vmatpush.bf16.msra.mxu0 %v850
    %2053 = vmatpush.bf16.msra.mxu0 %v847
    %2054 = vmatpush.bf16.msra.mxu0 %v844
    %2055 = vmatpush.bf16.msra.mxu0 %v841
    %2056 = vmatpush.bf16.msra.mxu0 %v838
    %2057 = vmatpush.bf16.msra.mxu0 %v835
    %2058 = vmatmul.bf16.gmra.mxu0 %v2023
    %v2059 = vpop.f32.mrf.mxu0
    %v2060 = vadd.f32 %v268, %v2059
    %v2061 = vpop.f32.mrf.mxu0
    %2062 = vdwg.mxu0
    %v2063 = vadd.f32 %v1994, %v2034
    %v2064 = vadd.f32 %v2007, %v2047
    %v2065 = vxor.u32 %v2063, 2147483648
    %v2066 = vxor.u32 %v2064, 2147483648
    %v2067 = vmul.f32 %v2065, 1.442695
    %v2068 = vpow.pop %v2067
    %v2069 = vmul.f32 %v2066, 1.442695
    %v2070 = vpow.pop %v2069
    %v2071 = vadd.f32 %v2068, 1.0
    %v2072 = vadd.f32 %v2070, 1.0
    %v2073 = vrcp.pop %v2071
    %v2074 = vmul.f32 %v2071, %v2073
    %v2075 = vsub.f32 1.0, %v2074
    %v2076 = vmul.f32 %v2073, %v2075
    %v2077 = vadd.f32 %v2073, %v2076
    %vm2078 = vweird.f32 %v2071
    %vm2079 = vweird.f32 %v2073
    %vm2080 = vmor %vm2078, %vm2079
    %v2081 = vsel %vm2080, %v2073, %v2077
    %v2082 = vand.u32 2147483647, %v2071
    %vm2083 = vcmp.eq.f32.partialorder %v2082, 8.507059e+37
    %v2084 = vand.u32 %v2071, 2147483648
    %v2085 = vor.u32 1.1754944e-38, %v2084
    %v2086 = vsel %vm2083, %v2085, %v2081
    %v2087 = vmul.f32 1.0, %v2086
    %v2088 = vrcp.pop %v2072
    %v2089 = vmul.f32 %v2072, %v2088
    %v2090 = vsub.f32 1.0, %v2089
    %v2091 = vmul.f32 %v2088, %v2090
    %v2092 = vadd.f32 %v2088, %v2091
    %vm2093 = vweird.f32 %v2072
    %vm2094 = vweird.f32 %v2088
    %vm2095 = vmor %vm2093, %vm2094
    %v2096 = vsel %vm2095, %v2088, %v2092
    %v2097 = vand.u32 2147483647, %v2072
    %vm2098 = vcmp.eq.f32.partialorder %v2097, 8.507059e+37
    %v2099 = vand.u32 %v2072, 2147483648
    %v2100 = vor.u32 1.1754944e-38, %v2099
    %v2101 = vsel %vm2098, %v2100, %v2096
    %v2102 = vmul.f32 1.0, %v2101
    %v2103 = vmul.f32 %v2087, %v2060
    %v2104 = vadd.f32 %v2020, %v2103
    %v2105 = vtanh.pop %v2104
    %v2106 = vsub.f32 1.0, %v2102
    %v2107 = vmul.f32 %v2106, %v2105
    %v2108 = vmul.f32 %v2102, %v1878
    %v2109 = vadd.f32 %v2107, %v2108
    %v2110 = vld [vmem:[#allocation2 + $0x18] sm:$0x30]
    %v2111 = vld [vmem:[#allocation2 + $0x20] sm:$0x30]
    %v2112 = vld [vmem:[#allocation2 + $0x28] sm:$0x30]
    %2113 = vmatpush.bf16.msra.mxu0 %v472
    %2114 = vmatpush.bf16.msra.mxu0 %v469
    %2115 = vmatpush.bf16.msra.mxu0 %v466
    %2116 = vmatpush.bf16.msra.mxu0 %v463
    %2117 = vmatpush.bf16.msra.mxu0 %v460
    %2118 = vmatpush.bf16.msra.mxu0 %v457
    %2119 = vmatpush.bf16.msra.mxu0 %v454
    %2120 = vmatpush.bf16.msra.mxu0 %v451
    %2121 = vmatmul.bf16.gmra.mxu0 %v1982
    %v2122 = vpop.f32.mrf.mxu0
    %v2123 = vadd.f32 %v250, %v2122
    %v2124 = vpop.f32.mrf.mxu0
    %2125 = vdwg.mxu0
    %2126 = vmatpush.bf16.msra.mxu0 %v473
    %2127 = vmatpush.bf16.msra.mxu0 %v470
    %2128 = vmatpush.bf16.msra.mxu0 %v467
    %2129 = vmatpush.bf16.msra.mxu0 %v464
    %2130 = vmatpush.bf16.msra.mxu0 %v461
    %2131 = vmatpush.bf16.msra.mxu0 %v458
    %2132 = vmatpush.bf16.msra.mxu0 %v455
    %2133 = vmatpush.bf16.msra.mxu0 %v452
    %2134 = vmatmul.bf16.gmra.mxu0 %v1982
    %v2135 = vpop.f32.mrf.mxu0
    %v2136 = vadd.f32 %v251, %v2135
    %v2137 = vpop.f32.mrf.mxu0
    %2138 = vdwg.mxu0
    %2139 = vmatpush.bf16.msra.mxu0 %v474
    %2140 = vmatpush.bf16.msra.mxu0 %v471
    %2141 = vmatpush.bf16.msra.mxu0 %v468
    %2142 = vmatpush.bf16.msra.mxu0 %v465
    %2143 = vmatpush.bf16.msra.mxu0 %v462
    %2144 = vmatpush.bf16.msra.mxu0 %v459
    %2145 = vmatpush.bf16.msra.mxu0 %v456
    %2146 = vmatpush.bf16.msra.mxu0 %v453
    %2147 = vmatmul.bf16.gmra.mxu0 %v1982
    %v2148 = vpop.f32.mrf.mxu0
    %v2149 = vadd.f32 %v252, %v2148
    %v2150 = vpop.f32.mrf.mxu0
    %2151 = vdwg.mxu0
    %v2154 = vrot.slane %v2123, 4
    %v2155 = vrot.slane %v2136, 4
    %v2158 = vadd.f32 %v2110, %v2154
    %v2159 = vadd.f32 %v2111, %v2155
    %v2160 = vxor.u32 %v2158, 2147483648
    %v2161 = vxor.u32 %v2159, 2147483648
    %v2162 = vmul.f32 %v2160, 1.442695
    %v2163 = vpow.pop %v2162
    %v2164 = vmul.f32 %v2161, 1.442695
    %v2165 = vpow.pop %v2164
    %v2166 = vadd.f32 %v2163, 1.0
    %v2167 = vadd.f32 %v2165, 1.0
    %v2168 = vrcp.pop %v2166
    %v2169 = vmul.f32 %v2166, %v2168
    %v2170 = vsub.f32 1.0, %v2169
    %v2171 = vmul.f32 %v2168, %v2170
    %v2172 = vadd.f32 %v2168, %v2171
    %vm2173 = vweird.f32 %v2166
    %vm2174 = vweird.f32 %v2168
    %vm2175 = vmor %vm2173, %vm2174
    %v2176 = vsel %vm2175, %v2168, %v2172
    %v2177 = vand.u32 2147483647, %v2166
    %vm2178 = vcmp.eq.f32.partialorder %v2177, 8.507059e+37
    %v2179 = vand.u32 %v2166, 2147483648
    %v2180 = vor.u32 1.1754944e-38, %v2179
    %v2181 = vsel %vm2178, %v2180, %v2176
    %v2182 = vmul.f32 1.0, %v2181
    %v2183 = vrcp.pop %v2167
    %v2184 = vmul.f32 %v2167, %v2183
    %v2185 = vsub.f32 1.0, %v2184
    %v2186 = vmul.f32 %v2183, %v2185
    %v2187 = vadd.f32 %v2183, %v2186
    %vm2188 = vweird.f32 %v2167
    %vm2189 = vweird.f32 %v2183
    %vm2190 = vmor %vm2188, %vm2189
    %v2191 = vsel %vm2190, %v2183, %v2187
    %v2192 = vand.u32 2147483647, %v2167
    %vm2193 = vcmp.eq.f32.partialorder %v2192, 8.507059e+37
    %v2194 = vand.u32 %v2167, 2147483648
    %v2195 = vor.u32 1.1754944e-38, %v2194
    %v2196 = vsel %vm2193, %v2195, %v2191
    %v2197 = vmul.f32 1.0, %v2196
    %v2199 = vrot.slane %v2149, 4
    %v2201 = vmul.f32 %v2182, %v2199
    %v2202 = vadd.f32 %v2112, %v2201
    %v2203 = vtanh.pop %v2202
    %v2204 = vsub.f32 1.0, %v2197
    %v2205 = vmul.f32 %v2204, %v2203
    %v2207 = vrot.slane %v1979, 6
    %v2209 = vmul.f32 %v2197, %v2207
    %v2210 = vadd.f32 %v2205, %v2209
    %v2211 = vpack.c.bf16 %v2210, %v2210
    %v2213 = vrot.slane %v2211, 2
    %2215 = vmatpush.bf16.msra.mxu0 %v687
    %2216 = vmatpush.bf16.msra.mxu0 %v684
    %2217 = vmatpush.bf16.msra.mxu0 %v681
    %2218 = vmatpush.bf16.msra.mxu0 %v678
    %2219 = vmatpush.bf16.msra.mxu0 %v675
    %2220 = vmatpush.bf16.msra.mxu0 %v672
    %2221 = vmatpush.bf16.msra.mxu0 %v669
    %2222 = vmatpush.bf16.msra.mxu0 %v666
    %2223 = vmatmul.bf16.gmra.mxu0 %v2213
    %v2224 = vpop.f32.mrf.mxu0
    %v2225 = vadd.f32 %v258, %v2224
    %v2226 = vpop.f32.mrf.mxu0
    %2227 = vdwg.mxu0
    %2228 = vmatpush.bf16.msra.mxu0 %v688
    %2229 = vmatpush.bf16.msra.mxu0 %v685
    %2230 = vmatpush.bf16.msra.mxu0 %v682
    %2231 = vmatpush.bf16.msra.mxu0 %v679
    %2232 = vmatpush.bf16.msra.mxu0 %v676
    %2233 = vmatpush.bf16.msra.mxu0 %v673
    %2234 = vmatpush.bf16.msra.mxu0 %v670
    %2235 = vmatpush.bf16.msra.mxu0 %v667
    %2236 = vmatmul.bf16.gmra.mxu0 %v2213
    %v2237 = vpop.f32.mrf.mxu0
    %v2238 = vadd.f32 %v259, %v2237
    %v2239 = vpop.f32.mrf.mxu0
    %2240 = vdwg.mxu0
    %2241 = vmatpush.bf16.msra.mxu0 %v689
    %2242 = vmatpush.bf16.msra.mxu0 %v686
    %2243 = vmatpush.bf16.msra.mxu0 %v683
    %2244 = vmatpush.bf16.msra.mxu0 %v680
    %2245 = vmatpush.bf16.msra.mxu0 %v677
    %2246 = vmatpush.bf16.msra.mxu0 %v674
    %2247 = vmatpush.bf16.msra.mxu0 %v671
    %2248 = vmatpush.bf16.msra.mxu0 %v668
    %2249 = vmatmul.bf16.gmra.mxu0 %v2213
    %v2250 = vpop.f32.mrf.mxu0
    %v2251 = vadd.f32 %v260, %v2250
    %v2252 = vpop.f32.mrf.mxu0
    %2253 = vdwg.mxu0
    %v2254 = vpack.c.bf16 %v2109, %v2109
    %2255 = vmatpush.bf16.msra.mxu0 %v854
    %2256 = vmatpush.bf16.msra.mxu0 %v851
    %2257 = vmatpush.bf16.msra.mxu0 %v848
    %2258 = vmatpush.bf16.msra.mxu0 %v845
    %2259 = vmatpush.bf16.msra.mxu0 %v842
    %2260 = vmatpush.bf16.msra.mxu0 %v839
    %2261 = vmatpush.bf16.msra.mxu0 %v836
    %2262 = vmatpush.bf16.msra.mxu0 %v833
    %2263 = vmatmul.bf16.gmra.mxu0 %v2254
    %v2264 = vpop.f32.mrf.mxu0
    %v2265 = vadd.f32 %v266, %v2264
    %v2266 = vpop.f32.mrf.mxu0
    %2267 = vdwg.mxu0
    %2268 = vmatpush.bf16.msra.mxu0 %v855
    %2269 = vmatpush.bf16.msra.mxu0 %v852
    %2270 = vmatpush.bf16.msra.mxu0 %v849
    %2271 = vmatpush.bf16.msra.mxu0 %v846
    %2272 = vmatpush.bf16.msra.mxu0 %v843
    %2273 = vmatpush.bf16.msra.mxu0 %v840
    %2274 = vmatpush.bf16.msra.mxu0 %v837
    %2275 = vmatpush.bf16.msra.mxu0 %v834
    %2276 = vmatmul.bf16.gmra.mxu0 %v2254
    %v2277 = vpop.f32.mrf.mxu0
    %v2278 = vadd.f32 %v267, %v2277
    %v2279 = vpop.f32.mrf.mxu0
    %2280 = vdwg.mxu0
    %2281 = vmatpush.bf16.msra.mxu0 %v856
    %2282 = vmatpush.bf16.msra.mxu0 %v853
    %2283 = vmatpush.bf16.msra.mxu0 %v850
    %2284 = vmatpush.bf16.msra.mxu0 %v847
    %2285 = vmatpush.bf16.msra.mxu0 %v844
    %2286 = vmatpush.bf16.msra.mxu0 %v841
    %2287 = vmatpush.bf16.msra.mxu0 %v838
    %2288 = vmatpush.bf16.msra.mxu0 %v835
    %2289 = vmatmul.bf16.gmra.mxu0 %v2254
    %v2290 = vpop.f32.mrf.mxu0
    %v2291 = vadd.f32 %v268, %v2290
    %v2292 = vpop.f32.mrf.mxu0
    %2293 = vdwg.mxu0
    %v2294 = vadd.f32 %v2225, %v2265
    %v2295 = vadd.f32 %v2238, %v2278
    %v2296 = vxor.u32 %v2294, 2147483648
    %v2297 = vxor.u32 %v2295, 2147483648
    %v2298 = vmul.f32 %v2296, 1.442695
    %v2299 = vpow.pop %v2298
    %v2300 = vmul.f32 %v2297, 1.442695
    %v2301 = vpow.pop %v2300
    %v2302 = vadd.f32 %v2299, 1.0
    %v2303 = vadd.f32 %v2301, 1.0
    %v2304 = vrcp.pop %v2302
    %v2305 = vmul.f32 %v2302, %v2304
    %v2306 = vsub.f32 1.0, %v2305
    %v2307 = vmul.f32 %v2304, %v2306
    %v2308 = vadd.f32 %v2304, %v2307
    %vm2309 = vweird.f32 %v2302
    %vm2310 = vweird.f32 %v2304
    %vm2311 = vmor %vm2309, %vm2310
    %v2312 = vsel %vm2311, %v2304, %v2308
    %v2313 = vand.u32 2147483647, %v2302
    %vm2314 = vcmp.eq.f32.partialorder %v2313, 8.507059e+37
    %v2315 = vand.u32 %v2302, 2147483648
    %v2316 = vor.u32 1.1754944e-38, %v2315
    %v2317 = vsel %vm2314, %v2316, %v2312
    %v2318 = vmul.f32 1.0, %v2317
    %v2319 = vrcp.pop %v2303
    %v2320 = vmul.f32 %v2303, %v2319
    %v2321 = vsub.f32 1.0, %v2320
    %v2322 = vmul.f32 %v2319, %v2321
    %v2323 = vadd.f32 %v2319, %v2322
    %vm2324 = vweird.f32 %v2303
    %vm2325 = vweird.f32 %v2319
    %vm2326 = vmor %vm2324, %vm2325
    %v2327 = vsel %vm2326, %v2319, %v2323
    %v2328 = vand.u32 2147483647, %v2303
    %vm2329 = vcmp.eq.f32.partialorder %v2328, 8.507059e+37
    %v2330 = vand.u32 %v2303, 2147483648
    %v2331 = vor.u32 1.1754944e-38, %v2330
    %v2332 = vsel %vm2329, %v2331, %v2327
    %v2333 = vmul.f32 1.0, %v2332
    %v2334 = vmul.f32 %v2318, %v2291
    %v2335 = vadd.f32 %v2251, %v2334
    %v2336 = vtanh.pop %v2335
    %v2337 = vsub.f32 1.0, %v2333
    %v2338 = vmul.f32 %v2337, %v2336
    %v2339 = vmul.f32 %v2333, %v2109
    %v2340 = vadd.f32 %v2338, %v2339
    %v2341 = vld [vmem:[#allocation2 + $0x18] sm:$0xc0]
    %v2342 = vld [vmem:[#allocation2 + $0x20] sm:$0xc0]
    %v2343 = vld [vmem:[#allocation2 + $0x28] sm:$0xc0]
    %2344 = vmatpush.bf16.msra.mxu0 %v472
    %2345 = vmatpush.bf16.msra.mxu0 %v469
    %2346 = vmatpush.bf16.msra.mxu0 %v466
    %2347 = vmatpush.bf16.msra.mxu0 %v463
    %2348 = vmatpush.bf16.msra.mxu0 %v460
    %2349 = vmatpush.bf16.msra.mxu0 %v457
    %2350 = vmatpush.bf16.msra.mxu0 %v454
    %2351 = vmatpush.bf16.msra.mxu0 %v451
    %2352 = vmatmul.bf16.gmra.mxu0 %v2213
    %v2353 = vpop.f32.mrf.mxu0
    %v2354 = vadd.f32 %v250, %v2353
    %v2355 = vpop.f32.mrf.mxu0
    %2356 = vdwg.mxu0
    %2357 = vmatpush.bf16.msra.mxu0 %v473
    %2358 = vmatpush.bf16.msra.mxu0 %v470
    %2359 = vmatpush.bf16.msra.mxu0 %v467
    %2360 = vmatpush.bf16.msra.mxu0 %v464
    %2361 = vmatpush.bf16.msra.mxu0 %v461
    %2362 = vmatpush.bf16.msra.mxu0 %v458
    %2363 = vmatpush.bf16.msra.mxu0 %v455
    %2364 = vmatpush.bf16.msra.mxu0 %v452
    %2365 = vmatmul.bf16.gmra.mxu0 %v2213
    %v2366 = vpop.f32.mrf.mxu0
    %v2367 = vadd.f32 %v251, %v2366
    %v2368 = vpop.f32.mrf.mxu0
    %2369 = vdwg.mxu0
    %2370 = vmatpush.bf16.msra.mxu0 %v474
    %2371 = vmatpush.bf16.msra.mxu0 %v471
    %2372 = vmatpush.bf16.msra.mxu0 %v468
    %2373 = vmatpush.bf16.msra.mxu0 %v465
    %2374 = vmatpush.bf16.msra.mxu0 %v462
    %2375 = vmatpush.bf16.msra.mxu0 %v459
    %2376 = vmatpush.bf16.msra.mxu0 %v456
    %2377 = vmatpush.bf16.msra.mxu0 %v453
    %2378 = vmatmul.bf16.gmra.mxu0 %v2213
    %v2379 = vpop.f32.mrf.mxu0
    %v2380 = vadd.f32 %v252, %v2379
    %v2381 = vpop.f32.mrf.mxu0
    %2382 = vdwg.mxu0
    %v2385 = vrot.slane %v2354, 2
    %v2386 = vrot.slane %v2367, 2
    %v2389 = vadd.f32 %v2341, %v2385
    %v2390 = vadd.f32 %v2342, %v2386
    %v2391 = vxor.u32 %v2389, 2147483648
    %v2392 = vxor.u32 %v2390, 2147483648
    %v2393 = vmul.f32 %v2391, 1.442695
    %v2394 = vpow.pop %v2393
    %v2395 = vmul.f32 %v2392, 1.442695
    %v2396 = vpow.pop %v2395
    %v2397 = vadd.f32 %v2394, 1.0
    %v2398 = vadd.f32 %v2396, 1.0
    %v2399 = vrcp.pop %v2397
    %v2400 = vmul.f32 %v2397, %v2399
    %v2401 = vsub.f32 1.0, %v2400
    %v2402 = vmul.f32 %v2399, %v2401
    %v2403 = vadd.f32 %v2399, %v2402
    %vm2404 = vweird.f32 %v2397
    %vm2405 = vweird.f32 %v2399
    %vm2406 = vmor %vm2404, %vm2405
    %v2407 = vsel %vm2406, %v2399, %v2403
    %v2408 = vand.u32 2147483647, %v2397
    %vm2409 = vcmp.eq.f32.partialorder %v2408, 8.507059e+37
    %v2410 = vand.u32 %v2397, 2147483648
    %v2411 = vor.u32 1.1754944e-38, %v2410
    %v2412 = vsel %vm2409, %v2411, %v2407
    %v2413 = vmul.f32 1.0, %v2412
    %v2414 = vrcp.pop %v2398
    %v2415 = vmul.f32 %v2398, %v2414
    %v2416 = vsub.f32 1.0, %v2415
    %v2417 = vmul.f32 %v2414, %v2416
    %v2418 = vadd.f32 %v2414, %v2417
    %vm2419 = vweird.f32 %v2398
    %vm2420 = vweird.f32 %v2414
    %vm2421 = vmor %vm2419, %vm2420
    %v2422 = vsel %vm2421, %v2414, %v2418
    %v2423 = vand.u32 2147483647, %v2398
    %vm2424 = vcmp.eq.f32.partialorder %v2423, 8.507059e+37
    %v2425 = vand.u32 %v2398, 2147483648
    %v2426 = vor.u32 1.1754944e-38, %v2425
    %v2427 = vsel %vm2424, %v2426, %v2422
    %v2428 = vmul.f32 1.0, %v2427
    %v2430 = vrot.slane %v2380, 2
    %v2432 = vmul.f32 %v2413, %v2430
    %v2433 = vadd.f32 %v2343, %v2432
    %v2434 = vtanh.pop %v2433
    %v2435 = vsub.f32 1.0, %v2428
    %v2436 = vmul.f32 %v2435, %v2434
    %v2438 = vrot.slane %v2210, 6
    %v2440 = vmul.f32 %v2428, %v2438
    %v2441 = vadd.f32 %v2436, %v2440
    %v2442 = vpack.c.bf16 %v2441, %v2441
    %v2444 = vrot.slane %v2442, 3
    %2446 = vmatpush.bf16.msra.mxu0 %v687
    %2447 = vmatpush.bf16.msra.mxu0 %v684
    %2448 = vmatpush.bf16.msra.mxu0 %v681
    %2449 = vmatpush.bf16.msra.mxu0 %v678
    %2450 = vmatpush.bf16.msra.mxu0 %v675
    %2451 = vmatpush.bf16.msra.mxu0 %v672
    %2452 = vmatpush.bf16.msra.mxu0 %v669
    %2453 = vmatpush.bf16.msra.mxu0 %v666
    %2454 = vmatmul.bf16.gmra.mxu0 %v2444
    %v2455 = vpop.f32.mrf.mxu0
    %v2456 = vadd.f32 %v258, %v2455
    %v2457 = vpop.f32.mrf.mxu0
    %2458 = vdwg.mxu0
    %2459 = vmatpush.bf16.msra.mxu0 %v688
    %2460 = vmatpush.bf16.msra.mxu0 %v685
    %2461 = vmatpush.bf16.msra.mxu0 %v682
    %2462 = vmatpush.bf16.msra.mxu0 %v679
    %2463 = vmatpush.bf16.msra.mxu0 %v676
    %2464 = vmatpush.bf16.msra.mxu0 %v673
    %2465 = vmatpush.bf16.msra.mxu0 %v670
    %2466 = vmatpush.bf16.msra.mxu0 %v667
    %2467 = vmatmul.bf16.gmra.mxu0 %v2444
    %v2468 = vpop.f32.mrf.mxu0
    %v2469 = vadd.f32 %v259, %v2468
    %v2470 = vpop.f32.mrf.mxu0
    %2471 = vdwg.mxu0
    %2472 = vmatpush.bf16.msra.mxu0 %v689
    %2473 = vmatpush.bf16.msra.mxu0 %v686
    %2474 = vmatpush.bf16.msra.mxu0 %v683
    %2475 = vmatpush.bf16.msra.mxu0 %v680
    %2476 = vmatpush.bf16.msra.mxu0 %v677
    %2477 = vmatpush.bf16.msra.mxu0 %v674
    %2478 = vmatpush.bf16.msra.mxu0 %v671
    %2479 = vmatpush.bf16.msra.mxu0 %v668
    %2480 = vmatmul.bf16.gmra.mxu0 %v2444
    %v2481 = vpop.f32.mrf.mxu0
    %v2482 = vadd.f32 %v260, %v2481
    %v2483 = vpop.f32.mrf.mxu0
    %2484 = vdwg.mxu0
    %v2485 = vpack.c.bf16 %v2340, %v2340
    %2486 = vmatpush.bf16.msra.mxu0 %v854
    %2487 = vmatpush.bf16.msra.mxu0 %v851
    %2488 = vmatpush.bf16.msra.mxu0 %v848
    %2489 = vmatpush.bf16.msra.mxu0 %v845
    %2490 = vmatpush.bf16.msra.mxu0 %v842
    %2491 = vmatpush.bf16.msra.mxu0 %v839
    %2492 = vmatpush.bf16.msra.mxu0 %v836
    %2493 = vmatpush.bf16.msra.mxu0 %v833
    %2494 = vmatmul.bf16.gmra.mxu0 %v2485
    %v2495 = vpop.f32.mrf.mxu0
    %v2496 = vadd.f32 %v266, %v2495
    %v2497 = vpop.f32.mrf.mxu0
    %2498 = vdwg.mxu0
    %2499 = vmatpush.bf16.msra.mxu0 %v855
    %2500 = vmatpush.bf16.msra.mxu0 %v852
    %2501 = vmatpush.bf16.msra.mxu0 %v849
    %2502 = vmatpush.bf16.msra.mxu0 %v846
    %2503 = vmatpush.bf16.msra.mxu0 %v843
    %2504 = vmatpush.bf16.msra.mxu0 %v840
    %2505 = vmatpush.bf16.msra.mxu0 %v837
    %2506 = vmatpush.bf16.msra.mxu0 %v834
    %2507 = vmatmul.bf16.gmra.mxu0 %v2485
    %v2508 = vpop.f32.mrf.mxu0
    %v2509 = vadd.f32 %v267, %v2508
    %v2510 = vpop.f32.mrf.mxu0
    %2511 = vdwg.mxu0
    %2512 = vmatpush.bf16.msra.mxu0 %v856
    %2513 = vmatpush.bf16.msra.mxu0 %v853
    %2514 = vmatpush.bf16.msra.mxu0 %v850
    %2515 = vmatpush.bf16.msra.mxu0 %v847
    %2516 = vmatpush.bf16.msra.mxu0 %v844
    %2517 = vmatpush.bf16.msra.mxu0 %v841
    %2518 = vmatpush.bf16.msra.mxu0 %v838
    %2519 = vmatpush.bf16.msra.mxu0 %v835
    %2520 = vmatmul.bf16.gmra.mxu0 %v2485
    %v2521 = vpop.f32.mrf.mxu0
    %v2522 = vadd.f32 %v268, %v2521
    %v2523 = vpop.f32.mrf.mxu0
    %2524 = vdwg.mxu0
    %v2525 = vadd.f32 %v2456, %v2496
    %v2526 = vadd.f32 %v2469, %v2509
    %v2527 = vxor.u32 %v2525, 2147483648
    %v2528 = vxor.u32 %v2526, 2147483648
    %v2529 = vmul.f32 %v2527, 1.442695
    %v2530 = vpow.pop %v2529
    %v2531 = vmul.f32 %v2528, 1.442695
    %v2532 = vpow.pop %v2531
    %v2533 = vadd.f32 %v2530, 1.0
    %v2534 = vadd.f32 %v2532, 1.0
    %v2535 = vrcp.pop %v2533
    %v2536 = vmul.f32 %v2533, %v2535
    %v2537 = vsub.f32 1.0, %v2536
    %v2538 = vmul.f32 %v2535, %v2537
    %v2539 = vadd.f32 %v2535, %v2538
    %vm2540 = vweird.f32 %v2533
    %vm2541 = vweird.f32 %v2535
    %vm2542 = vmor %vm2540, %vm2541
    %v2543 = vsel %vm2542, %v2535, %v2539
    %v2544 = vand.u32 2147483647, %v2533
    %vm2545 = vcmp.eq.f32.partialorder %v2544, 8.507059e+37
    %v2546 = vand.u32 %v2533, 2147483648
    %v2547 = vor.u32 1.1754944e-38, %v2546
    %v2548 = vsel %vm2545, %v2547, %v2543
    %v2549 = vmul.f32 1.0, %v2548
    %v2550 = vrcp.pop %v2534
    %v2551 = vmul.f32 %v2534, %v2550
    %v2552 = vsub.f32 1.0, %v2551
    %v2553 = vmul.f32 %v2550, %v2552
    %v2554 = vadd.f32 %v2550, %v2553
    %vm2555 = vweird.f32 %v2534
    %vm2556 = vweird.f32 %v2550
    %vm2557 = vmor %vm2555, %vm2556
    %v2558 = vsel %vm2557, %v2550, %v2554
    %v2559 = vand.u32 2147483647, %v2534
    %vm2560 = vcmp.eq.f32.partialorder %v2559, 8.507059e+37
    %v2561 = vand.u32 %v2534, 2147483648
    %v2562 = vor.u32 1.1754944e-38, %v2561
    %v2563 = vsel %vm2560, %v2562, %v2558
    %v2564 = vmul.f32 1.0, %v2563
    %v2565 = vmul.f32 %v2549, %v2522
    %v2566 = vadd.f32 %v2482, %v2565
    %v2567 = vtanh.pop %v2566
    %v2568 = vsub.f32 1.0, %v2564
    %v2569 = vmul.f32 %v2568, %v2567
    %v2570 = vmul.f32 %v2564, %v2340
    %v2571 = vadd.f32 %v2569, %v2570
    %v2572 = vpack.c.bf16 %v2571, %v2571
    %v2573 = vld [vmem:[#allocation15] sm:$0xf]
    %v2574 = vld [vmem:[#allocation15 + $0x4] sm:$0xf]
    %v2575 = vld [vmem:[#allocation15 + $0x8] sm:$0xf]
    %v2576 = vld [vmem:[#allocation15 + $0xc] sm:$0xf]
    %v2577 = vld [vmem:[#allocation15 + $0x10] sm:$0xf]
    %v2578 = vld [vmem:[#allocation15 + $0x14] sm:$0xf]
    %v2579 = vld [vmem:[#allocation15 + $0x18] sm:$0xf]
    %v2580 = vld [vmem:[#allocation15 + $0x1c] sm:$0xf]
    %v2581 = vld [vmem:[#allocation15 + $0x20] sm:$0xf]
    %v2582 = vld [vmem:[#allocation15 + $0x24] sm:$0xf]
    %v2583 = vld [vmem:[#allocation15 + $0x28] sm:$0xf]
    %v2584 = vld [vmem:[#allocation15 + $0x2c] sm:$0xf]
    %v2585 = vld [vmem:[#allocation15 + $0x30] sm:$0xf]
    %v2586 = vld [vmem:[#allocation15 + $0x34] sm:$0xf]
    %v2587 = vld [vmem:[#allocation15 + $0x38] sm:$0xf]
    %v2588 = vld [vmem:[#allocation15 + $0x3c] sm:$0xf]
    %v2589 = vld [vmem:[%s10] sm:$0x1]
    %v2591 = vperm.slane %v2589, 0
    %v2609 = vunpack.c.l.b16 %v2573
    %v2610 = vunpack.c.l.b16 %v2574
    %v2611 = vunpack.c.l.b16 %v2575
    %v2612 = vunpack.c.l.b16 %v2576
    %v2613 = vunpack.c.l.b16 %v2577
    %v2614 = vunpack.c.l.b16 %v2578
    %v2615 = vunpack.c.l.b16 %v2579
    %v2616 = vunpack.c.l.b16 %v2580
    %v2617 = vunpack.c.l.b16 %v2581
    %v2618 = vunpack.c.l.b16 %v2582
    %v2619 = vunpack.c.l.b16 %v2583
    %v2620 = vunpack.c.l.b16 %v2584
    %v2621 = vunpack.c.l.b16 %v2585
    %v2622 = vunpack.c.l.b16 %v2586
    %v2623 = vunpack.c.l.b16 %v2587
    %v2624 = vunpack.c.l.b16 %v2588
    %v2625 = vpack.c.b16 %v2610, %v2609
    %v2626 = vpack.c.b16 %v2612, %v2611
    %v2627 = vpack.c.b16 %v2614, %v2613
    %v2628 = vpack.c.b16 %v2616, %v2615
    %v2629 = vpack.c.b16 %v2618, %v2617
    %v2630 = vpack.c.b16 %v2620, %v2619
    %v2631 = vpack.c.b16 %v2622, %v2621
    %v2632 = vpack.c.b16 %v2624, %v2623
    %2641 = vmatpush.bf16.msra.mxu0 %v2632
    %2642 = vmatpush.bf16.msra.mxu0 %v2631
    %2643 = vmatpush.bf16.msra.mxu0 %v2630
    %2644 = vmatpush.bf16.msra.mxu0 %v2629
    %2645 = vmatpush.bf16.msra.mxu0 %v2628
    %2646 = vmatpush.bf16.msra.mxu0 %v2627
    %2647 = vmatpush.bf16.msra.mxu0 %v2626
    %2648 = vmatpush.bf16.msra.mxu0 %v2625
    %2649 = vmatmul.bf16.gmra.mxu0 %v2572
    %v2650 = vpop.f32.mrf.mxu0
    %v2651 = vadd.f32 %v2591, %v2650
    %v2652 = vpop.f32.mrf.mxu0
    %2653 = vdwg.mxu0
    %2654 = vst [vmem:[#allocation17] sm:$0x3] %v2651
    // Predicated region
    $region78: #{tpu_custom_call.1} parent=1 // pred_check
      _
    $region79: #{tpu_custom_call.1} parent=1 // pred_check_branch
      %2656 = sbr.rel (0) target = $region81
    $region80: #{tpu_custom_call.1} parent=1 // pred_region
      %2658 = vsyncadd [#allocation5], 0
      %s2660 = sshll.u32 [#allocation17], 4
      %s2661 = int_to_ptr.vmem [resolvable:$true] %s2660
      %s2662 = sshll.u32 %s11, 4
      %s2663 = int_to_ptr.hbm [resolvable:$true] %s2662
      %2665 = dma.vmem_to_hbm [thread:$0]  %s2661, 32, %s2663, [#allocation5]
    $region81: #{tpu_custom_call.1} parent=1 // pred_fallthru
      _
    // Predicated region
    $region82: #{tpu_custom_call.1} parent=1 // pred_check
      _
    $region83: #{tpu_custom_call.1} parent=1 // pred_check_branch
      %2667 = sbr.rel (0) target = $region85
    $region84: #{tpu_custom_call.1} parent=1 // pred_region
      %2669 = dma.done [#allocation5], 32
    $region85: #{tpu_custom_call.1} parent=1 // pred_fallthru
      _
    %2670 = vsyncpa [#allocation4], 1
    %2671 = vsyncpa [#allocation7], 1
    %2672 = vsyncpa [#allocation10], 1
    %2673 = vsyncpa [#allocation13], 1
    %2674 = vsyncpa [#allocation16], 1
    %2675 = vsyncpa [#allocation5], 1

</llo_original>
